<compile_context>
chip_gen: v5e
topology: v5e:2x2
jax: 0.10.0
libtpu: 0.0.40
codegen_flags: <defaults>
</compile_context>

<pallas_src>
import jax
import jax.numpy as jnp
from jax.experimental import pallas as pl
from jax.experimental.pallas import tpu as pltpu

BN_EPS = 1e-3
LANE = 128


def _round_up(x, m):
    return (x + m - 1) // m * m


def _choose_m_tiling(m):
    """Pick (tm, Mp): tm up to 512 rows, >=2 tiles when M allows (megacore)."""
    mp128 = _round_up(m, LANE)
    if mp128 <= LANE:
        return LANE, LANE
    half = _round_up((mp128 + 1) // 2, LANE)
    tm = min(512, half)
    return tm, _round_up(m, tm)


# ----------------------------- Pallas kernels ------------------------------ #

def _matmul_bias_relu_kernel(p_ref, w_ref, b_ref, o_ref):
    """One M-tile of ReLU(P @ W + bias); W and bias are VMEM-resident."""
    acc = jnp.dot(p_ref[...], w_ref[...], preferred_element_type=jnp.float32)
    o_ref[...] = jnp.maximum(acc + b_ref[...], 0.0).astype(o_ref.dtype)


def _maxpool_kernel(x_ref, o_ref, hmax_ref):
    """3x3 / stride-2 max pool, fully in VMEM (no HBM relayout copies).

    x_ref: (H, W, Ct), o_ref: (OH, OW, Ct), hmax_ref scratch: (OH, W, Ct).
    """
    oh, ow, _ = o_ref.shape
    # H direction: stride-2 row selection (major dim -> cheap slab loads).
    h0 = x_ref[pl.ds(0, oh, 2), :, :]
    h1 = x_ref[pl.ds(1, oh, 2), :, :]
    h2 = x_ref[pl.ds(2, oh, 2), :, :]
    hmax_ref[...] = jnp.maximum(jnp.maximum(h0, h1), h2)
    # W direction: stride-2 sublane-strided loads from the VMEM scratch.
    w0 = hmax_ref[:, pl.ds(0, ow, 2), :]
    w1 = hmax_ref[:, pl.ds(1, ow, 2), :]
    w2 = hmax_ref[:, pl.ds(2, ow, 2), :]
    o_ref[...] = jnp.maximum(jnp.maximum(w0, w1), w2)


# --------------------------- pallas_call wrappers --------------------------- #

def matmul_bias_relu(p_mat, w_mat, bias, out_dtype):
    """ReLU(P @ W + bias); W is pre-padded (Kp, Np), stays VMEM-resident."""
    m, k = p_mat.shape
    kp, np_ = w_mat.shape
    assert k <= kp, (k, kp)
    tm, mp = _choose_m_tiling(m)
    p = jnp.pad(p_mat, ((0, mp - m), (0, kp - k))).astype(jnp.bfloat16)

    out_isize = 2 if out_dtype == jnp.bfloat16 else 4
    est = (2 * tm * kp * 2          # double-buffered bf16 patch tiles
           + 2 * kp * np_ * 2       # resident bf16 weights (worst-case 2 bufs)
           + 2 * np_ * 4            # bias
           + 2 * tm * np_ * out_isize
           + tm * np_ * 4)          # f32 matmul intermediate
    vmem_limit = int(min(max(int(1.4 * est) + (4 << 20), 32 << 20), 48 << 20))

    out = pl.pallas_call(
        _matmul_bias_relu_kernel,
        out_shape=jax.ShapeDtypeStruct((mp, np_), out_dtype),
        grid_spec=pltpu.PrefetchScalarGridSpec(
            num_scalar_prefetch=0,
            grid=(mp // tm,),
            in_specs=[
                pl.BlockSpec((tm, kp), lambda i: (i, 0)),
                pl.BlockSpec((kp, np_), lambda i: (0, 0)),   # resident weights
                pl.BlockSpec((1, np_), lambda i: (0, 0)),    # resident bias
            ],
            out_specs=pl.BlockSpec((tm, np_), lambda i: (i, 0)),
        ),
        compiler_params=pltpu.CompilerParams(
            dimension_semantics=("parallel",),
            vmem_limit_bytes=vmem_limit,
        ),
    )(p, w_mat, bias)
    return out[:m]                                    # keep lane-padded channels


def max_pool_3x3_s2(x_nhwc):
    """F.max_pool2d(kernel=3, stride=2) in NHWC, lane-padded output sliced back."""
    n, h, w, c = x_nhwc.shape
    oh = (h - 3) // 2 + 1
    ow = (w - 3) // 2 + 1
    cp = _round_up(c, LANE)
    # Channel pad only (padded channels are sliced off afterwards, value is
    # irrelevant); no spatial padding / parity copies in HBM.
    xp = jnp.pad(x_nhwc, ((0, 0), (0, 0), (0, 0), (0, cp - c)))

    out = pl.pallas_call(
        _maxpool_kernel,
        out_shape=jax.ShapeDtypeStruct((n, oh, ow, cp), x_nhwc.dtype),
        grid_spec=pltpu.PrefetchScalarGridSpec(
            num_scalar_prefetch=0,
            grid=(n, cp // LANE),
            in_specs=[pl.BlockSpec((None, h, w, LANE),
                                   lambda i, j: (i, 0, 0, j))],
            out_specs=pl.BlockSpec((None, oh, ow, LANE),
                                   lambda i, j: (i, 0, 0, j)),
            scratch_shapes=[pltpu.VMEM((oh, w, LANE), x_nhwc.dtype)],
        ),
        compiler_params=pltpu.CompilerParams(
            dimension_semantics=("parallel", "parallel"),
            vmem_limit_bytes=32 * 1024 * 1024,
        ),
    )(xp)
    return out[..., :c]


# ------------------------------ JAX glue ----------------------------------- #

def _extract_patches(x_nhwc, kh, kw, stride, pad):
    """x: [N,H,W,C] -> patches [N, OH, OW, kh*kw, C], taps ordered (kh, kw)."""
    if pad:
        x_nhwc = jnp.pad(x_nhwc, ((0, 0), (pad, pad), (pad, pad), (0, 0)))
    n, h, w, c = x_nhwc.shape
    oh = (h - kh) // stride + 1
    ow = (w - kw) // stride + 1
    if kh == 1 and kw == 1:
        xs = x_nhwc[:, ::stride, ::stride, :]
        return xs[:, :, :, None, :], oh, ow           # 1x1: no im2col blow-up
    taps = []
    for i in range(kh):
        for j in range(kw):
            taps.append(x_nhwc[:, i:i + stride * (oh - 1) + 1:stride,
                                  j:j + stride * (ow - 1) + 1:stride, :])
    return jnp.stack(taps, axis=3), oh, ow


def basic_conv2d(x_nhwc, prep, *, kh, kw, stride=1, pad=0,
                 out_dtype=jnp.bfloat16):
    """Conv2d(bias=False) + BatchNorm2d(eps=1e-3, eval) + ReLU.

    `prep` carries the BN-folded, transposed, channel-padded bf16 weight matrix
    (Kp, Np) and f32 bias (1, Np) built once by prepare_inception_b.  The
    activation's (lane-padded) channel count must match the Cin padding used
    when preparing the weights.
    """
    n = x_nhwc.shape[0]
    cx = x_nhwc.shape[-1]
    x_bf16 = x_nhwc.astype(jnp.bfloat16)              # bf16 MXU feed (no-op if bf16)
    patches, oh, ow = _extract_patches(x_bf16, kh, kw, stride, pad)
    p_mat = patches.reshape(n * oh * ow, kh * kw * cx)
    out = matmul_bias_relu(p_mat, prep["w_mat"], prep["bias"], out_dtype)
    return out.reshape(n, oh, ow, -1)                 # channels padded to 128k


def _prepare_conv(params, cin_padded):
    """One-time BN fold + (kh, kw, cin)->Cout relayout, padded & cast to bf16."""
    w = params["w"]                                   # [Cout, Cin, KH, KW]
    cout, cin, kh, kw = w.shape
    scale = params["gamma"] / jnp.sqrt(params["var"] + BN_EPS)
    bias = params["beta"] - params["mean"] * scale
    w_p = jnp.pad(w, ((0, 0), (0, cin_padded - cin), (0, 0), (0, 0)))
    w_mat = jnp.transpose(w_p, (2, 3, 1, 0)).reshape(kh * kw * cin_padded, cout)
    w_mat = w_mat * scale[None, :]                    # fold BN scale into W
    k = kh * kw * cin_padded
    kp, np_ = _round_up(k, LANE), _round_up(cout, LANE)
    w_mat = jnp.pad(w_mat, ((0, kp - k), (0, np_ - cout))).astype(jnp.bfloat16)
    bias = jnp.pad(bias, (0, np_ - cout)).reshape(1, np_).astype(jnp.float32)
    return {"w_mat": w_mat, "bias": bias}


def prepare_inception_b(params, in_channels):
    """Precompute matmul-ready weights/biases (outside the jitted forward)."""
    return {
        "branch3x3":      _prepare_conv(params["branch3x3"], in_channels),
        "branch3x3dbl_1": _prepare_conv(params["branch3x3dbl_1"], in_channels),
        "branch3x3dbl_2": _prepare_conv(params["branch3x3dbl_2"],
                                        _round_up(64, LANE)),
        "branch3x3dbl_3": _prepare_conv(params["branch3x3dbl_3"],
                                        _round_up(96, LANE)),
    }


def init_basic_conv2d(key, in_ch, out_ch, k):
    kw_, kb_ = jax.random.split(key)
    w = jax.random.normal(kw_, (out_ch, in_ch, k, k), jnp.float32) * 0.05
    gamma = 1.0 + 0.1 * jax.random.normal(kb_, (out_ch,), jnp.float32)
    beta = 0.1 * jax.random.normal(jax.random.fold_in(kb_, 1), (out_ch,),
                                   jnp.float32)
    mean = jnp.zeros((out_ch,), jnp.float32)
    var = jnp.ones((out_ch,), jnp.float32)
    return {"w": w, "gamma": gamma, "beta": beta, "mean": mean, "var": var}


def init_inception_b(key, in_channels):
    ks = jax.random.split(key, 4)
    return {
        "branch3x3":      init_basic_conv2d(ks[0], in_channels, 384, 3),
        "branch3x3dbl_1": init_basic_conv2d(ks[1], in_channels, 64, 1),
        "branch3x3dbl_2": init_basic_conv2d(ks[2], 64, 96, 3),
        "branch3x3dbl_3": init_basic_conv2d(ks[3], 96, 96, 3),
    }


@jax.jit
def inception_b_forward(x_nchw, prep):
    x = jnp.transpose(x_nchw, (0, 2, 3, 1))           # NCHW -> NHWC
    c_in = x.shape[-1]

    branch3x3 = basic_conv2d(x, prep["branch3x3"], kh=3, kw=3, stride=2,
                             out_dtype=jnp.float32)[..., :384]

    # 3x3dbl chain stays lane-padded, bf16 NHWC end-to-end.
    b = basic_conv2d(x, prep["branch3x3dbl_1"], kh=1, kw=1)             # 64  -> 128 lanes
    b = basic_conv2d(b, prep["branch3x3dbl_2"], kh=3, kw=3, pad=1)      # 96  -> 128 lanes
    branch3x3dbl = basic_conv2d(b, prep["branch3x3dbl_3"], kh=3, kw=3,
                                stride=2, out_dtype=jnp.float32)[..., :96]

    branch_pool = max_pool_3x3_s2(x)[..., :c_in]

    out = jnp.concatenate([branch3x3, branch3x3dbl, branch_pool], axis=-1)
    return jnp.transpose(out, (0, 3, 1, 2))           # NHWC -> NCHW


# ------------------------- pure-JAX reference (test) ------------------------ #

def _ref_basic_conv(x_nchw, p, stride, pad):
    y = jax.lax.conv_general_dilated(
        x_nchw, p["w"], (stride, stride), [(pad, pad), (pad, pad)],
        dimension_numbers=("NCHW", "OIHW", "NCHW"))
    scale = p["gamma"] / jnp.sqrt(p["var"] + BN_EPS)
    bias = p["beta"] - p["mean"] * scale
    y = y * scale[None, :, None, None] + bias[None, :, None, None]
    return jnp.maximum(y, 0.0)


def _ref_inception_b(x, params):
    b3 = _ref_basic_conv(x, params["branch3x3"], 2, 0)
    b = _ref_basic_conv(x, params["branch3x3dbl_1"], 1, 0)
    b = _ref_basic_conv(b, params["branch3x3dbl_2"], 1, 1)
    bd = _ref_basic_conv(b, params["branch3x3dbl_3"], 2, 0)
    bp = jax.lax.reduce_window(x, -jnp.inf, jax.lax.max,
                               (1, 1, 3, 3), (1, 1, 2, 2), "VALID")
    return jnp.concatenate([b3, bd, bp], axis=1)


if __name__ == "__main__":
    key = jax.random.PRNGKey(0)
    k_x, k_p = jax.random.split(key)
    N, C, H, W = 2, 4, 16, 16
    x = jax.random.normal(k_x, (N, C, H, W), jnp.float32)
    params = init_inception_b(k_p, C)
    prep = prepare_inception_b(params, C)             # one-time weight prep

    out = jax.block_until_ready(inception_b_forward(x, prep))

    expected = (N, 384 + 96 + C, (H - 3) // 2 + 1, (W - 3) // 2 + 1)
    assert out.shape == expected, (out.shape, expected)
    assert bool(jnp.all(jnp.isfinite(out)))

    ref = _ref_inception_b(x, params)
    err = float(jnp.max(jnp.abs(out - ref)))
    assert err < 5e-2, f"max abs error vs f32 reference: {err}"  # bf16 MXU feed
    print("KERNEL_OK")
</pallas_src>

<mosaic_0001>
module attributes {stable_mosaic.version = 11 : i64} {
  func.func @_maxpool_kernel(%arg0: i32, %arg1: i32, %arg2: memref<1x16x16x128xf32, #tpu.memory_space<vmem>>, %arg3: memref<1x7x7x128xf32, #tpu.memory_space<vmem>>, %arg4: memref<7x16x128xf32, #tpu.memory_space<vmem>>) attributes {dimension_semantics = [#tpu.dimension_semantics<parallel>, #tpu.dimension_semantics<parallel>], iteration_bounds = array<i64: 2, 1>, scalar_prefetch = 0 : i64, scratch_operands = 1 : i64, tpu.core_type = #tpu.core_type<tc>, window_params = [{transform_indices = @transform_0, window_bounds = array<i64: 1, 16, 16, 128>}, {transform_indices = @transform_1, window_bounds = array<i64: 1, 7, 7, 128>}]} {
    %c0 = arith.constant 0 : index
    %c0_0 = arith.constant 0 : index
    %c0_1 = arith.constant 0 : index
    %c0_2 = arith.constant 0 : index
    %0 = tpu.strided_load %arg2[%c0, %c0_0, %c0_1, %c0_2] {strides = array<i32: 1, 2, 1, 1>} : memref<1x16x16x128xf32, #tpu.memory_space<vmem>>, vector<1x7x16x128xf32>
    %1 = vector.shape_cast %0 : vector<1x7x16x128xf32> to vector<7x16x128xf32>
    %c0_3 = arith.constant 0 : index
    %c1 = arith.constant 1 : index
    %c0_4 = arith.constant 0 : index
    %c0_5 = arith.constant 0 : index
    %2 = tpu.strided_load %arg2[%c0_3, %c1, %c0_4, %c0_5] {strides = array<i32: 1, 2, 1, 1>} : memref<1x16x16x128xf32, #tpu.memory_space<vmem>>, vector<1x7x16x128xf32>
    %3 = vector.shape_cast %2 : vector<1x7x16x128xf32> to vector<7x16x128xf32>
    %c0_6 = arith.constant 0 : index
    %c2 = arith.constant 2 : index
    %c0_7 = arith.constant 0 : index
    %c0_8 = arith.constant 0 : index
    %4 = tpu.strided_load %arg2[%c0_6, %c2, %c0_7, %c0_8] {strides = array<i32: 1, 2, 1, 1>} : memref<1x16x16x128xf32, #tpu.memory_space<vmem>>, vector<1x7x16x128xf32>
    %5 = vector.shape_cast %4 : vector<1x7x16x128xf32> to vector<7x16x128xf32>
    %6 = arith.maximumf %1, %3 : vector<7x16x128xf32>
    %7 = arith.maximumf %6, %5 : vector<7x16x128xf32>
    %c0_9 = arith.constant 0 : index
    %c0_10 = arith.constant 0 : index
    %c0_11 = arith.constant 0 : index
    %8 = vector.load %arg4[%c0_9, %c0_10, %c0_11] : memref<7x16x128xf32, #tpu.memory_space<vmem>>, vector<7x16x128xf32>
    tpu.vector_store %arg4[%c0_9, %c0_10, %c0_11], %7 {strides = array<i32>} : memref<7x16x128xf32, #tpu.memory_space<vmem>>, vector<7x16x128xf32>,
    %c0_12 = arith.constant 0 : index
    %c0_13 = arith.constant 0 : index
    %c0_14 = arith.constant 0 : index
    %9 = tpu.strided_load %arg4[%c0_12, %c0_13, %c0_14] {strides = array<i32: 1, 2, 1>} : memref<7x16x128xf32, #tpu.memory_space<vmem>>, vector<7x7x128xf32>
    %c0_15 = arith.constant 0 : index
    %c1_16 = arith.constant 1 : index
    %c0_17 = arith.constant 0 : index
    %10 = tpu.strided_load %arg4[%c0_15, %c1_16, %c0_17] {strides = array<i32: 1, 2, 1>} : memref<7x16x128xf32, #tpu.memory_space<vmem>>, vector<7x7x128xf32>
    %c0_18 = arith.constant 0 : index
    %c2_19 = arith.constant 2 : index
    %c0_20 = arith.constant 0 : index
    %11 = tpu.strided_load %arg4[%c0_18, %c2_19, %c0_20] {strides = array<i32: 1, 2, 1>} : memref<7x16x128xf32, #tpu.memory_space<vmem>>, vector<7x7x128xf32>
    %12 = arith.maximumf %9, %10 : vector<7x7x128xf32>
    %13 = arith.maximumf %12, %11 : vector<7x7x128xf32>
    %c0_21 = arith.constant 0 : index
    %c0_22 = arith.constant 0 : index
    %c0_23 = arith.constant 0 : index
    %c0_24 = arith.constant 0 : index
    %14 = vector.load %arg3[%c0_21, %c0_22, %c0_23, %c0_24] : memref<1x7x7x128xf32, #tpu.memory_space<vmem>>, vector<1x7x7x128xf32>
    %15 = vector.shape_cast %14 : vector<1x7x7x128xf32> to vector<7x7x128xf32>
    %16 = vector.shape_cast %13 : vector<7x7x128xf32> to vector<1x7x7x128xf32>
    tpu.vector_store %arg3[%c0_21, %c0_22, %c0_23, %c0_24], %16 {strides = array<i32>} : memref<1x7x7x128xf32, #tpu.memory_space<vmem>>, vector<1x7x7x128xf32>,
    return
  }
  func.func @transform_0(%arg0: i32, %arg1: i32) -> (i32, i32, i32, i32) {
    %c0_i32 = arith.constant 0 : i32
    %c0_i32_0 = arith.constant 0 : i32
    %c0_i32_1 = arith.constant 0 : i32
    return %arg0, %c0_i32, %c0_i32_0, %arg1 : i32, i32, i32, i32
  }
  func.func @transform_1(%arg0: i32, %arg1: i32) -> (i32, i32, i32, i32) {
    %c0_i32 = arith.constant 0 : i32
    %c0_i32_0 = arith.constant 0 : i32
    %c0_i32_1 = arith.constant 0 : i32
    return %arg0, %c0_i32, %c0_i32_0, %arg1 : i32, i32, i32, i32
  }
}

module attributes {stable_mosaic.version = 11 : i64} {
  func.func @_matmul_bias_relu_kernel(%arg0: i32, %arg1: memref<256x128xbf16, #tpu.memory_space<vmem>>, %arg2: memref<128x128xbf16, #tpu.memory_space<vmem>>, %arg3: memref<1x128xf32, #tpu.memory_space<vmem>>, %arg4: memref<256x128xbf16, #tpu.memory_space<vmem>>) attributes {dimension_semantics = [#tpu.dimension_semantics<parallel>], iteration_bounds = array<i64: 2>, scalar_prefetch = 0 : i64, scratch_operands = 0 : i64, tpu.core_type = #tpu.core_type<tc>, window_params = [{transform_indices = @transform_0, window_bounds = array<i64: 256, 128>}, {pipeline_mode = #tpu.pipeline_mode<synchronous>, transform_indices = @transform_1, window_bounds = array<i64: 128, 128>}, {pipeline_mode = #tpu.pipeline_mode<synchronous>, transform_indices = @transform_2, window_bounds = array<i64: 1, 128>}, {transform_indices = @transform_3, window_bounds = array<i64: 256, 128>}]} {
    %c0 = arith.constant 0 : index
    %c0_0 = arith.constant 0 : index
    %0 = vector.load %arg1[%c0, %c0_0] : memref<256x128xbf16, #tpu.memory_space<vmem>>, vector<256x128xbf16>
    %c0_1 = arith.constant 0 : index
    %c0_2 = arith.constant 0 : index
    %1 = vector.load %arg2[%c0_1, %c0_2] : memref<128x128xbf16, #tpu.memory_space<vmem>>, vector<128x128xbf16>
    %cst = arith.constant dense<0.000000e+00> : vector<256x128xf32>
    %2 = tpu.matmul %0, %1, %cst {dimension_numbers = #tpu.dot_dimension_numbers<[1], [0], [0], [1], [0, 0, 1, 1], [], []>} : vector<256x128xbf16>, vector<128x128xbf16>, vector<256x128xf32> -> vector<256x128xf32>
    %c0_3 = arith.constant 0 : index
    %c0_4 = arith.constant 0 : index
    %3 = vector.load %arg3[%c0_3, %c0_4] : memref<1x128xf32, #tpu.memory_space<vmem>>, vector<1x128xf32>
    %4 = vector.broadcast %3 : vector<1x128xf32> to vector<256x128xf32>
    %5 = arith.addf %2, %4 : vector<256x128xf32>
    %cst_5 = arith.constant 0.000000e+00 : f32
    %6 = vector.broadcast %cst_5 : f32 to vector<256x128xf32>
    %7 = arith.maximumf %5, %6 : vector<256x128xf32>
    %8 = arith.truncf %7 : vector<256x128xf32> to vector<256x128xbf16>
    %c0_6 = arith.constant 0 : index
    %c0_7 = arith.constant 0 : index
    %9 = vector.load %arg4[%c0_6, %c0_7] : memref<256x128xbf16, #tpu.memory_space<vmem>>, vector<256x128xbf16>
    tpu.vector_store %arg4[%c0_6, %c0_7], %8 {strides = array<i32>} : memref<256x128xbf16, #tpu.memory_space<vmem>>, vector<256x128xbf16>,
    return
  }
  func.func @transform_0(%arg0: i32) -> (i32, i32) {
    %c0_i32 = arith.constant 0 : i32
    %c0_i32_0 = arith.constant 0 : i32
    return %arg0, %c0_i32 : i32, i32
  }
  func.func @transform_1(%arg0: i32) -> (i32, i32) {
    %c0_i32 = arith.constant 0 : i32
    %c0_i32_0 = arith.constant 0 : i32
    %c0_i32_1 = arith.constant 0 : i32
    return %c0_i32, %c0_i32_0 : i32, i32
  }
  func.func @transform_2(%arg0: i32) -> (i32, i32) {
    %c0_i32 = arith.constant 0 : i32
    %c0_i32_0 = arith.constant 0 : i32
    %c0_i32_1 = arith.constant 0 : i32
    return %c0_i32, %c0_i32_0 : i32, i32
  }
  func.func @transform_3(%arg0: i32) -> (i32, i32) {
    %c0_i32 = arith.constant 0 : i32
    %c0_i32_0 = arith.constant 0 : i32
    return %arg0, %c0_i32 : i32, i32
  }
}

module attributes {stable_mosaic.version = 11 : i64} {
  func.func @_matmul_bias_relu_kernel(%arg0: i32, %arg1: memref<256x1152xbf16, #tpu.memory_space<vmem>>, %arg2: memref<1152x128xbf16, #tpu.memory_space<vmem>>, %arg3: memref<1x128xf32, #tpu.memory_space<vmem>>, %arg4: memref<256x128xbf16, #tpu.memory_space<vmem>>) attributes {dimension_semantics = [#tpu.dimension_semantics<parallel>], iteration_bounds = array<i64: 2>, scalar_prefetch = 0 : i64, scratch_operands = 0 : i64, tpu.core_type = #tpu.core_type<tc>, window_params = [{transform_indices = @transform_0, window_bounds = array<i64: 256, 1152>}, {pipeline_mode = #tpu.pipeline_mode<synchronous>, transform_indices = @transform_1, window_bounds = array<i64: 1152, 128>}, {pipeline_mode = #tpu.pipeline_mode<synchronous>, transform_indices = @transform_2, window_bounds = array<i64: 1, 128>}, {transform_indices = @transform_3, window_bounds = array<i64: 256, 128>}]} {
    %c0 = arith.constant 0 : index
    %c0_0 = arith.constant 0 : index
    %0 = vector.load %arg1[%c0, %c0_0] : memref<256x1152xbf16, #tpu.memory_space<vmem>>, vector<256x1152xbf16>
    %c0_1 = arith.constant 0 : index
    %c0_2 = arith.constant 0 : index
    %1 = vector.load %arg2[%c0_1, %c0_2] : memref<1152x128xbf16, #tpu.memory_space<vmem>>, vector<1152x128xbf16>
    %cst = arith.constant dense<0.000000e+00> : vector<256x128xf32>
    %2 = tpu.matmul %0, %1, %cst {dimension_numbers = #tpu.dot_dimension_numbers<[1], [0], [0], [1], [0, 0, 1, 1], [], []>} : vector<256x1152xbf16>, vector<1152x128xbf16>, vector<256x128xf32> -> vector<256x128xf32>
    %c0_3 = arith.constant 0 : index
    %c0_4 = arith.constant 0 : index
    %3 = vector.load %arg3[%c0_3, %c0_4] : memref<1x128xf32, #tpu.memory_space<vmem>>, vector<1x128xf32>
    %4 = vector.broadcast %3 : vector<1x128xf32> to vector<256x128xf32>
    %5 = arith.addf %2, %4 : vector<256x128xf32>
    %cst_5 = arith.constant 0.000000e+00 : f32
    %6 = vector.broadcast %cst_5 : f32 to vector<256x128xf32>
    %7 = arith.maximumf %5, %6 : vector<256x128xf32>
    %8 = arith.truncf %7 : vector<256x128xf32> to vector<256x128xbf16>
    %c0_6 = arith.constant 0 : index
    %c0_7 = arith.constant 0 : index
    %9 = vector.load %arg4[%c0_6, %c0_7] : memref<256x128xbf16, #tpu.memory_space<vmem>>, vector<256x128xbf16>
    tpu.vector_store %arg4[%c0_6, %c0_7], %8 {strides = array<i32>} : memref<256x128xbf16, #tpu.memory_space<vmem>>, vector<256x128xbf16>,
    return
  }
  func.func @transform_0(%arg0: i32) -> (i32, i32) {
    %c0_i32 = arith.constant 0 : i32
    %c0_i32_0 = arith.constant 0 : i32
    return %arg0, %c0_i32 : i32, i32
  }
  func.func @transform_1(%arg0: i32) -> (i32, i32) {
    %c0_i32 = arith.constant 0 : i32
    %c0_i32_0 = arith.constant 0 : i32
    %c0_i32_1 = arith.constant 0 : i32
    return %c0_i32, %c0_i32_0 : i32, i32
  }
  func.func @transform_2(%arg0: i32) -> (i32, i32) {
    %c0_i32 = arith.constant 0 : i32
    %c0_i32_0 = arith.constant 0 : i32
    %c0_i32_1 = arith.constant 0 : i32
    return %c0_i32, %c0_i32_0 : i32, i32
  }
  func.func @transform_3(%arg0: i32) -> (i32, i32) {
    %c0_i32 = arith.constant 0 : i32
    %c0_i32_0 = arith.constant 0 : i32
    return %arg0, %c0_i32 : i32, i32
  }
}

module attributes {stable_mosaic.version = 11 : i64} {
  func.func @_matmul_bias_relu_kernel(%arg0: i32, %arg1: memref<128x1152xbf16, #tpu.memory_space<vmem>>, %arg2: memref<1152x128xbf16, #tpu.memory_space<vmem>>, %arg3: memref<1x128xf32, #tpu.memory_space<vmem>>, %arg4: memref<128x128xf32, #tpu.memory_space<vmem>>) attributes {dimension_semantics = [#tpu.dimension_semantics<parallel>], iteration_bounds = array<i64: 1>, scalar_prefetch = 0 : i64, scratch_operands = 0 : i64, tpu.core_type = #tpu.core_type<tc>, window_params = [{transform_indices = @transform_0, window_bounds = array<i64: 128, 1152>}, {pipeline_mode = #tpu.pipeline_mode<synchronous>, transform_indices = @transform_1, window_bounds = array<i64: 1152, 128>}, {pipeline_mode = #tpu.pipeline_mode<synchronous>, transform_indices = @transform_2, window_bounds = array<i64: 1, 128>}, {transform_indices = @transform_3, window_bounds = array<i64: 128, 128>}]} {
    %c0 = arith.constant 0 : index
    %c0_0 = arith.constant 0 : index
    %0 = vector.load %arg1[%c0, %c0_0] : memref<128x1152xbf16, #tpu.memory_space<vmem>>, vector<128x1152xbf16>
    %c0_1 = arith.constant 0 : index
    %c0_2 = arith.constant 0 : index
    %1 = vector.load %arg2[%c0_1, %c0_2] : memref<1152x128xbf16, #tpu.memory_space<vmem>>, vector<1152x128xbf16>
    %cst = arith.constant dense<0.000000e+00> : vector<128x128xf32>
    %2 = tpu.matmul %0, %1, %cst {dimension_numbers = #tpu.dot_dimension_numbers<[1], [0], [0], [1], [0, 0, 1, 1], [], []>} : vector<128x1152xbf16>, vector<1152x128xbf16>, vector<128x128xf32> -> vector<128x128xf32>
    %c0_3 = arith.constant 0 : index
    %c0_4 = arith.constant 0 : index
    %3 = vector.load %arg3[%c0_3, %c0_4] : memref<1x128xf32, #tpu.memory_space<vmem>>, vector<1x128xf32>
    %4 = vector.broadcast %3 : vector<1x128xf32> to vector<128x128xf32>
    %5 = arith.addf %2, %4 : vector<128x128xf32>
    %cst_5 = arith.constant 0.000000e+00 : f32
    %6 = vector.broadcast %cst_5 : f32 to vector<128x128xf32>
    %7 = arith.maximumf %5, %6 : vector<128x128xf32>
    %c0_6 = arith.constant 0 : index
    %c0_7 = arith.constant 0 : index
    %8 = vector.load %arg4[%c0_6, %c0_7] : memref<128x128xf32, #tpu.memory_space<vmem>>, vector<128x128xf32>
    tpu.vector_store %arg4[%c0_6, %c0_7], %7 {strides = array<i32>} : memref<128x128xf32, #tpu.memory_space<vmem>>, vector<128x128xf32>,
    return
  }
  func.func @transform_0(%arg0: i32) -> (i32, i32) {
    %c0_i32 = arith.constant 0 : i32
    %c0_i32_0 = arith.constant 0 : i32
    return %arg0, %c0_i32 : i32, i32
  }
  func.func @transform_1(%arg0: i32) -> (i32, i32) {
    %c0_i32 = arith.constant 0 : i32
    %c0_i32_0 = arith.constant 0 : i32
    %c0_i32_1 = arith.constant 0 : i32
    return %c0_i32, %c0_i32_0 : i32, i32
  }
  func.func @transform_2(%arg0: i32) -> (i32, i32) {
    %c0_i32 = arith.constant 0 : i32
    %c0_i32_0 = arith.constant 0 : i32
    %c0_i32_1 = arith.constant 0 : i32
    return %c0_i32, %c0_i32_0 : i32, i32
  }
  func.func @transform_3(%arg0: i32) -> (i32, i32) {
    %c0_i32 = arith.constant 0 : i32
    %c0_i32_0 = arith.constant 0 : i32
    return %arg0, %c0_i32 : i32, i32
  }
}

module attributes {stable_mosaic.version = 11 : i64} {
  func.func @_matmul_bias_relu_kernel(%arg0: i32, %arg1: memref<128x128xbf16, #tpu.memory_space<vmem>>, %arg2: memref<128x384xbf16, #tpu.memory_space<vmem>>, %arg3: memref<1x384xf32, #tpu.memory_space<vmem>>, %arg4: memref<128x384xf32, #tpu.memory_space<vmem>>) attributes {dimension_semantics = [#tpu.dimension_semantics<parallel>], iteration_bounds = array<i64: 1>, scalar_prefetch = 0 : i64, scratch_operands = 0 : i64, tpu.core_type = #tpu.core_type<tc>, window_params = [{transform_indices = @transform_0, window_bounds = array<i64: 128, 128>}, {pipeline_mode = #tpu.pipeline_mode<synchronous>, transform_indices = @transform_1, window_bounds = array<i64: 128, 384>}, {pipeline_mode = #tpu.pipeline_mode<synchronous>, transform_indices = @transform_2, window_bounds = array<i64: 1, 384>}, {transform_indices = @transform_3, window_bounds = array<i64: 128, 384>}]} {
    %c0 = arith.constant 0 : index
    %c0_0 = arith.constant 0 : index
    %0 = vector.load %arg1[%c0, %c0_0] : memref<128x128xbf16, #tpu.memory_space<vmem>>, vector<128x128xbf16>
    %c0_1 = arith.constant 0 : index
    %c0_2 = arith.constant 0 : index
    %1 = vector.load %arg2[%c0_1, %c0_2] : memref<128x384xbf16, #tpu.memory_space<vmem>>, vector<128x384xbf16>
    %cst = arith.constant dense<0.000000e+00> : vector<128x384xf32>
    %2 = tpu.matmul %0, %1, %cst {dimension_numbers = #tpu.dot_dimension_numbers<[1], [0], [0], [1], [0, 0, 1, 1], [], []>} : vector<128x128xbf16>, vector<128x384xbf16>, vector<128x384xf32> -> vector<128x384xf32>
    %c0_3 = arith.constant 0 : index
    %c0_4 = arith.constant 0 : index
    %3 = vector.load %arg3[%c0_3, %c0_4] : memref<1x384xf32, #tpu.memory_space<vmem>>, vector<1x384xf32>
    %4 = vector.broadcast %3 : vector<1x384xf32> to vector<128x384xf32>
    %5 = arith.addf %2, %4 : vector<128x384xf32>
    %cst_5 = arith.constant 0.000000e+00 : f32
    %6 = vector.broadcast %cst_5 : f32 to vector<128x384xf32>
    %7 = arith.maximumf %5, %6 : vector<128x384xf32>
    %c0_6 = arith.constant 0 : index
    %c0_7 = arith.constant 0 : index
    %8 = vector.load %arg4[%c0_6, %c0_7] : memref<128x384xf32, #tpu.memory_space<vmem>>, vector<128x384xf32>
    tpu.vector_store %arg4[%c0_6, %c0_7], %7 {strides = array<i32>} : memref<128x384xf32, #tpu.memory_space<vmem>>, vector<128x384xf32>,
    return
  }
  func.func @transform_0(%arg0: i32) -> (i32, i32) {
    %c0_i32 = arith.constant 0 : i32
    %c0_i32_0 = arith.constant 0 : i32
    return %arg0, %c0_i32 : i32, i32
  }
  func.func @transform_1(%arg0: i32) -> (i32, i32) {
    %c0_i32 = arith.constant 0 : i32
    %c0_i32_0 = arith.constant 0 : i32
    %c0_i32_1 = arith.constant 0 : i32
    return %c0_i32, %c0_i32_0 : i32, i32
  }
  func.func @transform_2(%arg0: i32) -> (i32, i32) {
    %c0_i32 = arith.constant 0 : i32
    %c0_i32_0 = arith.constant 0 : i32
    %c0_i32_1 = arith.constant 0 : i32
    return %c0_i32, %c0_i32_0 : i32, i32
  }
  func.func @transform_3(%arg0: i32) -> (i32, i32) {
    %c0_i32 = arith.constant 0 : i32
    %c0_i32_0 = arith.constant 0 : i32
    return %arg0, %c0_i32 : i32, i32
  }
}

</mosaic_0001>

<llo_original>
// kernel: inception_b_forward.9
$region0: #{inception_b_forward.9}
  #allocation0 [shape = 'u32[]', space=smem, size = 0x4, offset = 0x4, fixed_abs, tag = 'smem constant byte address 0x4 - core index']
  #allocation1 [shape = 'u32[72,128]{1,0:T(1,128)}', space=vmem, size = 0x9000, scoped, tag = 'internal scratch']
  #allocation2 [shape = 'f32[7,16,128]{2,1,0:T(8,128)}', space=vmem, size = 0xe000, scoped, tag = 'scratch operand']
  %s0 = inlined_call_operand.vmem [shape: f32[2,16,16,128], index: 0, kind: input, shape index: {}]
  %s1 = inlined_call_operand.vmem [shape: f32[2,7,7,128], index: 1, kind: output, shape index: {}]
  %s2 = sld [smem:[#allocation0]]
  $region37: #{inception_b_forward.9} parent=0
    _
  %s4 = ssub.s32 1, %s2
  %s5 = scalar_select 0, %s4, %s2
  loop: start=0, step=1, limit=4
  $region2: #{inception_b_forward.9} parent=0 // loop_pre_header
    _
  $region3: #{inception_b_forward.9} parent=0 // loop_header
    %s7 = sphi 0, %s11
    %p8 = scmp.ge.s32.totalorder %s7, 4
    %s14 = sphi 0, %s26
    %s15 = sphi 0, %s22
    %s16 = sphi 0, %s14
    %s17 = sphi 0, %s15
    %s18 = sphi 0, %s16
    %s19 = sphi 0, %s17
    %s31 = sphi 0, %s33
    %s34 = sphi 0, %s31
    %s35 = sphi 0, %s34
    %s51 = sphi 0, %s35
    %s59 = sphi 0, %s61
    %s62 = sphi 0, %s59
    %s63 = sphi 0, %s62
    %s79 = sphi 0, %s63
  $region4: #{inception_b_forward.9} parent=0 // loop_header_branch
    %10 = sbr.rel (%p8) target = $region8
  $region5: #{inception_b_forward.9} parent=0 // loop_body
    %s12 = ssub.s32 %s7, 1
    %s13 = ssub.s32 %s7, 2
    %s20 = sadd.s32 1, %s15
    %p21 = scmp.ge.s32.totalorder %s20, 1
    %s22 = scalar_select %p21, 0, %s20
    %s23 = sadd.s32 1, %s14
    %s24 = scalar_select %p21, %s23, %s14
    %p25 = scmp.ge.s32.totalorder %s24, 2
    %s26 = scalar_select %p25, 0, %s24
    %s27 = ssub.s32 %s14, %s26
    %s28 = ssub.s32 %s15, %s22
    %s29 = sor.u32 %s27, %s28
    %p30 = scmp.eq.s32.totalorder %s29, 0
    %s32 = sadd.s32 %s31, 1
    %s33 = scalar_select %p30, %s31, %s32
    %p36 = pneg %p30
    %p37 = scmp.eq.s32.totalorder %s7, 1
    %p38 = por %p36, %p37
    %p39 = scmp.ne.s32.totalorder %s31, %s34
    %p40 = scmp.eq.s32.totalorder %s7, 0
    %p41 = por %p39, %p40
    %p42 = scmp.ne.s32.totalorder %s31, %s34
    %p43 = scmp.eq.s32.totalorder %s12, 1
    %p44 = por %p42, %p43
    %p45 = scmp.ne.s32.totalorder %s34, %s35
    %p46 = scmp.eq.s32.totalorder %s12, 0
    %p47 = por %p45, %p46
    %p48 = scmp.ne.s32.totalorder %s34, %s35
    %p49 = scmp.eq.s32.totalorder %s13, 1
    %p50 = por %p48, %p49
    %p52 = scmp.ne.s32.totalorder %s35, %s51
    %p53 = scmp.eq.s32.totalorder %s13, 0
    %p54 = por %p52, %p53
    %s55 = ssub.s32 %s14, %s26
    %s56 = ssub.s32 %s15, %s22
    %s57 = sor.u32 %s55, %s56
    %p58 = scmp.eq.s32.totalorder %s57, 0
    %s60 = sadd.s32 %s59, 1
    %s61 = scalar_select %p58, %s59, %s60
    %p64 = pneg %p58
    %p65 = scmp.eq.s32.totalorder %s7, 1
    %p66 = por %p64, %p65
    %p67 = scmp.ne.s32.totalorder %s59, %s62
    %p68 = scmp.eq.s32.totalorder %s7, 0
    %p69 = por %p67, %p68
    %p70 = scmp.ne.s32.totalorder %s59, %s62
    %p71 = scmp.eq.s32.totalorder %s12, 1
    %p72 = por %p70, %p71
    %p73 = scmp.ne.s32.totalorder %s62, %s63
    %p74 = scmp.eq.s32.totalorder %s12, 0
    %p75 = por %p73, %p74
    %p76 = scmp.ne.s32.totalorder %s62, %s63
    %p77 = scmp.eq.s32.totalorder %s13, 1
    %p78 = por %p76, %p77
    %p80 = scmp.ne.s32.totalorder %s63, %s79
    %p81 = scmp.eq.s32.totalorder %s13, 0
    %p82 = por %p80, %p81
    %p83 = scmp.le.s32.totalorder 1, %s7
    %p84 = scmp.lt.s32.totalorder %s7, 3
    %p85 = pnand %p83, %p84
    %p86 = pneg %p85
    // Predicated region
    $region9: #{inception_b_forward.9} parent=5 // pred_check
      _
    $region10: #{inception_b_forward.9} parent=5 // pred_check_branch
      %88 = sbr.rel (%p85) target = $region12
    $region11: #{inception_b_forward.9} parent=5 // pred_region
      %s89 = ssub.s32 %s7, 1
    $region12: #{inception_b_forward.9} parent=5 // pred_fallthru
      _
    %p90 = scmp.lt.s32.totalorder %s7, 2
    // Predicated region
    $region13: #{inception_b_forward.9} parent=5 // pred_check
      %p91 = pneg %p90
    $region14: #{inception_b_forward.9} parent=5 // pred_check_branch
      %93 = sbr.rel (%p91) target = $region16
    $region15: #{inception_b_forward.9} parent=5 // pred_region
      // Predicated region
      $region17: #{inception_b_forward.9} parent=15 // pred_check
        %p94 = pneg %p41
      $region18: #{inception_b_forward.9} parent=15 // pred_check_branch
        %96 = sbr.rel (%p94) target = $region20
      $region19: #{inception_b_forward.9} parent=15 // pred_region
        %p97 = scmp.lt.s32.totalorder %s14, 1
        %s98 = scalar_select %p97, %s14, 1
        %p99 = scmp.lt.s32.totalorder %s15, 0
        %s100 = scalar_select %p99, %s15, 0
        %s101 = smul.addr %s98, 32
        %s102 = sadd.s32 %s100, %s101
        %s103 = smul.addr %s102, 8
        %s104 = scalar_lea.vmem %s0, %s103
      $region20: #{inception_b_forward.9} parent=15 // pred_fallthru
        _
    $region16: #{inception_b_forward.9} parent=5 // pred_fallthru
      _
    %p105 = scmp.le.s32.totalorder 1, %s7
    %p106 = scmp.lt.s32.totalorder %s7, 3
    %p107 = pnand %p105, %p106
    %p108 = pneg %p107
    // Predicated region
    $region21: #{inception_b_forward.9} parent=5 // pred_check
      _
    $region22: #{inception_b_forward.9} parent=5 // pred_check_branch
      %110 = sbr.rel (%p107) target = $region24
    $region23: #{inception_b_forward.9} parent=5 // pred_region
      %s111 = ssub.s32 %s7, 1
      %p112 = scmp.lt.s32.totalorder %s16, 1
      %s113 = scalar_select %p112, %s16, 1
      %p114 = scmp.lt.s32.totalorder %s17, 0
      %s115 = scalar_select %p114, %s17, 0
      %s116 = smul.addr %s113, 32
      %s117 = sadd.s32 %s115, %s116
      %s118 = smul.addr %s117, 8
      %s119 = scalar_lea.vmem %s0, %s118
      %p120 = pneg %p47
      %p121 = pneg %p44
      %p122 = pneg %p75
      %p123 = pneg %p72
      %p124 = scmp.lt.s32.totalorder %s16, 1
      %s125 = scalar_select %p124, %s16, 1
      %p126 = scmp.lt.s32.totalorder %s17, 0
      %s127 = scalar_select %p126, %s17, 0
      %s128 = smul.addr %s125, 7
      %s129 = sadd.s32 %s127, %s128
      %s130 = smul.addr %s129, 8
      %s131 = scalar_lea.vmem %s1, %s130
      %p132 = scmp.lt.s32.totalorder %s16, 1
      %s133 = scalar_select %p132, %s16, 1
      %p134 = scmp.lt.s32.totalorder %s17, 0
      %s135 = scalar_select %p134, %s17, 0
      %s136 = smul.addr %s133, 32
      %s137 = sadd.s32 %s135, %s136
      %s138 = smul.addr %s137, 8
      %s139 = scalar_lea.vmem %s0, %s138
      %p140 = scmp.lt.s32.totalorder %s16, 1
      %s141 = scalar_select %p140, %s16, 1
      %p142 = scmp.lt.s32.totalorder %s17, 0
      %s143 = scalar_select %p142, %s17, 0
      %s144 = smul.addr %s141, 7
      %s145 = sadd.s32 %s143, %s144
      %s146 = smul.addr %s145, 8
      %s147 = scalar_lea.vmem %s1, %s146
      %v148 = vld [vmem:[%s139] sm:$0xff]
      %v149 = vld [vmem:[%s139 + $0x8] sm:$0xff]
      %v150 = vld [vmem:[%s139 + $0x20] sm:$0xff]
      %v151 = vld [vmem:[%s139 + $0x28] sm:$0xff]
      %v152 = vld [vmem:[%s139 + $0x40] sm:$0xff]
      %v153 = vld [vmem:[%s139 + $0x48] sm:$0xff]
      %v154 = vld [vmem:[%s139 + $0x60] sm:$0xff]
      %v155 = vld [vmem:[%s139 + $0x68] sm:$0xff]
      %v156 = vld [vmem:[%s139 + $0x80] sm:$0xff]
      %v157 = vld [vmem:[%s139 + $0x88] sm:$0xff]
      %v158 = vld [vmem:[%s139 + $0xa0] sm:$0xff]
      %v159 = vld [vmem:[%s139 + $0xa8] sm:$0xff]
      %v160 = vld [vmem:[%s139 + $0xc0] sm:$0xff]
      %v161 = vld [vmem:[%s139 + $0xc8] sm:$0xff]
      %s162 = scalar_lea.vmem %s139, 16
      %v163 = vld [vmem:[%s162] sm:$0xff]
      %v164 = vld [vmem:[%s162 + $0x8] sm:$0xff]
      %v165 = vld [vmem:[%s162 + $0x20] sm:$0xff]
      %v166 = vld [vmem:[%s162 + $0x28] sm:$0xff]
      %v167 = vld [vmem:[%s162 + $0x40] sm:$0xff]
      %v168 = vld [vmem:[%s162 + $0x48] sm:$0xff]
      %v169 = vld [vmem:[%s162 + $0x60] sm:$0xff]
      %v170 = vld [vmem:[%s162 + $0x68] sm:$0xff]
      %v171 = vld [vmem:[%s162 + $0x80] sm:$0xff]
      %v172 = vld [vmem:[%s162 + $0x88] sm:$0xff]
      %v173 = vld [vmem:[%s162 + $0xa0] sm:$0xff]
      %v174 = vld [vmem:[%s162 + $0xa8] sm:$0xff]
      %v175 = vld [vmem:[%s162 + $0xc0] sm:$0xff]
      %v176 = vld [vmem:[%s162 + $0xc8] sm:$0xff]
      %s177 = scalar_lea.vmem %s139, 32
      %v178 = vld [vmem:[%s177] sm:$0xff]
      %v179 = vld [vmem:[%s177 + $0x8] sm:$0xff]
      %v180 = vld [vmem:[%s177 + $0x20] sm:$0xff]
      %v181 = vld [vmem:[%s177 + $0x28] sm:$0xff]
      %v182 = vld [vmem:[%s177 + $0x40] sm:$0xff]
      %v183 = vld [vmem:[%s177 + $0x48] sm:$0xff]
      %v184 = vld [vmem:[%s177 + $0x60] sm:$0xff]
      %v185 = vld [vmem:[%s177 + $0x68] sm:$0xff]
      %v186 = vld [vmem:[%s177 + $0x80] sm:$0xff]
      %v187 = vld [vmem:[%s177 + $0x88] sm:$0xff]
      %v188 = vld [vmem:[%s177 + $0xa0] sm:$0xff]
      %v189 = vld [vmem:[%s177 + $0xa8] sm:$0xff]
      %v190 = vld [vmem:[%s177 + $0xc0] sm:$0xff]
      %v191 = vld [vmem:[%s177 + $0xc8] sm:$0xff]
      %v192 = vmax.f32 %v148, %v163
      %v193 = vmax.f32 %v149, %v164
      %v194 = vmax.f32 %v150, %v165
      %v195 = vmax.f32 %v151, %v166
      %v196 = vmax.f32 %v152, %v167
      %v197 = vmax.f32 %v153, %v168
      %v198 = vmax.f32 %v154, %v169
      %v199 = vmax.f32 %v155, %v170
      %v200 = vmax.f32 %v156, %v171
      %v201 = vmax.f32 %v157, %v172
      %v202 = vmax.f32 %v158, %v173
      %v203 = vmax.f32 %v159, %v174
      %v204 = vmax.f32 %v160, %v175
      %v205 = vmax.f32 %v161, %v176
      %v206 = vmax.f32 %v192, %v178
      %v207 = vmax.f32 %v193, %v179
      %v208 = vmax.f32 %v194, %v180
      %v209 = vmax.f32 %v195, %v181
      %v210 = vmax.f32 %v196, %v182
      %v211 = vmax.f32 %v197, %v183
      %v212 = vmax.f32 %v198, %v184
      %v213 = vmax.f32 %v199, %v185
      %v214 = vmax.f32 %v200, %v186
      %v215 = vmax.f32 %v201, %v187
      %v216 = vmax.f32 %v202, %v188
      %v217 = vmax.f32 %v203, %v189
      %v218 = vmax.f32 %v204, %v190
      %v219 = vmax.f32 %v205, %v191
      %220 = vst [vmem:[#allocation2] sm:$0xff] %v206
      %221 = vst [vmem:[#allocation2 + $0x8] sm:$0xff] %v207
      %222 = vst [vmem:[#allocation2 + $0x10] sm:$0xff] %v208
      %223 = vst [vmem:[#allocation2 + $0x18] sm:$0xff] %v209
      %224 = vst [vmem:[#allocation2 + $0x20] sm:$0xff] %v210
      %225 = vst [vmem:[#allocation2 + $0x28] sm:$0xff] %v211
      %226 = vst [vmem:[#allocation2 + $0x30] sm:$0xff] %v212
      %227 = vst [vmem:[#allocation2 + $0x38] sm:$0xff] %v213
      %228 = vst [vmem:[#allocation2 + $0x40] sm:$0xff] %v214
      %229 = vst [vmem:[#allocation2 + $0x48] sm:$0xff] %v215
      %230 = vst [vmem:[#allocation2 + $0x50] sm:$0xff] %v216
      %231 = vst [vmem:[#allocation2 + $0x58] sm:$0xff] %v217
      %232 = vst [vmem:[#allocation2 + $0x60] sm:$0xff] %v218
      %233 = vst [vmem:[#allocation2 + $0x68] sm:$0xff] %v219
      %v234 = vld [vmem:[#allocation2] ss:$2 sm:$0x7f]
      %s235 = scalar_lea.vmem [#allocation2], 16
      %v236 = vld [vmem:[%s235] ss:$2 sm:$0x7f]
      %s237 = scalar_lea.vmem [#allocation2], 32
      %v238 = vld [vmem:[%s237] ss:$2 sm:$0x7f]
      %s239 = scalar_lea.vmem [#allocation2], 48
      %v240 = vld [vmem:[%s239] ss:$2 sm:$0x7f]
      %s241 = scalar_lea.vmem [#allocation2], 64
      %v242 = vld [vmem:[%s241] ss:$2 sm:$0x7f]
      %s243 = scalar_lea.vmem [#allocation2], 80
      %v244 = vld [vmem:[%s243] ss:$2 sm:$0x7f]
      %s245 = scalar_lea.vmem [#allocation2], 96
      %v246 = vld [vmem:[%s245] ss:$2 sm:$0x7f]
      %s247 = scalar_lea.vmem [#allocation2], 1
      %v248 = vld [vmem:[%s247] ss:$2 sm:$0x7f]
      %s249 = scalar_lea.vmem [#allocation2], 17
      %v250 = vld [vmem:[%s249] ss:$2 sm:$0x7f]
      %s251 = scalar_lea.vmem [#allocation2], 33
      %v252 = vld [vmem:[%s251] ss:$2 sm:$0x7f]
      %s253 = scalar_lea.vmem [#allocation2], 49
      %v254 = vld [vmem:[%s253] ss:$2 sm:$0x7f]
      %s255 = scalar_lea.vmem [#allocation2], 65
      %v256 = vld [vmem:[%s255] ss:$2 sm:$0x7f]
      %s257 = scalar_lea.vmem [#allocation2], 81
      %v258 = vld [vmem:[%s257] ss:$2 sm:$0x7f]
      %s259 = scalar_lea.vmem [#allocation2], 97
      %v260 = vld [vmem:[%s259] ss:$2 sm:$0x7f]
      %s261 = scalar_lea.vmem [#allocation2], 2
      %v262 = vld [vmem:[%s261] ss:$2 sm:$0x7f]
      %s263 = scalar_lea.vmem [#allocation2], 18
      %v264 = vld [vmem:[%s263] ss:$2 sm:$0x7f]
      %s265 = scalar_lea.vmem [#allocation2], 34
      %v266 = vld [vmem:[%s265] ss:$2 sm:$0x7f]
      %s267 = scalar_lea.vmem [#allocation2], 50
      %v268 = vld [vmem:[%s267] ss:$2 sm:$0x7f]
      %s269 = scalar_lea.vmem [#allocation2], 66
      %v270 = vld [vmem:[%s269] ss:$2 sm:$0x7f]
      %s271 = scalar_lea.vmem [#allocation2], 82
      %v272 = vld [vmem:[%s271] ss:$2 sm:$0x7f]
      %s273 = scalar_lea.vmem [#allocation2], 98
      %v274 = vld [vmem:[%s273] ss:$2 sm:$0x7f]
      %v275 = vmax.f32 %v234, %v248
      %v276 = vmax.f32 %v236, %v250
      %v277 = vmax.f32 %v238, %v252
      %v278 = vmax.f32 %v240, %v254
      %v279 = vmax.f32 %v242, %v256
      %v280 = vmax.f32 %v244, %v258
      %v281 = vmax.f32 %v246, %v260
      %v282 = vmax.f32 %v275, %v262
      %v283 = vmax.f32 %v276, %v264
      %v284 = vmax.f32 %v277, %v266
      %v285 = vmax.f32 %v278, %v268
      %v286 = vmax.f32 %v279, %v270
      %v287 = vmax.f32 %v280, %v272
      %v288 = vmax.f32 %v281, %v274
      %289 = vst [vmem:[%s147] sm:$0x7f] %v282
      %290 = vst [vmem:[%s147 + $0x8] sm:$0x7f] %v283
      %291 = vst [vmem:[%s147 + $0x10] sm:$0x7f] %v284
      %292 = vst [vmem:[%s147 + $0x18] sm:$0x7f] %v285
      %293 = vst [vmem:[%s147 + $0x20] sm:$0x7f] %v286
      %294 = vst [vmem:[%s147 + $0x28] sm:$0x7f] %v287
      %295 = vst [vmem:[%s147 + $0x30] sm:$0x7f] %v288
      %p296 = scmp.lt.s32.totalorder %s16, 1
      %s297 = scalar_select %p296, %s16, 1
      %p298 = scmp.lt.s32.totalorder %s17, 0
      %s299 = scalar_select %p298, %s17, 0
      %s300 = smul.addr %s297, 7
      %s301 = sadd.s32 %s299, %s300
      %s302 = smul.addr %s301, 8
      %s303 = scalar_lea.vmem %s1, %s302
      // Predicated region
      $region25: #{inception_b_forward.9} parent=23 // pred_check
        %p304 = pneg %p72
      $region26: #{inception_b_forward.9} parent=23 // pred_check_branch
        %306 = sbr.rel (%p304) target = $region28
      $region27: #{inception_b_forward.9} parent=23 // pred_region
        _
      $region28: #{inception_b_forward.9} parent=23 // pred_fallthru
        _
    $region24: #{inception_b_forward.9} parent=5 // pred_fallthru
      _
    %p307 = scmp.le.s32.totalorder 2, %s7
    // Predicated region
    $region29: #{inception_b_forward.9} parent=5 // pred_check
      %p308 = pneg %p307
    $region30: #{inception_b_forward.9} parent=5 // pred_check_branch
      %310 = sbr.rel (%p308) target = $region32
    $region31: #{inception_b_forward.9} parent=5 // pred_region
      %s311 = ssub.s32 %s7, 2
      // Predicated region
      $region33: #{inception_b_forward.9} parent=31 // pred_check
        %p312 = pneg %p78
      $region34: #{inception_b_forward.9} parent=31 // pred_check_branch
        %314 = sbr.rel (%p312) target = $region36
      $region35: #{inception_b_forward.9} parent=31 // pred_region
        %p315 = scmp.lt.s32.totalorder %s18, 1
        %s316 = scalar_select %p315, %s18, 1
        %p317 = scmp.lt.s32.totalorder %s19, 0
        %s318 = scalar_select %p317, %s19, 0
        %s319 = smul.addr %s316, 7
        %s320 = sadd.s32 %s318, %s319
        %s321 = smul.addr %s320, 8
        %s322 = scalar_lea.vmem %s1, %s321
      $region36: #{inception_b_forward.9} parent=31 // pred_fallthru
        _
    $region32: #{inception_b_forward.9} parent=5 // pred_fallthru
      _
  $region6: #{inception_b_forward.9} parent=0 // loop_footer
    %s11 = sadd.s32 1, %s7
  $region7: #{inception_b_forward.9} parent=0 // loop_footer_branch
    %6 = sbr.rel target = $region3
  $region8: #{inception_b_forward.9} parent=0 // loop_exit
    _

// kernel: inception_b_forward.6
$region0: #{inception_b_forward.6}
  #allocation0 [shape = 'u32[]', space=smem, size = 0x4, offset = 0x4, fixed_abs, tag = 'smem constant byte address 0x4 - core index']
  #allocation1 [shape = 'u32[72,128]{1,0:T(1,128)}', space=vmem, size = 0x9000, scoped, tag = 'internal scratch']
  %s0 = inlined_call_operand.vmem [shape: bf16[512,128], index: 0, kind: input, shape index: {}]
  %s1 = inlined_call_operand.vmem [shape: bf16[128,128], index: 1, kind: input, shape index: {}]
  %s2 = inlined_call_operand.vmem [shape: f32[1,128], index: 2, kind: input, shape index: {}]
  %s3 = inlined_call_operand.vmem [shape: bf16[512,128], index: 3, kind: output, shape index: {}]
  %s4 = sld [smem:[#allocation0]]
  $region45: #{inception_b_forward.6} parent=0
    _
  %s6 = ssub.s32 1, %s4
  %s7 = scalar_select 0, %s6, %s4
  loop: start=0, step=1, limit=4
  $region2: #{inception_b_forward.6} parent=0 // loop_pre_header
    _
  $region3: #{inception_b_forward.6} parent=0 // loop_header
    %s9 = sphi 0, %s13
    %p10 = scmp.ge.s32.totalorder %s9, 4
    %s19 = sphi 0, %s21
    %s22 = sphi 0, %s19
    %s23 = sphi 0, %s22
    %s39 = sphi 0, %s23
    %s43 = sphi 0, %s43
    %s45 = sphi 0, %s43
    %s46 = sphi 0, %s45
    %s60 = sphi 0, %s46
    %s64 = sphi 0, %s64
    %s66 = sphi 0, %s64
    %s67 = sphi 0, %s66
    %s81 = sphi 0, %s67
    %s87 = sphi 0, %s89
    %s90 = sphi 0, %s87
    %s91 = sphi 0, %s90
    %s107 = sphi 0, %s91
  $region4: #{inception_b_forward.6} parent=0 // loop_header_branch
    %12 = sbr.rel (%p10) target = $region8
  $region5: #{inception_b_forward.6} parent=0 // loop_body
    %s14 = ssub.s32 %s9, 1
    %s15 = ssub.s32 %s9, 2
    %s16 = sadd.s32 %s9, 1
    %s17 = ssub.s32 %s9, %s16
    %p18 = scmp.eq.s32.totalorder %s17, 0
    %s20 = sadd.s32 %s19, 1
    %s21 = scalar_select %p18, %s19, %s20
    %p24 = pneg %p18
    %p25 = scmp.eq.s32.totalorder %s9, 1
    %p26 = por %p24, %p25
    %p27 = scmp.ne.s32.totalorder %s19, %s22
    %p28 = scmp.eq.s32.totalorder %s9, 0
    %p29 = por %p27, %p28
    %p30 = scmp.ne.s32.totalorder %s19, %s22
    %p31 = scmp.eq.s32.totalorder %s14, 1
    %p32 = por %p30, %p31
    %p33 = scmp.ne.s32.totalorder %s22, %s23
    %p34 = scmp.eq.s32.totalorder %s14, 0
    %p35 = por %p33, %p34
    %p36 = scmp.ne.s32.totalorder %s22, %s23
    %p37 = scmp.eq.s32.totalorder %s15, 1
    %p38 = por %p36, %p37
    %p40 = scmp.ne.s32.totalorder %s23, %s39
    %p41 = scmp.eq.s32.totalorder %s15, 0
    %p42 = por %p40, %p41
    %s44 = sadd.s32 %s43, 1
    %p47 = scmp.eq.s32.totalorder %s9, 1
    %p48 = scmp.ne.s32.totalorder %s43, %s45
    %p49 = scmp.eq.s32.totalorder %s9, 0
    %p50 = por %p48, %p49
    %p51 = scmp.ne.s32.totalorder %s43, %s45
    %p52 = scmp.eq.s32.totalorder %s14, 1
    %p53 = por %p51, %p52
    %p54 = scmp.ne.s32.totalorder %s45, %s46
    %p55 = scmp.eq.s32.totalorder %s14, 0
    %p56 = por %p54, %p55
    %p57 = scmp.ne.s32.totalorder %s45, %s46
    %p58 = scmp.eq.s32.totalorder %s15, 1
    %p59 = por %p57, %p58
    %p61 = scmp.ne.s32.totalorder %s46, %s60
    %p62 = scmp.eq.s32.totalorder %s15, 0
    %p63 = por %p61, %p62
    %s65 = sadd.s32 %s64, 1
    %p68 = scmp.eq.s32.totalorder %s9, 1
    %p69 = scmp.ne.s32.totalorder %s64, %s66
    %p70 = scmp.eq.s32.totalorder %s9, 0
    %p71 = por %p69, %p70
    %p72 = scmp.ne.s32.totalorder %s64, %s66
    %p73 = scmp.eq.s32.totalorder %s14, 1
    %p74 = por %p72, %p73
    %p75 = scmp.ne.s32.totalorder %s66, %s67
    %p76 = scmp.eq.s32.totalorder %s14, 0
    %p77 = por %p75, %p76
    %p78 = scmp.ne.s32.totalorder %s66, %s67
    %p79 = scmp.eq.s32.totalorder %s15, 1
    %p80 = por %p78, %p79
    %p82 = scmp.ne.s32.totalorder %s67, %s81
    %p83 = scmp.eq.s32.totalorder %s15, 0
    %p84 = por %p82, %p83
    %s85 = ssub.s32 %s9, %s16
    %p86 = scmp.eq.s32.totalorder %s85, 0
    %s88 = sadd.s32 %s87, 1
    %s89 = scalar_select %p86, %s87, %s88
    %p92 = pneg %p86
    %p93 = scmp.eq.s32.totalorder %s9, 1
    %p94 = por %p92, %p93
    %p95 = scmp.ne.s32.totalorder %s87, %s90
    %p96 = scmp.eq.s32.totalorder %s9, 0
    %p97 = por %p95, %p96
    %p98 = scmp.ne.s32.totalorder %s87, %s90
    %p99 = scmp.eq.s32.totalorder %s14, 1
    %p100 = por %p98, %p99
    %p101 = scmp.ne.s32.totalorder %s90, %s91
    %p102 = scmp.eq.s32.totalorder %s14, 0
    %p103 = por %p101, %p102
    %p104 = scmp.ne.s32.totalorder %s90, %s91
    %p105 = scmp.eq.s32.totalorder %s15, 1
    %p106 = por %p104, %p105
    %p108 = scmp.ne.s32.totalorder %s91, %s107
    %p109 = scmp.eq.s32.totalorder %s15, 0
    %p110 = por %p108, %p109
    %p111 = scmp.le.s32.totalorder 1, %s9
    %p112 = scmp.lt.s32.totalorder %s9, 3
    %p113 = pnand %p111, %p112
    %p114 = pneg %p113
    // Predicated region
    $region9: #{inception_b_forward.6} parent=5 // pred_check
      _
    $region10: #{inception_b_forward.6} parent=5 // pred_check_branch
      %116 = sbr.rel (%p113) target = $region12
    $region11: #{inception_b_forward.6} parent=5 // pred_region
      %s117 = ssub.s32 %s9, 1
      // Predicated region
      $region13: #{inception_b_forward.6} parent=11 // pred_check
        %p118 = pneg %p56
      $region14: #{inception_b_forward.6} parent=11 // pred_check_branch
        %120 = sbr.rel (%p118) target = $region16
      $region15: #{inception_b_forward.6} parent=11 // pred_region
        _
      $region16: #{inception_b_forward.6} parent=11 // pred_fallthru
        _
      // Predicated region
      $region17: #{inception_b_forward.6} parent=11 // pred_check
        %p121 = pneg %p77
      $region18: #{inception_b_forward.6} parent=11 // pred_check_branch
        %123 = sbr.rel (%p121) target = $region20
      $region19: #{inception_b_forward.6} parent=11 // pred_region
        _
      $region20: #{inception_b_forward.6} parent=11 // pred_fallthru
        _
    $region12: #{inception_b_forward.6} parent=5 // pred_fallthru
      _
    %p124 = scmp.lt.s32.totalorder %s9, 2
    // Predicated region
    $region21: #{inception_b_forward.6} parent=5 // pred_check
      %p125 = pneg %p124
    $region22: #{inception_b_forward.6} parent=5 // pred_check_branch
      %127 = sbr.rel (%p125) target = $region24
    $region23: #{inception_b_forward.6} parent=5 // pred_region
      // Predicated region
      $region25: #{inception_b_forward.6} parent=23 // pred_check
        %p128 = pneg %p29
      $region26: #{inception_b_forward.6} parent=23 // pred_check_branch
        %130 = sbr.rel (%p128) target = $region28
      $region27: #{inception_b_forward.6} parent=23 // pred_region
        %s131 = smul.u32 32, %s9
        %p132 = scmp.lt.s32.totalorder %s131, 63
        %s133 = scalar_select %p132, %s131, 63
        %s134 = smul.addr %s133, 4
        %s135 = scalar_lea.vmem %s0, %s134
        %s136 = smul.u32 32, %s9
      $region28: #{inception_b_forward.6} parent=23 // pred_fallthru
        _
    $region24: #{inception_b_forward.6} parent=5 // pred_fallthru
      _
    %p137 = scmp.le.s32.totalorder 1, %s9
    %p138 = scmp.lt.s32.totalorder %s9, 3
    %p139 = pnand %p137, %p138
    %p140 = pneg %p139
    // Predicated region
    $region29: #{inception_b_forward.6} parent=5 // pred_check
      _
    $region30: #{inception_b_forward.6} parent=5 // pred_check_branch
      %142 = sbr.rel (%p139) target = $region32
    $region31: #{inception_b_forward.6} parent=5 // pred_region
      %s143 = ssub.s32 %s9, 1
      %s144 = smul.u32 32, %s14
      %p145 = scmp.lt.s32.totalorder %s144, 63
      %s146 = scalar_select %p145, %s144, 63
      %s147 = smul.addr %s146, 4
      %s148 = scalar_lea.vmem %s0, %s147
      %p149 = pneg %p35
      %p150 = pneg %p32
      %p151 = pneg %p56
      %p152 = pneg %p53
      %p153 = pneg %p77
      %p154 = pneg %p74
      %p155 = pneg %p103
      %p156 = pneg %p100
      %s157 = smul.u32 32, %s14
      %p158 = scmp.lt.s32.totalorder %s157, 63
      %s159 = scalar_select %p158, %s157, 63
      %s160 = smul.addr %s159, 4
      %s161 = scalar_lea.vmem %s3, %s160
      %s162 = smul.u32 32, %s14
      %p163 = scmp.lt.s32.totalorder %s162, 63
      %s164 = scalar_select %p163, %s162, 63
      %s165 = smul.addr %s164, 4
      %s166 = scalar_lea.vmem %s0, %s165
      %s167 = smul.u32 32, %s14
      %s168 = smul.u32 32, %s14
      %p169 = scmp.lt.s32.totalorder %s168, 63
      %s170 = scalar_select %p169, %s168, 63
      %s171 = smul.addr %s170, 4
      %s172 = scalar_lea.vmem %s3, %s171
      %s173 = smul.u32 32, %s14
      %v174 = vld [vmem:[%s166] sm:$0xf]
      %v175 = vld [vmem:[%s166 + $0x4] sm:$0xf]
      %v176 = vld [vmem:[%s166 + $0x8] sm:$0xf]
      %v177 = vld [vmem:[%s166 + $0xc] sm:$0xf]
      %v178 = vld [vmem:[%s166 + $0x10] sm:$0xf]
      %v179 = vld [vmem:[%s166 + $0x14] sm:$0xf]
      %v180 = vld [vmem:[%s166 + $0x18] sm:$0xf]
      %v181 = vld [vmem:[%s166 + $0x1c] sm:$0xf]
      %v182 = vld [vmem:[%s166 + $0x20] sm:$0xf]
      %v183 = vld [vmem:[%s166 + $0x24] sm:$0xf]
      %v184 = vld [vmem:[%s166 + $0x28] sm:$0xf]
      %v185 = vld [vmem:[%s166 + $0x2c] sm:$0xf]
      %v186 = vld [vmem:[%s166 + $0x30] sm:$0xf]
      %v187 = vld [vmem:[%s166 + $0x34] sm:$0xf]
      %v188 = vld [vmem:[%s166 + $0x38] sm:$0xf]
      %v189 = vld [vmem:[%s166 + $0x3c] sm:$0xf]
      %v190 = vld [vmem:[%s166 + $0x40] sm:$0xf]
      %v191 = vld [vmem:[%s166 + $0x44] sm:$0xf]
      %v192 = vld [vmem:[%s166 + $0x48] sm:$0xf]
      %v193 = vld [vmem:[%s166 + $0x4c] sm:$0xf]
      %v194 = vld [vmem:[%s166 + $0x50] sm:$0xf]
      %v195 = vld [vmem:[%s166 + $0x54] sm:$0xf]
      %v196 = vld [vmem:[%s166 + $0x58] sm:$0xf]
      %v197 = vld [vmem:[%s166 + $0x5c] sm:$0xf]
      %v198 = vld [vmem:[%s166 + $0x60] sm:$0xf]
      %v199 = vld [vmem:[%s166 + $0x64] sm:$0xf]
      %v200 = vld [vmem:[%s166 + $0x68] sm:$0xf]
      %v201 = vld [vmem:[%s166 + $0x6c] sm:$0xf]
      %v202 = vld [vmem:[%s166 + $0x70] sm:$0xf]
      %v203 = vld [vmem:[%s166 + $0x74] sm:$0xf]
      %v204 = vld [vmem:[%s166 + $0x78] sm:$0xf]
      %v205 = vld [vmem:[%s166 + $0x7c] sm:$0xf]
      %v206 = vld [vmem:[%s1] sm:$0xf]
      %v207 = vld [vmem:[%s1 + $0x4] sm:$0xf]
      %v208 = vld [vmem:[%s1 + $0x8] sm:$0xf]
      %v209 = vld [vmem:[%s1 + $0xc] sm:$0xf]
      %v210 = vld [vmem:[%s1 + $0x10] sm:$0xf]
      %v211 = vld [vmem:[%s1 + $0x14] sm:$0xf]
      %v212 = vld [vmem:[%s1 + $0x18] sm:$0xf]
      %v213 = vld [vmem:[%s1 + $0x1c] sm:$0xf]
      %v214 = vld [vmem:[%s1 + $0x20] sm:$0xf]
      %v215 = vld [vmem:[%s1 + $0x24] sm:$0xf]
      %v216 = vld [vmem:[%s1 + $0x28] sm:$0xf]
      %v217 = vld [vmem:[%s1 + $0x2c] sm:$0xf]
      %v218 = vld [vmem:[%s1 + $0x30] sm:$0xf]
      %v219 = vld [vmem:[%s1 + $0x34] sm:$0xf]
      %v220 = vld [vmem:[%s1 + $0x38] sm:$0xf]
      %v221 = vld [vmem:[%s1 + $0x3c] sm:$0xf]
      %v222 = vld [vmem:[%s2] sm:$0x1]
      %v224 = vperm.slane %v222, 0
      %v258 = vunpack.c.l.b16 %v174
      %v259 = vunpack.c.l.b16 %v175
      %v260 = vunpack.c.l.b16 %v176
      %v261 = vunpack.c.l.b16 %v177
      %v262 = vunpack.c.l.b16 %v178
      %v263 = vunpack.c.l.b16 %v179
      %v264 = vunpack.c.l.b16 %v180
      %v265 = vunpack.c.l.b16 %v181
      %v266 = vunpack.c.l.b16 %v182
      %v267 = vunpack.c.l.b16 %v183
      %v268 = vunpack.c.l.b16 %v184
      %v269 = vunpack.c.l.b16 %v185
      %v270 = vunpack.c.l.b16 %v186
      %v271 = vunpack.c.l.b16 %v187
      %v272 = vunpack.c.l.b16 %v188
      %v273 = vunpack.c.l.b16 %v189
      %v274 = vunpack.c.l.b16 %v190
      %v275 = vunpack.c.l.b16 %v191
      %v276 = vunpack.c.l.b16 %v192
      %v277 = vunpack.c.l.b16 %v193
      %v278 = vunpack.c.l.b16 %v194
      %v279 = vunpack.c.l.b16 %v195
      %v280 = vunpack.c.l.b16 %v196
      %v281 = vunpack.c.l.b16 %v197
      %v282 = vunpack.c.l.b16 %v198
      %v283 = vunpack.c.l.b16 %v199
      %v284 = vunpack.c.l.b16 %v200
      %v285 = vunpack.c.l.b16 %v201
      %v286 = vunpack.c.l.b16 %v202
      %v287 = vunpack.c.l.b16 %v203
      %v288 = vunpack.c.l.b16 %v204
      %v289 = vunpack.c.l.b16 %v205
      %v290 = vpack.c.b16 %v259, %v258
      %v291 = vpack.c.b16 %v261, %v260
      %v292 = vpack.c.b16 %v263, %v262
      %v293 = vpack.c.b16 %v265, %v264
      %v294 = vpack.c.b16 %v267, %v266
      %v295 = vpack.c.b16 %v269, %v268
      %v296 = vpack.c.b16 %v271, %v270
      %v297 = vpack.c.b16 %v273, %v272
      %v298 = vpack.c.b16 %v275, %v274
      %v299 = vpack.c.b16 %v277, %v276
      %v300 = vpack.c.b16 %v279, %v278
      %v301 = vpack.c.b16 %v281, %v280
      %v302 = vpack.c.b16 %v283, %v282
      %v303 = vpack.c.b16 %v285, %v284
      %v304 = vpack.c.b16 %v287, %v286
      %v305 = vpack.c.b16 %v289, %v288
      %v338 = vunpack.c.l.b16 %v206
      %v339 = vunpack.c.l.b16 %v207
      %v340 = vunpack.c.l.b16 %v208
      %v341 = vunpack.c.l.b16 %v209
      %v342 = vunpack.c.l.b16 %v210
      %v343 = vunpack.c.l.b16 %v211
      %v344 = vunpack.c.l.b16 %v212
      %v345 = vunpack.c.l.b16 %v213
      %v346 = vunpack.c.l.b16 %v214
      %v347 = vunpack.c.l.b16 %v215
      %v348 = vunpack.c.l.b16 %v216
      %v349 = vunpack.c.l.b16 %v217
      %v350 = vunpack.c.l.b16 %v218
      %v351 = vunpack.c.l.b16 %v219
      %v352 = vunpack.c.l.b16 %v220
      %v353 = vunpack.c.l.b16 %v221
      %v354 = vpack.c.b16 %v339, %v338
      %v355 = vpack.c.b16 %v341, %v340
      %v356 = vpack.c.b16 %v343, %v342
      %v357 = vpack.c.b16 %v345, %v344
      %v358 = vpack.c.b16 %v347, %v346
      %v359 = vpack.c.b16 %v349, %v348
      %v360 = vpack.c.b16 %v351, %v350
      %v361 = vpack.c.b16 %v353, %v352
      %370 = vmatpush.bf16.msra.mxu0 %v361
      %371 = vmatpush.bf16.msra.mxu0 %v360
      %372 = vmatpush.bf16.msra.mxu0 %v359
      %373 = vmatpush.bf16.msra.mxu0 %v358
      %374 = vmatpush.bf16.msra.mxu0 %v357
      %375 = vmatpush.bf16.msra.mxu0 %v356
      %376 = vmatpush.bf16.msra.mxu0 %v355
      %377 = vmatpush.bf16.msra.mxu0 %v354
      %378 = vmatmul.bf16.gmra.mxu0 %v290
      %v379 = vpop.f32.mrf.mxu0
      %v380 = vadd.f32 %v224, %v379
      %v381 = vpop.f32.mrf.mxu0
      %v382 = vadd.f32 %v224, %v381
      %383 = vmatmul.bf16.gmra.mxu0 %v291
      %v384 = vpop.f32.mrf.mxu0
      %v385 = vadd.f32 %v224, %v384
      %v386 = vpop.f32.mrf.mxu0
      %v387 = vadd.f32 %v224, %v386
      %388 = vmatmul.bf16.gmra.mxu0 %v292
      %v389 = vpop.f32.mrf.mxu0
      %v390 = vadd.f32 %v224, %v389
      %v391 = vpop.f32.mrf.mxu0
      %v392 = vadd.f32 %v224, %v391
      %393 = vmatmul.bf16.gmra.mxu0 %v293
      %v394 = vpop.f32.mrf.mxu0
      %v395 = vadd.f32 %v224, %v394
      %v396 = vpop.f32.mrf.mxu0
      %v397 = vadd.f32 %v224, %v396
      %398 = vmatmul.bf16.gmra.mxu0 %v294
      %v399 = vpop.f32.mrf.mxu0
      %v400 = vadd.f32 %v224, %v399
      %v401 = vpop.f32.mrf.mxu0
      %v402 = vadd.f32 %v224, %v401
      %403 = vmatmul.bf16.gmra.mxu0 %v295
      %v404 = vpop.f32.mrf.mxu0
      %v405 = vadd.f32 %v224, %v404
      %v406 = vpop.f32.mrf.mxu0
      %v407 = vadd.f32 %v224, %v406
      %408 = vmatmul.bf16.gmra.mxu0 %v296
      %v409 = vpop.f32.mrf.mxu0
      %v410 = vadd.f32 %v224, %v409
      %v411 = vpop.f32.mrf.mxu0
      %v412 = vadd.f32 %v224, %v411
      %413 = vmatmul.bf16.gmra.mxu0 %v297
      %v414 = vpop.f32.mrf.mxu0
      %v415 = vadd.f32 %v224, %v414
      %v416 = vpop.f32.mrf.mxu0
      %v417 = vadd.f32 %v224, %v416
      %418 = vmatmul.bf16.gmra.mxu0 %v298
      %v419 = vpop.f32.mrf.mxu0
      %v420 = vadd.f32 %v224, %v419
      %v421 = vpop.f32.mrf.mxu0
      %v422 = vadd.f32 %v224, %v421
      %423 = vmatmul.bf16.gmra.mxu0 %v299
      %v424 = vpop.f32.mrf.mxu0
      %v425 = vadd.f32 %v224, %v424
      %v426 = vpop.f32.mrf.mxu0
      %v427 = vadd.f32 %v224, %v426
      %428 = vmatmul.bf16.gmra.mxu0 %v300
      %v429 = vpop.f32.mrf.mxu0
      %v430 = vadd.f32 %v224, %v429
      %v431 = vpop.f32.mrf.mxu0
      %v432 = vadd.f32 %v224, %v431
      %433 = vmatmul.bf16.gmra.mxu0 %v301
      %v434 = vpop.f32.mrf.mxu0
      %v435 = vadd.f32 %v224, %v434
      %v436 = vpop.f32.mrf.mxu0
      %v437 = vadd.f32 %v224, %v436
      %438 = vmatmul.bf16.gmra.mxu0 %v302
      %v439 = vpop.f32.mrf.mxu0
      %v440 = vadd.f32 %v224, %v439
      %v441 = vpop.f32.mrf.mxu0
      %v442 = vadd.f32 %v224, %v441
      %443 = vmatmul.bf16.gmra.mxu0 %v303
      %v444 = vpop.f32.mrf.mxu0
      %v445 = vadd.f32 %v224, %v444
      %v446 = vpop.f32.mrf.mxu0
      %v447 = vadd.f32 %v224, %v446
      %448 = vmatmul.bf16.gmra.mxu0 %v304
      %v449 = vpop.f32.mrf.mxu0
      %v450 = vadd.f32 %v224, %v449
      %v451 = vpop.f32.mrf.mxu0
      %v452 = vadd.f32 %v224, %v451
      %453 = vmatmul.bf16.gmra.mxu0 %v305
      %v454 = vpop.f32.mrf.mxu0
      %v455 = vadd.f32 %v224, %v454
      %v456 = vpop.f32.mrf.mxu0
      %v457 = vadd.f32 %v224, %v456
      %458 = vdwg.mxu0
      %v459 = vmax.f32 %v380, 0.0
      %v460 = vmax.f32 %v382, 0.0
      %v461 = vmax.f32 %v385, 0.0
      %v462 = vmax.f32 %v387, 0.0
      %v463 = vmax.f32 %v390, 0.0
      %v464 = vmax.f32 %v392, 0.0
      %v465 = vmax.f32 %v395, 0.0
      %v466 = vmax.f32 %v397, 0.0
      %v467 = vmax.f32 %v400, 0.0
      %v468 = vmax.f32 %v402, 0.0
      %v469 = vmax.f32 %v405, 0.0
      %v470 = vmax.f32 %v407, 0.0
      %v471 = vmax.f32 %v410, 0.0
      %v472 = vmax.f32 %v412, 0.0
      %v473 = vmax.f32 %v415, 0.0
      %v474 = vmax.f32 %v417, 0.0
      %v475 = vmax.f32 %v420, 0.0
      %v476 = vmax.f32 %v422, 0.0
      %v477 = vmax.f32 %v425, 0.0
      %v478 = vmax.f32 %v427, 0.0
      %v479 = vmax.f32 %v430, 0.0
      %v480 = vmax.f32 %v432, 0.0
      %v481 = vmax.f32 %v435, 0.0
      %v482 = vmax.f32 %v437, 0.0
      %v483 = vmax.f32 %v440, 0.0
      %v484 = vmax.f32 %v442, 0.0
      %v485 = vmax.f32 %v445, 0.0
      %v486 = vmax.f32 %v447, 0.0
      %v487 = vmax.f32 %v450, 0.0
      %v488 = vmax.f32 %v452, 0.0
      %v489 = vmax.f32 %v455, 0.0
      %v490 = vmax.f32 %v457, 0.0
      %v491 = vpack.c.bf16 %v459, %v459
      %v492 = vpack.c.bf16 %v460, %v460
      %v493 = vpack.c.bf16 %v461, %v461
      %v494 = vpack.c.bf16 %v462, %v462
      %v495 = vpack.c.bf16 %v463, %v463
      %v496 = vpack.c.bf16 %v464, %v464
      %v497 = vpack.c.bf16 %v465, %v465
      %v498 = vpack.c.bf16 %v466, %v466
      %v499 = vpack.c.bf16 %v467, %v467
      %v500 = vpack.c.bf16 %v468, %v468
      %v501 = vpack.c.bf16 %v469, %v469
      %v502 = vpack.c.bf16 %v470, %v470
      %v503 = vpack.c.bf16 %v471, %v471
      %v504 = vpack.c.bf16 %v472, %v472
      %v505 = vpack.c.bf16 %v473, %v473
      %v506 = vpack.c.bf16 %v474, %v474
      %v507 = vpack.c.bf16 %v475, %v475
      %v508 = vpack.c.bf16 %v476, %v476
      %v509 = vpack.c.bf16 %v477, %v477
      %v510 = vpack.c.bf16 %v478, %v478
      %v511 = vpack.c.bf16 %v479, %v479
      %v512 = vpack.c.bf16 %v480, %v480
      %v513 = vpack.c.bf16 %v481, %v481
      %v514 = vpack.c.bf16 %v482, %v482
      %v515 = vpack.c.bf16 %v483, %v483
      %v516 = vpack.c.bf16 %v484, %v484
      %v517 = vpack.c.bf16 %v485, %v485
      %v518 = vpack.c.bf16 %v486, %v486
      %v519 = vpack.c.bf16 %v487, %v487
      %v520 = vpack.c.bf16 %v488, %v488
      %v521 = vpack.c.bf16 %v489, %v489
      %v522 = vpack.c.bf16 %v490, %v490
      %523 = vst [vmem:[%s172] sm:$0xf] %v491
      %524 = vst [vmem:[%s172 + $0x4] sm:$0xf] %v492
      %525 = vst [vmem:[%s172 + $0x8] sm:$0xf] %v493
      %526 = vst [vmem:[%s172 + $0xc] sm:$0xf] %v494
      %527 = vst [vmem:[%s172 + $0x10] sm:$0xf] %v495
      %528 = vst [vmem:[%s172 + $0x14] sm:$0xf] %v496
      %529 = vst [vmem:[%s172 + $0x18] sm:$0xf] %v497
      %530 = vst [vmem:[%s172 + $0x1c] sm:$0xf] %v498
      %531 = vst [vmem:[%s172 + $0x20] sm:$0xf] %v499
      %532 = vst [vmem:[%s172 + $0x24] sm:$0xf] %v500
      %533 = vst [vmem:[%s172 + $0x28] sm:$0xf] %v501
      %534 = vst [vmem:[%s172 + $0x2c] sm:$0xf] %v502
      %535 = vst [vmem:[%s172 + $0x30] sm:$0xf] %v503
      %536 = vst [vmem:[%s172 + $0x34] sm:$0xf] %v504
      %537 = vst [vmem:[%s172 + $0x38] sm:$0xf] %v505
      %538 = vst [vmem:[%s172 + $0x3c] sm:$0xf] %v506
      %539 = vst [vmem:[%s172 + $0x40] sm:$0xf] %v507
      %540 = vst [vmem:[%s172 + $0x44] sm:$0xf] %v508
      %541 = vst [vmem:[%s172 + $0x48] sm:$0xf] %v509
      %542 = vst [vmem:[%s172 + $0x4c] sm:$0xf] %v510
      %543 = vst [vmem:[%s172 + $0x50] sm:$0xf] %v511
      %544 = vst [vmem:[%s172 + $0x54] sm:$0xf] %v512
      %545 = vst [vmem:[%s172 + $0x58] sm:$0xf] %v513
      %546 = vst [vmem:[%s172 + $0x5c] sm:$0xf] %v514
      %547 = vst [vmem:[%s172 + $0x60] sm:$0xf] %v515
      %548 = vst [vmem:[%s172 + $0x64] sm:$0xf] %v516
      %549 = vst [vmem:[%s172 + $0x68] sm:$0xf] %v517
      %550 = vst [vmem:[%s172 + $0x6c] sm:$0xf] %v518
      %551 = vst [vmem:[%s172 + $0x70] sm:$0xf] %v519
      %552 = vst [vmem:[%s172 + $0x74] sm:$0xf] %v520
      %553 = vst [vmem:[%s172 + $0x78] sm:$0xf] %v521
      %554 = vst [vmem:[%s172 + $0x7c] sm:$0xf] %v522
      %s555 = smul.u32 32, %s14
      %p556 = scmp.lt.s32.totalorder %s555, 63
      %s557 = scalar_select %p556, %s555, 63
      %s558 = smul.addr %s557, 4
      %s559 = scalar_lea.vmem %s3, %s558
      // Predicated region
      $region33: #{inception_b_forward.6} parent=31 // pred_check
        %p560 = pneg %p100
      $region34: #{inception_b_forward.6} parent=31 // pred_check_branch
        %562 = sbr.rel (%p560) target = $region36
      $region35: #{inception_b_forward.6} parent=31 // pred_region
        %s563 = smul.u32 32, %s14
      $region36: #{inception_b_forward.6} parent=31 // pred_fallthru
        _
    $region32: #{inception_b_forward.6} parent=5 // pred_fallthru
      _
    %p564 = scmp.le.s32.totalorder 2, %s9
    // Predicated region
    $region37: #{inception_b_forward.6} parent=5 // pred_check
      %p565 = pneg %p564
    $region38: #{inception_b_forward.6} parent=5 // pred_check_branch
      %567 = sbr.rel (%p565) target = $region40
    $region39: #{inception_b_forward.6} parent=5 // pred_region
      %s568 = ssub.s32 %s9, 2
      // Predicated region
      $region41: #{inception_b_forward.6} parent=39 // pred_check
        %p569 = pneg %p106
      $region42: #{inception_b_forward.6} parent=39 // pred_check_branch
        %571 = sbr.rel (%p569) target = $region44
      $region43: #{inception_b_forward.6} parent=39 // pred_region
        %s572 = smul.u32 32, %s15
        %p573 = scmp.lt.s32.totalorder %s572, 63
        %s574 = scalar_select %p573, %s572, 63
        %s575 = smul.addr %s574, 4
        %s576 = scalar_lea.vmem %s3, %s575
      $region44: #{inception_b_forward.6} parent=39 // pred_fallthru
        _
    $region40: #{inception_b_forward.6} parent=5 // pred_fallthru
      _
  $region6: #{inception_b_forward.6} parent=0 // loop_footer
    %s13 = sadd.s32 1, %s9
  $region7: #{inception_b_forward.6} parent=0 // loop_footer_branch
    %8 = sbr.rel target = $region3
  $region8: #{inception_b_forward.6} parent=0 // loop_exit
    _

// kernel: inception_b_forward.7
$region0: #{inception_b_forward.7}
  #allocation0 [shape = 'u32[]', space=smem, size = 0x4, offset = 0x4, fixed_abs, tag = 'smem constant byte address 0x4 - core index']
  #allocation1 [shape = 'u32[72,128]{1,0:T(1,128)}', space=vmem, size = 0x9000, scoped, tag = 'internal scratch']
  %s0 = inlined_call_operand.vmem [shape: bf16[512,1152], index: 0, kind: input, shape index: {}]
  %s1 = inlined_call_operand.vmem [shape: bf16[1152,128], index: 1, kind: input, shape index: {}]
  %s2 = inlined_call_operand.vmem [shape: f32[1,128], index: 2, kind: input, shape index: {}]
  %s3 = inlined_call_operand.vmem [shape: bf16[512,128], index: 3, kind: output, shape index: {}]
  %s4 = sld [smem:[#allocation0]]
  $region45: #{inception_b_forward.7} parent=0
    _
  %s6 = ssub.s32 1, %s4
  %s7 = scalar_select 0, %s6, %s4
  loop: start=0, step=1, limit=4
  $region2: #{inception_b_forward.7} parent=0 // loop_pre_header
    _
  $region3: #{inception_b_forward.7} parent=0 // loop_header
    %s9 = sphi 0, %s13
    %p10 = scmp.ge.s32.totalorder %s9, 4
    %s19 = sphi 0, %s21
    %s22 = sphi 0, %s19
    %s23 = sphi 0, %s22
    %s39 = sphi 0, %s23
    %s43 = sphi 0, %s43
    %s45 = sphi 0, %s43
    %s46 = sphi 0, %s45
    %s60 = sphi 0, %s46
    %s64 = sphi 0, %s64
    %s66 = sphi 0, %s64
    %s67 = sphi 0, %s66
    %s81 = sphi 0, %s67
    %s87 = sphi 0, %s89
    %s90 = sphi 0, %s87
    %s91 = sphi 0, %s90
    %s107 = sphi 0, %s91
  $region4: #{inception_b_forward.7} parent=0 // loop_header_branch
    %12 = sbr.rel (%p10) target = $region8
  $region5: #{inception_b_forward.7} parent=0 // loop_body
    %s14 = ssub.s32 %s9, 1
    %s15 = ssub.s32 %s9, 2
    %s16 = sadd.s32 %s9, 1
    %s17 = ssub.s32 %s9, %s16
    %p18 = scmp.eq.s32.totalorder %s17, 0
    %s20 = sadd.s32 %s19, 1
    %s21 = scalar_select %p18, %s19, %s20
    %p24 = pneg %p18
    %p25 = scmp.eq.s32.totalorder %s9, 1
    %p26 = por %p24, %p25
    %p27 = scmp.ne.s32.totalorder %s19, %s22
    %p28 = scmp.eq.s32.totalorder %s9, 0
    %p29 = por %p27, %p28
    %p30 = scmp.ne.s32.totalorder %s19, %s22
    %p31 = scmp.eq.s32.totalorder %s14, 1
    %p32 = por %p30, %p31
    %p33 = scmp.ne.s32.totalorder %s22, %s23
    %p34 = scmp.eq.s32.totalorder %s14, 0
    %p35 = por %p33, %p34
    %p36 = scmp.ne.s32.totalorder %s22, %s23
    %p37 = scmp.eq.s32.totalorder %s15, 1
    %p38 = por %p36, %p37
    %p40 = scmp.ne.s32.totalorder %s23, %s39
    %p41 = scmp.eq.s32.totalorder %s15, 0
    %p42 = por %p40, %p41
    %s44 = sadd.s32 %s43, 1
    %p47 = scmp.eq.s32.totalorder %s9, 1
    %p48 = scmp.ne.s32.totalorder %s43, %s45
    %p49 = scmp.eq.s32.totalorder %s9, 0
    %p50 = por %p48, %p49
    %p51 = scmp.ne.s32.totalorder %s43, %s45
    %p52 = scmp.eq.s32.totalorder %s14, 1
    %p53 = por %p51, %p52
    %p54 = scmp.ne.s32.totalorder %s45, %s46
    %p55 = scmp.eq.s32.totalorder %s14, 0
    %p56 = por %p54, %p55
    %p57 = scmp.ne.s32.totalorder %s45, %s46
    %p58 = scmp.eq.s32.totalorder %s15, 1
    %p59 = por %p57, %p58
    %p61 = scmp.ne.s32.totalorder %s46, %s60
    %p62 = scmp.eq.s32.totalorder %s15, 0
    %p63 = por %p61, %p62
    %s65 = sadd.s32 %s64, 1
    %p68 = scmp.eq.s32.totalorder %s9, 1
    %p69 = scmp.ne.s32.totalorder %s64, %s66
    %p70 = scmp.eq.s32.totalorder %s9, 0
    %p71 = por %p69, %p70
    %p72 = scmp.ne.s32.totalorder %s64, %s66
    %p73 = scmp.eq.s32.totalorder %s14, 1
    %p74 = por %p72, %p73
    %p75 = scmp.ne.s32.totalorder %s66, %s67
    %p76 = scmp.eq.s32.totalorder %s14, 0
    %p77 = por %p75, %p76
    %p78 = scmp.ne.s32.totalorder %s66, %s67
    %p79 = scmp.eq.s32.totalorder %s15, 1
    %p80 = por %p78, %p79
    %p82 = scmp.ne.s32.totalorder %s67, %s81
    %p83 = scmp.eq.s32.totalorder %s15, 0
    %p84 = por %p82, %p83
    %s85 = ssub.s32 %s9, %s16
    %p86 = scmp.eq.s32.totalorder %s85, 0
    %s88 = sadd.s32 %s87, 1
    %s89 = scalar_select %p86, %s87, %s88
    %p92 = pneg %p86
    %p93 = scmp.eq.s32.totalorder %s9, 1
    %p94 = por %p92, %p93
    %p95 = scmp.ne.s32.totalorder %s87, %s90
    %p96 = scmp.eq.s32.totalorder %s9, 0
    %p97 = por %p95, %p96
    %p98 = scmp.ne.s32.totalorder %s87, %s90
    %p99 = scmp.eq.s32.totalorder %s14, 1
    %p100 = por %p98, %p99
    %p101 = scmp.ne.s32.totalorder %s90, %s91
    %p102 = scmp.eq.s32.totalorder %s14, 0
    %p103 = por %p101, %p102
    %p104 = scmp.ne.s32.totalorder %s90, %s91
    %p105 = scmp.eq.s32.totalorder %s15, 1
    %p106 = por %p104, %p105
    %p108 = scmp.ne.s32.totalorder %s91, %s107
    %p109 = scmp.eq.s32.totalorder %s15, 0
    %p110 = por %p108, %p109
    %p111 = scmp.le.s32.totalorder 1, %s9
    %p112 = scmp.lt.s32.totalorder %s9, 3
    %p113 = pnand %p111, %p112
    %p114 = pneg %p113
    // Predicated region
    $region9: #{inception_b_forward.7} parent=5 // pred_check
      _
    $region10: #{inception_b_forward.7} parent=5 // pred_check_branch
      %116 = sbr.rel (%p113) target = $region12
    $region11: #{inception_b_forward.7} parent=5 // pred_region
      %s117 = ssub.s32 %s9, 1
      // Predicated region
      $region13: #{inception_b_forward.7} parent=11 // pred_check
        %p118 = pneg %p56
      $region14: #{inception_b_forward.7} parent=11 // pred_check_branch
        %120 = sbr.rel (%p118) target = $region16
      $region15: #{inception_b_forward.7} parent=11 // pred_region
        _
      $region16: #{inception_b_forward.7} parent=11 // pred_fallthru
        _
      // Predicated region
      $region17: #{inception_b_forward.7} parent=11 // pred_check
        %p121 = pneg %p77
      $region18: #{inception_b_forward.7} parent=11 // pred_check_branch
        %123 = sbr.rel (%p121) target = $region20
      $region19: #{inception_b_forward.7} parent=11 // pred_region
        _
      $region20: #{inception_b_forward.7} parent=11 // pred_fallthru
        _
    $region12: #{inception_b_forward.7} parent=5 // pred_fallthru
      _
    %p124 = scmp.lt.s32.totalorder %s9, 2
    // Predicated region
    $region21: #{inception_b_forward.7} parent=5 // pred_check
      %p125 = pneg %p124
    $region22: #{inception_b_forward.7} parent=5 // pred_check_branch
      %127 = sbr.rel (%p125) target = $region24
    $region23: #{inception_b_forward.7} parent=5 // pred_region
      // Predicated region
      $region25: #{inception_b_forward.7} parent=23 // pred_check
        %p128 = pneg %p29
      $region26: #{inception_b_forward.7} parent=23 // pred_check_branch
        %130 = sbr.rel (%p128) target = $region28
      $region27: #{inception_b_forward.7} parent=23 // pred_region
        %s131 = smul.u32 32, %s9
        %p132 = scmp.lt.s32.totalorder %s131, 63
        %s133 = scalar_select %p132, %s131, 63
        %s134 = smul.addr %s133, 9
        %s135 = smul.addr %s134, 4
        %s136 = scalar_lea.vmem %s0, %s135
        %s137 = smul.u32 32, %s9
      $region28: #{inception_b_forward.7} parent=23 // pred_fallthru
        _
    $region24: #{inception_b_forward.7} parent=5 // pred_fallthru
      _
    %p138 = scmp.le.s32.totalorder 1, %s9
    %p139 = scmp.lt.s32.totalorder %s9, 3
    %p140 = pnand %p138, %p139
    %p141 = pneg %p140
    // Predicated region
    $region29: #{inception_b_forward.7} parent=5 // pred_check
      _
    $region30: #{inception_b_forward.7} parent=5 // pred_check_branch
      %143 = sbr.rel (%p140) target = $region32
    $region31: #{inception_b_forward.7} parent=5 // pred_region
      %s144 = ssub.s32 %s9, 1
      %s145 = smul.u32 32, %s14
      %p146 = scmp.lt.s32.totalorder %s145, 63
      %s147 = scalar_select %p146, %s145, 63
      %s148 = smul.addr %s147, 9
      %s149 = smul.addr %s148, 4
      %s150 = scalar_lea.vmem %s0, %s149
      %p151 = pneg %p35
      %p152 = pneg %p32
      %p153 = pneg %p56
      %p154 = pneg %p53
      %p155 = pneg %p77
      %p156 = pneg %p74
      %p157 = pneg %p103
      %p158 = pneg %p100
      %s159 = smul.u32 32, %s14
      %p160 = scmp.lt.s32.totalorder %s159, 63
      %s161 = scalar_select %p160, %s159, 63
      %s162 = smul.addr %s161, 4
      %s163 = scalar_lea.vmem %s3, %s162
      %s164 = smul.u32 32, %s14
      %p165 = scmp.lt.s32.totalorder %s164, 63
      %s166 = scalar_select %p165, %s164, 63
      %s167 = smul.addr %s166, 9
      %s168 = smul.addr %s167, 4
      %s169 = scalar_lea.vmem %s0, %s168
      %s170 = smul.u32 32, %s14
      %s171 = smul.u32 32, %s14
      %p172 = scmp.lt.s32.totalorder %s171, 63
      %s173 = scalar_select %p172, %s171, 63
      %s174 = smul.addr %s173, 4
      %s175 = scalar_lea.vmem %s3, %s174
      %s176 = smul.u32 32, %s14
      %v177 = vld [vmem:[%s169] sm:$0xff]
      %v178 = vld [vmem:[%s169 + $0x8] sm:$0xff]
      %v179 = vld [vmem:[%s169 + $0x10] sm:$0xff]
      %v180 = vld [vmem:[%s169 + $0x18] sm:$0xff]
      %v181 = vld [vmem:[%s169 + $0x20] sm:$0xf]
      %v182 = vld [vmem:[%s169 + $0x24] sm:$0xff]
      %v183 = vld [vmem:[%s169 + $0x2c] sm:$0xff]
      %v184 = vld [vmem:[%s169 + $0x34] sm:$0xff]
      %v185 = vld [vmem:[%s169 + $0x3c] sm:$0xff]
      %v186 = vld [vmem:[%s169 + $0x44] sm:$0xf]
      %v187 = vld [vmem:[%s169 + $0x48] sm:$0xff]
      %v188 = vld [vmem:[%s169 + $0x50] sm:$0xff]
      %v189 = vld [vmem:[%s169 + $0x58] sm:$0xff]
      %v190 = vld [vmem:[%s169 + $0x60] sm:$0xff]
      %v191 = vld [vmem:[%s169 + $0x68] sm:$0xf]
      %v192 = vld [vmem:[%s169 + $0x6c] sm:$0xff]
      %v193 = vld [vmem:[%s169 + $0x74] sm:$0xff]
      %v194 = vld [vmem:[%s169 + $0x7c] sm:$0xff]
      %v195 = vld [vmem:[%s169 + $0x84] sm:$0xff]
      %v196 = vld [vmem:[%s169 + $0x8c] sm:$0xf]
      %v197 = vld [vmem:[%s169 + $0x90] sm:$0xff]
      %v198 = vld [vmem:[%s169 + $0x98] sm:$0xff]
      %v199 = vld [vmem:[%s169 + $0xa0] sm:$0xff]
      %v200 = vld [vmem:[%s169 + $0xa8] sm:$0xff]
      %v201 = vld [vmem:[%s169 + $0xb0] sm:$0xf]
      %v202 = vld [vmem:[%s169 + $0xb4] sm:$0xff]
      %v203 = vld [vmem:[%s169 + $0xbc] sm:$0xff]
      %v204 = vld [vmem:[%s169 + $0xc4] sm:$0xff]
      %v205 = vld [vmem:[%s169 + $0xcc] sm:$0xff]
      %v206 = vld [vmem:[%s169 + $0xd4] sm:$0xf]
      %v207 = vld [vmem:[%s169 + $0xd8] sm:$0xff]
      %v208 = vld [vmem:[%s169 + $0xe0] sm:$0xff]
      %v209 = vld [vmem:[%s169 + $0xe8] sm:$0xff]
      %v210 = vld [vmem:[%s169 + $0xf0] sm:$0xff]
      %v211 = vld [vmem:[%s169 + $0xf8] sm:$0xf]
      %v212 = vld [vmem:[%s169 + $0xfc] sm:$0xff]
      %v213 = vld [vmem:[%s169 + $0x104] sm:$0xff]
      %v214 = vld [vmem:[%s169 + $0x10c] sm:$0xff]
      %v215 = vld [vmem:[%s169 + $0x114] sm:$0xff]
      %v216 = vld [vmem:[%s169 + $0x11c] sm:$0xf]
      %v217 = vld [vmem:[%s169 + $0x120] sm:$0xff]
      %v218 = vld [vmem:[%s169 + $0x128] sm:$0xff]
      %v219 = vld [vmem:[%s169 + $0x130] sm:$0xff]
      %v220 = vld [vmem:[%s169 + $0x138] sm:$0xff]
      %v221 = vld [vmem:[%s169 + $0x140] sm:$0xf]
      %v222 = vld [vmem:[%s169 + $0x144] sm:$0xff]
      %v223 = vld [vmem:[%s169 + $0x14c] sm:$0xff]
      %v224 = vld [vmem:[%s169 + $0x154] sm:$0xff]
      %v225 = vld [vmem:[%s169 + $0x15c] sm:$0xff]
      %v226 = vld [vmem:[%s169 + $0x164] sm:$0xf]
      %v227 = vld [vmem:[%s169 + $0x168] sm:$0xff]
      %v228 = vld [vmem:[%s169 + $0x170] sm:$0xff]
      %v229 = vld [vmem:[%s169 + $0x178] sm:$0xff]
      %v230 = vld [vmem:[%s169 + $0x180] sm:$0xff]
      %v231 = vld [vmem:[%s169 + $0x188] sm:$0xf]
      %v232 = vld [vmem:[%s169 + $0x18c] sm:$0xff]
      %v233 = vld [vmem:[%s169 + $0x194] sm:$0xff]
      %v234 = vld [vmem:[%s169 + $0x19c] sm:$0xff]
      %v235 = vld [vmem:[%s169 + $0x1a4] sm:$0xff]
      %v236 = vld [vmem:[%s169 + $0x1ac] sm:$0xf]
      %v237 = vld [vmem:[%s169 + $0x1b0] sm:$0xff]
      %v238 = vld [vmem:[%s169 + $0x1b8] sm:$0xff]
      %v239 = vld [vmem:[%s169 + $0x1c0] sm:$0xff]
      %v240 = vld [vmem:[%s169 + $0x1c8] sm:$0xff]
      %v241 = vld [vmem:[%s169 + $0x1d0] sm:$0xf]
      %v242 = vld [vmem:[%s169 + $0x1d4] sm:$0xff]
      %v243 = vld [vmem:[%s169 + $0x1dc] sm:$0xff]
      %v244 = vld [vmem:[%s169 + $0x1e4] sm:$0xff]
      %v245 = vld [vmem:[%s169 + $0x1ec] sm:$0xff]
      %v246 = vld [vmem:[%s169 + $0x1f4] sm:$0xf]
      %v247 = vld [vmem:[%s169 + $0x1f8] sm:$0xff]
      %v248 = vld [vmem:[%s169 + $0x200] sm:$0xff]
      %v249 = vld [vmem:[%s169 + $0x208] sm:$0xff]
      %v250 = vld [vmem:[%s169 + $0x210] sm:$0xff]
      %v251 = vld [vmem:[%s169 + $0x218] sm:$0xf]
      %v252 = vld [vmem:[%s169 + $0x21c] sm:$0xff]
      %v253 = vld [vmem:[%s169 + $0x224] sm:$0xff]
      %v254 = vld [vmem:[%s169 + $0x22c] sm:$0xff]
      %v255 = vld [vmem:[%s169 + $0x234] sm:$0xff]
      %v256 = vld [vmem:[%s169 + $0x23c] sm:$0xf]
      %v257 = vld [vmem:[%s169 + $0x240] sm:$0xff]
      %v258 = vld [vmem:[%s169 + $0x248] sm:$0xff]
      %v259 = vld [vmem:[%s169 + $0x250] sm:$0xff]
      %v260 = vld [vmem:[%s169 + $0x258] sm:$0xff]
      %v261 = vld [vmem:[%s169 + $0x260] sm:$0xf]
      %v262 = vld [vmem:[%s169 + $0x264] sm:$0xff]
      %v263 = vld [vmem:[%s169 + $0x26c] sm:$0xff]
      %v264 = vld [vmem:[%s169 + $0x274] sm:$0xff]
      %v265 = vld [vmem:[%s169 + $0x27c] sm:$0xff]
      %v266 = vld [vmem:[%s169 + $0x284] sm:$0xf]
      %v267 = vld [vmem:[%s169 + $0x288] sm:$0xff]
      %v268 = vld [vmem:[%s169 + $0x290] sm:$0xff]
      %v269 = vld [vmem:[%s169 + $0x298] sm:$0xff]
      %v270 = vld [vmem:[%s169 + $0x2a0] sm:$0xff]
      %v271 = vld [vmem:[%s169 + $0x2a8] sm:$0xf]
      %v272 = vld [vmem:[%s169 + $0x2ac] sm:$0xff]
      %v273 = vld [vmem:[%s169 + $0x2b4] sm:$0xff]
      %v274 = vld [vmem:[%s169 + $0x2bc] sm:$0xff]
      %v275 = vld [vmem:[%s169 + $0x2c4] sm:$0xff]
      %v276 = vld [vmem:[%s169 + $0x2cc] sm:$0xf]
      %v277 = vld [vmem:[%s169 + $0x2d0] sm:$0xff]
      %v278 = vld [vmem:[%s169 + $0x2d8] sm:$0xff]
      %v279 = vld [vmem:[%s169 + $0x2e0] sm:$0xff]
      %v280 = vld [vmem:[%s169 + $0x2e8] sm:$0xff]
      %v281 = vld [vmem:[%s169 + $0x2f0] sm:$0xf]
      %v282 = vld [vmem:[%s169 + $0x2f4] sm:$0xff]
      %v283 = vld [vmem:[%s169 + $0x2fc] sm:$0xff]
      %v284 = vld [vmem:[%s169 + $0x304] sm:$0xff]
      %v285 = vld [vmem:[%s169 + $0x30c] sm:$0xff]
      %v286 = vld [vmem:[%s169 + $0x314] sm:$0xf]
      %v287 = vld [vmem:[%s169 + $0x318] sm:$0xff]
      %v288 = vld [vmem:[%s169 + $0x320] sm:$0xff]
      %v289 = vld [vmem:[%s169 + $0x328] sm:$0xff]
      %v290 = vld [vmem:[%s169 + $0x330] sm:$0xff]
      %v291 = vld [vmem:[%s169 + $0x338] sm:$0xf]
      %v292 = vld [vmem:[%s169 + $0x33c] sm:$0xff]
      %v293 = vld [vmem:[%s169 + $0x344] sm:$0xff]
      %v294 = vld [vmem:[%s169 + $0x34c] sm:$0xff]
      %v295 = vld [vmem:[%s169 + $0x354] sm:$0xff]
      %v296 = vld [vmem:[%s169 + $0x35c] sm:$0xf]
      %v297 = vld [vmem:[%s169 + $0x360] sm:$0xff]
      %v298 = vld [vmem:[%s169 + $0x368] sm:$0xff]
      %v299 = vld [vmem:[%s169 + $0x370] sm:$0xff]
      %v300 = vld [vmem:[%s169 + $0x378] sm:$0xff]
      %v301 = vld [vmem:[%s169 + $0x380] sm:$0xf]
      %v302 = vld [vmem:[%s169 + $0x384] sm:$0xff]
      %v303 = vld [vmem:[%s169 + $0x38c] sm:$0xff]
      %v304 = vld [vmem:[%s169 + $0x394] sm:$0xff]
      %v305 = vld [vmem:[%s169 + $0x39c] sm:$0xff]
      %v306 = vld [vmem:[%s169 + $0x3a4] sm:$0xf]
      %v307 = vld [vmem:[%s169 + $0x3a8] sm:$0xff]
      %v308 = vld [vmem:[%s169 + $0x3b0] sm:$0xff]
      %v309 = vld [vmem:[%s169 + $0x3b8] sm:$0xff]
      %v310 = vld [vmem:[%s169 + $0x3c0] sm:$0xff]
      %v311 = vld [vmem:[%s169 + $0x3c8] sm:$0xf]
      %v312 = vld [vmem:[%s169 + $0x3cc] sm:$0xff]
      %v313 = vld [vmem:[%s169 + $0x3d4] sm:$0xff]
      %v314 = vld [vmem:[%s169 + $0x3dc] sm:$0xff]
      %v315 = vld [vmem:[%s169 + $0x3e4] sm:$0xff]
      %v316 = vld [vmem:[%s169 + $0x3ec] sm:$0xf]
      %v317 = vld [vmem:[%s169 + $0x3f0] sm:$0xff]
      %v318 = vld [vmem:[%s169 + $0x3f8] sm:$0xff]
      %v319 = vld [vmem:[%s169 + $0x400] sm:$0xff]
      %v320 = vld [vmem:[%s169 + $0x408] sm:$0xff]
      %v321 = vld [vmem:[%s169 + $0x410] sm:$0xf]
      %v322 = vld [vmem:[%s169 + $0x414] sm:$0xff]
      %v323 = vld [vmem:[%s169 + $0x41c] sm:$0xff]
      %v324 = vld [vmem:[%s169 + $0x424] sm:$0xff]
      %v325 = vld [vmem:[%s169 + $0x42c] sm:$0xff]
      %v326 = vld [vmem:[%s169 + $0x434] sm:$0xf]
      %v327 = vld [vmem:[%s169 + $0x438] sm:$0xff]
      %v328 = vld [vmem:[%s169 + $0x440] sm:$0xff]
      %v329 = vld [vmem:[%s169 + $0x448] sm:$0xff]
      %v330 = vld [vmem:[%s169 + $0x450] sm:$0xff]
      %v331 = vld [vmem:[%s169 + $0x458] sm:$0xf]
      %v332 = vld [vmem:[%s169 + $0x45c] sm:$0xff]
      %v333 = vld [vmem:[%s169 + $0x464] sm:$0xff]
      %v334 = vld [vmem:[%s169 + $0x46c] sm:$0xff]
      %v335 = vld [vmem:[%s169 + $0x474] sm:$0xff]
      %v336 = vld [vmem:[%s169 + $0x47c] sm:$0xf]
      %v337 = vld [vmem:[%s1] sm:$0xf]
      %v338 = vld [vmem:[%s1 + $0x4] sm:$0xf]
      %v339 = vld [vmem:[%s1 + $0x8] sm:$0xf]
      %v340 = vld [vmem:[%s1 + $0xc] sm:$0xf]
      %v341 = vld [vmem:[%s1 + $0x10] sm:$0xf]
      %v342 = vld [vmem:[%s1 + $0x14] sm:$0xf]
      %v343 = vld [vmem:[%s1 + $0x18] sm:$0xf]
      %v344 = vld [vmem:[%s1 + $0x1c] sm:$0xf]
      %v345 = vld [vmem:[%s1 + $0x20] sm:$0xf]
      %v346 = vld [vmem:[%s1 + $0x24] sm:$0xf]
      %v347 = vld [vmem:[%s1 + $0x28] sm:$0xf]
      %v348 = vld [vmem:[%s1 + $0x2c] sm:$0xf]
      %v349 = vld [vmem:[%s1 + $0x30] sm:$0xf]
      %v350 = vld [vmem:[%s1 + $0x34] sm:$0xf]
      %v351 = vld [vmem:[%s1 + $0x38] sm:$0xf]
      %v352 = vld [vmem:[%s1 + $0x3c] sm:$0xf]
      %v353 = vld [vmem:[%s1 + $0x40] sm:$0xf]
      %v354 = vld [vmem:[%s1 + $0x44] sm:$0xf]
      %v355 = vld [vmem:[%s1 + $0x48] sm:$0xf]
      %v356 = vld [vmem:[%s1 + $0x4c] sm:$0xf]
      %v357 = vld [vmem:[%s1 + $0x50] sm:$0xf]
      %v358 = vld [vmem:[%s1 + $0x54] sm:$0xf]
      %v359 = vld [vmem:[%s1 + $0x58] sm:$0xf]
      %v360 = vld [vmem:[%s1 + $0x5c] sm:$0xf]
      %v361 = vld [vmem:[%s1 + $0x60] sm:$0xf]
      %v362 = vld [vmem:[%s1 + $0x64] sm:$0xf]
      %v363 = vld [vmem:[%s1 + $0x68] sm:$0xf]
      %v364 = vld [vmem:[%s1 + $0x6c] sm:$0xf]
      %v365 = vld [vmem:[%s1 + $0x70] sm:$0xf]
      %v366 = vld [vmem:[%s1 + $0x74] sm:$0xf]
      %v367 = vld [vmem:[%s1 + $0x78] sm:$0xf]
      %v368 = vld [vmem:[%s1 + $0x7c] sm:$0xf]
      %v369 = vld [vmem:[%s1 + $0x80] sm:$0xf]
      %v370 = vld [vmem:[%s1 + $0x84] sm:$0xf]
      %v371 = vld [vmem:[%s1 + $0x88] sm:$0xf]
      %v372 = vld [vmem:[%s1 + $0x8c] sm:$0xf]
      %v373 = vld [vmem:[%s1 + $0x90] sm:$0xf]
      %v374 = vld [vmem:[%s1 + $0x94] sm:$0xf]
      %v375 = vld [vmem:[%s1 + $0x98] sm:$0xf]
      %v376 = vld [vmem:[%s1 + $0x9c] sm:$0xf]
      %v377 = vld [vmem:[%s1 + $0xa0] sm:$0xf]
      %v378 = vld [vmem:[%s1 + $0xa4] sm:$0xf]
      %v379 = vld [vmem:[%s1 + $0xa8] sm:$0xf]
      %v380 = vld [vmem:[%s1 + $0xac] sm:$0xf]
      %v381 = vld [vmem:[%s1 + $0xb0] sm:$0xf]
      %v382 = vld [vmem:[%s1 + $0xb4] sm:$0xf]
      %v383 = vld [vmem:[%s1 + $0xb8] sm:$0xf]
      %v384 = vld [vmem:[%s1 + $0xbc] sm:$0xf]
      %v385 = vld [vmem:[%s1 + $0xc0] sm:$0xf]
      %v386 = vld [vmem:[%s1 + $0xc4] sm:$0xf]
      %v387 = vld [vmem:[%s1 + $0xc8] sm:$0xf]
      %v388 = vld [vmem:[%s1 + $0xcc] sm:$0xf]
      %v389 = vld [vmem:[%s1 + $0xd0] sm:$0xf]
      %v390 = vld [vmem:[%s1 + $0xd4] sm:$0xf]
      %v391 = vld [vmem:[%s1 + $0xd8] sm:$0xf]
      %v392 = vld [vmem:[%s1 + $0xdc] sm:$0xf]
      %v393 = vld [vmem:[%s1 + $0xe0] sm:$0xf]
      %v394 = vld [vmem:[%s1 + $0xe4] sm:$0xf]
      %v395 = vld [vmem:[%s1 + $0xe8] sm:$0xf]
      %v396 = vld [vmem:[%s1 + $0xec] sm:$0xf]
      %v397 = vld [vmem:[%s1 + $0xf0] sm:$0xf]
      %v398 = vld [vmem:[%s1 + $0xf4] sm:$0xf]
      %v399 = vld [vmem:[%s1 + $0xf8] sm:$0xf]
      %v400 = vld [vmem:[%s1 + $0xfc] sm:$0xf]
      %v401 = vld [vmem:[%s1 + $0x100] sm:$0xf]
      %v402 = vld [vmem:[%s1 + $0x104] sm:$0xf]
      %v403 = vld [vmem:[%s1 + $0x108] sm:$0xf]
      %v404 = vld [vmem:[%s1 + $0x10c] sm:$0xf]
      %v405 = vld [vmem:[%s1 + $0x110] sm:$0xf]
      %v406 = vld [vmem:[%s1 + $0x114] sm:$0xf]
      %v407 = vld [vmem:[%s1 + $0x118] sm:$0xf]
      %v408 = vld [vmem:[%s1 + $0x11c] sm:$0xf]
      %v409 = vld [vmem:[%s1 + $0x120] sm:$0xf]
      %v410 = vld [vmem:[%s1 + $0x124] sm:$0xf]
      %v411 = vld [vmem:[%s1 + $0x128] sm:$0xf]
      %v412 = vld [vmem:[%s1 + $0x12c] sm:$0xf]
      %v413 = vld [vmem:[%s1 + $0x130] sm:$0xf]
      %v414 = vld [vmem:[%s1 + $0x134] sm:$0xf]
      %v415 = vld [vmem:[%s1 + $0x138] sm:$0xf]
      %v416 = vld [vmem:[%s1 + $0x13c] sm:$0xf]
      %v417 = vld [vmem:[%s1 + $0x140] sm:$0xf]
      %v418 = vld [vmem:[%s1 + $0x144] sm:$0xf]
      %v419 = vld [vmem:[%s1 + $0x148] sm:$0xf]
      %v420 = vld [vmem:[%s1 + $0x14c] sm:$0xf]
      %v421 = vld [vmem:[%s1 + $0x150] sm:$0xf]
      %v422 = vld [vmem:[%s1 + $0x154] sm:$0xf]
      %v423 = vld [vmem:[%s1 + $0x158] sm:$0xf]
      %v424 = vld [vmem:[%s1 + $0x15c] sm:$0xf]
      %v425 = vld [vmem:[%s1 + $0x160] sm:$0xf]
      %v426 = vld [vmem:[%s1 + $0x164] sm:$0xf]
      %v427 = vld [vmem:[%s1 + $0x168] sm:$0xf]
      %v428 = vld [vmem:[%s1 + $0x16c] sm:$0xf]
      %v429 = vld [vmem:[%s1 + $0x170] sm:$0xf]
      %v430 = vld [vmem:[%s1 + $0x174] sm:$0xf]
      %v431 = vld [vmem:[%s1 + $0x178] sm:$0xf]
      %v432 = vld [vmem:[%s1 + $0x17c] sm:$0xf]
      %v433 = vld [vmem:[%s1 + $0x180] sm:$0xf]
      %v434 = vld [vmem:[%s1 + $0x184] sm:$0xf]
      %v435 = vld [vmem:[%s1 + $0x188] sm:$0xf]
      %v436 = vld [vmem:[%s1 + $0x18c] sm:$0xf]
      %v437 = vld [vmem:[%s1 + $0x190] sm:$0xf]
      %v438 = vld [vmem:[%s1 + $0x194] sm:$0xf]
      %v439 = vld [vmem:[%s1 + $0x198] sm:$0xf]
      %v440 = vld [vmem:[%s1 + $0x19c] sm:$0xf]
      %v441 = vld [vmem:[%s1 + $0x1a0] sm:$0xf]
      %v442 = vld [vmem:[%s1 + $0x1a4] sm:$0xf]
      %v443 = vld [vmem:[%s1 + $0x1a8] sm:$0xf]
      %v444 = vld [vmem:[%s1 + $0x1ac] sm:$0xf]
      %v445 = vld [vmem:[%s1 + $0x1b0] sm:$0xf]
      %v446 = vld [vmem:[%s1 + $0x1b4] sm:$0xf]
      %v447 = vld [vmem:[%s1 + $0x1b8] sm:$0xf]
      %v448 = vld [vmem:[%s1 + $0x1bc] sm:$0xf]
      %v449 = vld [vmem:[%s1 + $0x1c0] sm:$0xf]
      %v450 = vld [vmem:[%s1 + $0x1c4] sm:$0xf]
      %v451 = vld [vmem:[%s1 + $0x1c8] sm:$0xf]
      %v452 = vld [vmem:[%s1 + $0x1cc] sm:$0xf]
      %v453 = vld [vmem:[%s1 + $0x1d0] sm:$0xf]
      %v454 = vld [vmem:[%s1 + $0x1d4] sm:$0xf]
      %v455 = vld [vmem:[%s1 + $0x1d8] sm:$0xf]
      %v456 = vld [vmem:[%s1 + $0x1dc] sm:$0xf]
      %v457 = vld [vmem:[%s1 + $0x1e0] sm:$0xf]
      %v458 = vld [vmem:[%s1 + $0x1e4] sm:$0xf]
      %v459 = vld [vmem:[%s1 + $0x1e8] sm:$0xf]
      %v460 = vld [vmem:[%s1 + $0x1ec] sm:$0xf]
      %v461 = vld [vmem:[%s1 + $0x1f0] sm:$0xf]
      %v462 = vld [vmem:[%s1 + $0x1f4] sm:$0xf]
      %v463 = vld [vmem:[%s1 + $0x1f8] sm:$0xf]
      %v464 = vld [vmem:[%s1 + $0x1fc] sm:$0xf]
      %v465 = vld [vmem:[%s1 + $0x200] sm:$0xf]
      %v466 = vld [vmem:[%s1 + $0x204] sm:$0xf]
      %v467 = vld [vmem:[%s1 + $0x208] sm:$0xf]
      %v468 = vld [vmem:[%s1 + $0x20c] sm:$0xf]
      %v469 = vld [vmem:[%s1 + $0x210] sm:$0xf]
      %v470 = vld [vmem:[%s1 + $0x214] sm:$0xf]
      %v471 = vld [vmem:[%s1 + $0x218] sm:$0xf]
      %v472 = vld [vmem:[%s1 + $0x21c] sm:$0xf]
      %v473 = vld [vmem:[%s1 + $0x220] sm:$0xf]
      %v474 = vld [vmem:[%s1 + $0x224] sm:$0xf]
      %v475 = vld [vmem:[%s1 + $0x228] sm:$0xf]
      %v476 = vld [vmem:[%s1 + $0x22c] sm:$0xf]
      %v477 = vld [vmem:[%s1 + $0x230] sm:$0xf]
      %v478 = vld [vmem:[%s1 + $0x234] sm:$0xf]
      %v479 = vld [vmem:[%s1 + $0x238] sm:$0xf]
      %v480 = vld [vmem:[%s1 + $0x23c] sm:$0xf]
      %v481 = vld [vmem:[%s2] sm:$0x1]
      %v483 = vperm.slane %v481, 0
      %v645 = vunpack.c.l.b16 %v177
      %v646 = vunpack.c.h.b16 %v177
      %v647 = vunpack.c.l.b16 %v178
      %v648 = vunpack.c.h.b16 %v178
      %v649 = vunpack.c.l.b16 %v179
      %v650 = vunpack.c.h.b16 %v179
      %v651 = vunpack.c.l.b16 %v180
      %v652 = vunpack.c.h.b16 %v180
      %v653 = vunpack.c.l.b16 %v181
      %v654 = vunpack.c.l.b16 %v182
      %v655 = vunpack.c.h.b16 %v182
      %v656 = vunpack.c.l.b16 %v183
      %v657 = vunpack.c.h.b16 %v183
      %v658 = vunpack.c.l.b16 %v184
      %v659 = vunpack.c.h.b16 %v184
      %v660 = vunpack.c.l.b16 %v185
      %v661 = vunpack.c.h.b16 %v185
      %v662 = vunpack.c.l.b16 %v186
      %v663 = vunpack.c.l.b16 %v187
      %v664 = vunpack.c.h.b16 %v187
      %v665 = vunpack.c.l.b16 %v188
      %v666 = vunpack.c.h.b16 %v188
      %v667 = vunpack.c.l.b16 %v189
      %v668 = vunpack.c.h.b16 %v189
      %v669 = vunpack.c.l.b16 %v190
      %v670 = vunpack.c.h.b16 %v190
      %v671 = vunpack.c.l.b16 %v191
      %v672 = vunpack.c.l.b16 %v192
      %v673 = vunpack.c.h.b16 %v192
      %v674 = vunpack.c.l.b16 %v193
      %v675 = vunpack.c.h.b16 %v193
      %v676 = vunpack.c.l.b16 %v194
      %v677 = vunpack.c.h.b16 %v194
      %v678 = vunpack.c.l.b16 %v195
      %v679 = vunpack.c.h.b16 %v195
      %v680 = vunpack.c.l.b16 %v196
      %v681 = vunpack.c.l.b16 %v197
      %v682 = vunpack.c.h.b16 %v197
      %v683 = vunpack.c.l.b16 %v198
      %v684 = vunpack.c.h.b16 %v198
      %v685 = vunpack.c.l.b16 %v199
      %v686 = vunpack.c.h.b16 %v199
      %v687 = vunpack.c.l.b16 %v200
      %v688 = vunpack.c.h.b16 %v200
      %v689 = vunpack.c.l.b16 %v201
      %v690 = vunpack.c.l.b16 %v202
      %v691 = vunpack.c.h.b16 %v202
      %v692 = vunpack.c.l.b16 %v203
      %v693 = vunpack.c.h.b16 %v203
      %v694 = vunpack.c.l.b16 %v204
      %v695 = vunpack.c.h.b16 %v204
      %v696 = vunpack.c.l.b16 %v205
      %v697 = vunpack.c.h.b16 %v205
      %v698 = vunpack.c.l.b16 %v206
      %v699 = vunpack.c.l.b16 %v207
      %v700 = vunpack.c.h.b16 %v207
      %v701 = vunpack.c.l.b16 %v208
      %v702 = vunpack.c.h.b16 %v208
      %v703 = vunpack.c.l.b16 %v209
      %v704 = vunpack.c.h.b16 %v209
      %v705 = vunpack.c.l.b16 %v210
      %v706 = vunpack.c.h.b16 %v210
      %v707 = vunpack.c.l.b16 %v211
      %v708 = vunpack.c.l.b16 %v212
      %v709 = vunpack.c.h.b16 %v212
      %v710 = vunpack.c.l.b16 %v213
      %v711 = vunpack.c.h.b16 %v213
      %v712 = vunpack.c.l.b16 %v214
      %v713 = vunpack.c.h.b16 %v214
      %v714 = vunpack.c.l.b16 %v215
      %v715 = vunpack.c.h.b16 %v215
      %v716 = vunpack.c.l.b16 %v216
      %v717 = vunpack.c.l.b16 %v217
      %v718 = vunpack.c.h.b16 %v217
      %v719 = vunpack.c.l.b16 %v218
      %v720 = vunpack.c.h.b16 %v218
      %v721 = vunpack.c.l.b16 %v219
      %v722 = vunpack.c.h.b16 %v219
      %v723 = vunpack.c.l.b16 %v220
      %v724 = vunpack.c.h.b16 %v220
      %v725 = vunpack.c.l.b16 %v221
      %v726 = vunpack.c.l.b16 %v222
      %v727 = vunpack.c.h.b16 %v222
      %v728 = vunpack.c.l.b16 %v223
      %v729 = vunpack.c.h.b16 %v223
      %v730 = vunpack.c.l.b16 %v224
      %v731 = vunpack.c.h.b16 %v224
      %v732 = vunpack.c.l.b16 %v225
      %v733 = vunpack.c.h.b16 %v225
      %v734 = vunpack.c.l.b16 %v226
      %v735 = vunpack.c.l.b16 %v227
      %v736 = vunpack.c.h.b16 %v227
      %v737 = vunpack.c.l.b16 %v228
      %v738 = vunpack.c.h.b16 %v228
      %v739 = vunpack.c.l.b16 %v229
      %v740 = vunpack.c.h.b16 %v229
      %v741 = vunpack.c.l.b16 %v230
      %v742 = vunpack.c.h.b16 %v230
      %v743 = vunpack.c.l.b16 %v231
      %v744 = vunpack.c.l.b16 %v232
      %v745 = vunpack.c.h.b16 %v232
      %v746 = vunpack.c.l.b16 %v233
      %v747 = vunpack.c.h.b16 %v233
      %v748 = vunpack.c.l.b16 %v234
      %v749 = vunpack.c.h.b16 %v234
      %v750 = vunpack.c.l.b16 %v235
      %v751 = vunpack.c.h.b16 %v235
      %v752 = vunpack.c.l.b16 %v236
      %v753 = vunpack.c.l.b16 %v237
      %v754 = vunpack.c.h.b16 %v237
      %v755 = vunpack.c.l.b16 %v238
      %v756 = vunpack.c.h.b16 %v238
      %v757 = vunpack.c.l.b16 %v239
      %v758 = vunpack.c.h.b16 %v239
      %v759 = vunpack.c.l.b16 %v240
      %v760 = vunpack.c.h.b16 %v240
      %v761 = vunpack.c.l.b16 %v241
      %v762 = vunpack.c.l.b16 %v242
      %v763 = vunpack.c.h.b16 %v242
      %v764 = vunpack.c.l.b16 %v243
      %v765 = vunpack.c.h.b16 %v243
      %v766 = vunpack.c.l.b16 %v244
      %v767 = vunpack.c.h.b16 %v244
      %v768 = vunpack.c.l.b16 %v245
      %v769 = vunpack.c.h.b16 %v245
      %v770 = vunpack.c.l.b16 %v246
      %v771 = vunpack.c.l.b16 %v247
      %v772 = vunpack.c.h.b16 %v247
      %v773 = vunpack.c.l.b16 %v248
      %v774 = vunpack.c.h.b16 %v248
      %v775 = vunpack.c.l.b16 %v249
      %v776 = vunpack.c.h.b16 %v249
      %v777 = vunpack.c.l.b16 %v250
      %v778 = vunpack.c.h.b16 %v250
      %v779 = vunpack.c.l.b16 %v251
      %v780 = vunpack.c.l.b16 %v252
      %v781 = vunpack.c.h.b16 %v252
      %v782 = vunpack.c.l.b16 %v253
      %v783 = vunpack.c.h.b16 %v253
      %v784 = vunpack.c.l.b16 %v254
      %v785 = vunpack.c.h.b16 %v254
      %v786 = vunpack.c.l.b16 %v255
      %v787 = vunpack.c.h.b16 %v255
      %v788 = vunpack.c.l.b16 %v256
      %v789 = vunpack.c.l.b16 %v257
      %v790 = vunpack.c.h.b16 %v257
      %v791 = vunpack.c.l.b16 %v258
      %v792 = vunpack.c.h.b16 %v258
      %v793 = vunpack.c.l.b16 %v259
      %v794 = vunpack.c.h.b16 %v259
      %v795 = vunpack.c.l.b16 %v260
      %v796 = vunpack.c.h.b16 %v260
      %v797 = vunpack.c.l.b16 %v261
      %v798 = vunpack.c.l.b16 %v262
      %v799 = vunpack.c.h.b16 %v262
      %v800 = vunpack.c.l.b16 %v263
      %v801 = vunpack.c.h.b16 %v263
      %v802 = vunpack.c.l.b16 %v264
      %v803 = vunpack.c.h.b16 %v264
      %v804 = vunpack.c.l.b16 %v265
      %v805 = vunpack.c.h.b16 %v265
      %v806 = vunpack.c.l.b16 %v266
      %v807 = vunpack.c.l.b16 %v267
      %v808 = vunpack.c.h.b16 %v267
      %v809 = vunpack.c.l.b16 %v268
      %v810 = vunpack.c.h.b16 %v268
      %v811 = vunpack.c.l.b16 %v269
      %v812 = vunpack.c.h.b16 %v269
      %v813 = vunpack.c.l.b16 %v270
      %v814 = vunpack.c.h.b16 %v270
      %v815 = vunpack.c.l.b16 %v271
      %v816 = vunpack.c.l.b16 %v272
      %v817 = vunpack.c.h.b16 %v272
      %v818 = vunpack.c.l.b16 %v273
      %v819 = vunpack.c.h.b16 %v273
      %v820 = vunpack.c.l.b16 %v274
      %v821 = vunpack.c.h.b16 %v274
      %v822 = vunpack.c.l.b16 %v275
      %v823 = vunpack.c.h.b16 %v275
      %v824 = vunpack.c.l.b16 %v276
      %v825 = vunpack.c.l.b16 %v277
      %v826 = vunpack.c.h.b16 %v277
      %v827 = vunpack.c.l.b16 %v278
      %v828 = vunpack.c.h.b16 %v278
      %v829 = vunpack.c.l.b16 %v279
      %v830 = vunpack.c.h.b16 %v279
      %v831 = vunpack.c.l.b16 %v280
      %v832 = vunpack.c.h.b16 %v280
      %v833 = vunpack.c.l.b16 %v281
      %v834 = vunpack.c.l.b16 %v282
      %v835 = vunpack.c.h.b16 %v282
      %v836 = vunpack.c.l.b16 %v283
      %v837 = vunpack.c.h.b16 %v283
      %v838 = vunpack.c.l.b16 %v284
      %v839 = vunpack.c.h.b16 %v284
      %v840 = vunpack.c.l.b16 %v285
      %v841 = vunpack.c.h.b16 %v285
      %v842 = vunpack.c.l.b16 %v286
      %v843 = vunpack.c.l.b16 %v287
      %v844 = vunpack.c.h.b16 %v287
      %v845 = vunpack.c.l.b16 %v288
      %v846 = vunpack.c.h.b16 %v288
      %v847 = vunpack.c.l.b16 %v289
      %v848 = vunpack.c.h.b16 %v289
      %v849 = vunpack.c.l.b16 %v290
      %v850 = vunpack.c.h.b16 %v290
      %v851 = vunpack.c.l.b16 %v291
      %v852 = vunpack.c.l.b16 %v292
      %v853 = vunpack.c.h.b16 %v292
      %v854 = vunpack.c.l.b16 %v293
      %v855 = vunpack.c.h.b16 %v293
      %v856 = vunpack.c.l.b16 %v294
      %v857 = vunpack.c.h.b16 %v294
      %v858 = vunpack.c.l.b16 %v295
      %v859 = vunpack.c.h.b16 %v295
      %v860 = vunpack.c.l.b16 %v296
      %v861 = vunpack.c.l.b16 %v297
      %v862 = vunpack.c.h.b16 %v297
      %v863 = vunpack.c.l.b16 %v298
      %v864 = vunpack.c.h.b16 %v298
      %v865 = vunpack.c.l.b16 %v299
      %v866 = vunpack.c.h.b16 %v299
      %v867 = vunpack.c.l.b16 %v300
      %v868 = vunpack.c.h.b16 %v300
      %v869 = vunpack.c.l.b16 %v301
      %v870 = vunpack.c.l.b16 %v302
      %v871 = vunpack.c.h.b16 %v302
      %v872 = vunpack.c.l.b16 %v303
      %v873 = vunpack.c.h.b16 %v303
      %v874 = vunpack.c.l.b16 %v304
      %v875 = vunpack.c.h.b16 %v304
      %v876 = vunpack.c.l.b16 %v305
      %v877 = vunpack.c.h.b16 %v305
      %v878 = vunpack.c.l.b16 %v306
      %v879 = vunpack.c.l.b16 %v307
      %v880 = vunpack.c.h.b16 %v307
      %v881 = vunpack.c.l.b16 %v308
      %v882 = vunpack.c.h.b16 %v308
      %v883 = vunpack.c.l.b16 %v309
      %v884 = vunpack.c.h.b16 %v309
      %v885 = vunpack.c.l.b16 %v310
      %v886 = vunpack.c.h.b16 %v310
      %v887 = vunpack.c.l.b16 %v311
      %v888 = vunpack.c.l.b16 %v312
      %v889 = vunpack.c.h.b16 %v312
      %v890 = vunpack.c.l.b16 %v313
      %v891 = vunpack.c.h.b16 %v313
      %v892 = vunpack.c.l.b16 %v314
      %v893 = vunpack.c.h.b16 %v314
      %v894 = vunpack.c.l.b16 %v315
      %v895 = vunpack.c.h.b16 %v315
      %v896 = vunpack.c.l.b16 %v316
      %v897 = vunpack.c.l.b16 %v317
      %v898 = vunpack.c.h.b16 %v317
      %v899 = vunpack.c.l.b16 %v318
      %v900 = vunpack.c.h.b16 %v318
      %v901 = vunpack.c.l.b16 %v319
      %v902 = vunpack.c.h.b16 %v319
      %v903 = vunpack.c.l.b16 %v320
      %v904 = vunpack.c.h.b16 %v320
      %v905 = vunpack.c.l.b16 %v321
      %v906 = vunpack.c.l.b16 %v322
      %v907 = vunpack.c.h.b16 %v322
      %v908 = vunpack.c.l.b16 %v323
      %v909 = vunpack.c.h.b16 %v323
      %v910 = vunpack.c.l.b16 %v324
      %v911 = vunpack.c.h.b16 %v324
      %v912 = vunpack.c.l.b16 %v325
      %v913 = vunpack.c.h.b16 %v325
      %v914 = vunpack.c.l.b16 %v326
      %v915 = vunpack.c.l.b16 %v327
      %v916 = vunpack.c.h.b16 %v327
      %v917 = vunpack.c.l.b16 %v328
      %v918 = vunpack.c.h.b16 %v328
      %v919 = vunpack.c.l.b16 %v329
      %v920 = vunpack.c.h.b16 %v329
      %v921 = vunpack.c.l.b16 %v330
      %v922 = vunpack.c.h.b16 %v330
      %v923 = vunpack.c.l.b16 %v331
      %v924 = vunpack.c.l.b16 %v332
      %v925 = vunpack.c.h.b16 %v332
      %v926 = vunpack.c.l.b16 %v333
      %v927 = vunpack.c.h.b16 %v333
      %v928 = vunpack.c.l.b16 %v334
      %v929 = vunpack.c.h.b16 %v334
      %v930 = vunpack.c.l.b16 %v335
      %v931 = vunpack.c.h.b16 %v335
      %v932 = vunpack.c.l.b16 %v336
      %v933 = vpack.c.b16 %v654, %v645
      %v934 = vpack.c.b16 %v655, %v646
      %v935 = vpack.c.b16 %v656, %v647
      %v936 = vpack.c.b16 %v657, %v648
      %v937 = vpack.c.b16 %v658, %v649
      %v938 = vpack.c.b16 %v659, %v650
      %v939 = vpack.c.b16 %v660, %v651
      %v940 = vpack.c.b16 %v661, %v652
      %v941 = vpack.c.b16 %v662, %v653
      %v942 = vpack.c.b16 %v672, %v663
      %v943 = vpack.c.b16 %v673, %v664
      %v944 = vpack.c.b16 %v674, %v665
      %v945 = vpack.c.b16 %v675, %v666
      %v946 = vpack.c.b16 %v676, %v667
      %v947 = vpack.c.b16 %v677, %v668
      %v948 = vpack.c.b16 %v678, %v669
      %v949 = vpack.c.b16 %v679, %v670
      %v950 = vpack.c.b16 %v680, %v671
      %v951 = vpack.c.b16 %v690, %v681
      %v952 = vpack.c.b16 %v691, %v682
      %v953 = vpack.c.b16 %v692, %v683
      %v954 = vpack.c.b16 %v693, %v684
      %v955 = vpack.c.b16 %v694, %v685
      %v956 = vpack.c.b16 %v695, %v686
      %v957 = vpack.c.b16 %v696, %v687
      %v958 = vpack.c.b16 %v697, %v688
      %v959 = vpack.c.b16 %v698, %v689
      %v960 = vpack.c.b16 %v708, %v699
      %v961 = vpack.c.b16 %v709, %v700
      %v962 = vpack.c.b16 %v710, %v701
      %v963 = vpack.c.b16 %v711, %v702
      %v964 = vpack.c.b16 %v712, %v703
      %v965 = vpack.c.b16 %v713, %v704
      %v966 = vpack.c.b16 %v714, %v705
      %v967 = vpack.c.b16 %v715, %v706
      %v968 = vpack.c.b16 %v716, %v707
      %v969 = vpack.c.b16 %v726, %v717
      %v970 = vpack.c.b16 %v727, %v718
      %v971 = vpack.c.b16 %v728, %v719
      %v972 = vpack.c.b16 %v729, %v720
      %v973 = vpack.c.b16 %v730, %v721
      %v974 = vpack.c.b16 %v731, %v722
      %v975 = vpack.c.b16 %v732, %v723
      %v976 = vpack.c.b16 %v733, %v724
      %v977 = vpack.c.b16 %v734, %v725
      %v978 = vpack.c.b16 %v744, %v735
      %v979 = vpack.c.b16 %v745, %v736
      %v980 = vpack.c.b16 %v746, %v737
      %v981 = vpack.c.b16 %v747, %v738
      %v982 = vpack.c.b16 %v748, %v739
      %v983 = vpack.c.b16 %v749, %v740
      %v984 = vpack.c.b16 %v750, %v741
      %v985 = vpack.c.b16 %v751, %v742
      %v986 = vpack.c.b16 %v752, %v743
      %v987 = vpack.c.b16 %v762, %v753
      %v988 = vpack.c.b16 %v763, %v754
      %v989 = vpack.c.b16 %v764, %v755
      %v990 = vpack.c.b16 %v765, %v756
      %v991 = vpack.c.b16 %v766, %v757
      %v992 = vpack.c.b16 %v767, %v758
      %v993 = vpack.c.b16 %v768, %v759
      %v994 = vpack.c.b16 %v769, %v760
      %v995 = vpack.c.b16 %v770, %v761
      %v996 = vpack.c.b16 %v780, %v771
      %v997 = vpack.c.b16 %v781, %v772
      %v998 = vpack.c.b16 %v782, %v773
      %v999 = vpack.c.b16 %v783, %v774
      %v1000 = vpack.c.b16 %v784, %v775
      %v1001 = vpack.c.b16 %v785, %v776
      %v1002 = vpack.c.b16 %v786, %v777
      %v1003 = vpack.c.b16 %v787, %v778
      %v1004 = vpack.c.b16 %v788, %v779
      %v1005 = vpack.c.b16 %v798, %v789
      %v1006 = vpack.c.b16 %v799, %v790
      %v1007 = vpack.c.b16 %v800, %v791
      %v1008 = vpack.c.b16 %v801, %v792
      %v1009 = vpack.c.b16 %v802, %v793
      %v1010 = vpack.c.b16 %v803, %v794
      %v1011 = vpack.c.b16 %v804, %v795
      %v1012 = vpack.c.b16 %v805, %v796
      %v1013 = vpack.c.b16 %v806, %v797
      %v1014 = vpack.c.b16 %v816, %v807
      %v1015 = vpack.c.b16 %v817, %v808
      %v1016 = vpack.c.b16 %v818, %v809
      %v1017 = vpack.c.b16 %v819, %v810
      %v1018 = vpack.c.b16 %v820, %v811
      %v1019 = vpack.c.b16 %v821, %v812
      %v1020 = vpack.c.b16 %v822, %v813
      %v1021 = vpack.c.b16 %v823, %v814
      %v1022 = vpack.c.b16 %v824, %v815
      %v1023 = vpack.c.b16 %v834, %v825
      %v1024 = vpack.c.b16 %v835, %v826
      %v1025 = vpack.c.b16 %v836, %v827
      %v1026 = vpack.c.b16 %v837, %v828
      %v1027 = vpack.c.b16 %v838, %v829
      %v1028 = vpack.c.b16 %v839, %v830
      %v1029 = vpack.c.b16 %v840, %v831
      %v1030 = vpack.c.b16 %v841, %v832
      %v1031 = vpack.c.b16 %v842, %v833
      %v1032 = vpack.c.b16 %v852, %v843
      %v1033 = vpack.c.b16 %v853, %v844
      %v1034 = vpack.c.b16 %v854, %v845
      %v1035 = vpack.c.b16 %v855, %v846
      %v1036 = vpack.c.b16 %v856, %v847
      %v1037 = vpack.c.b16 %v857, %v848
      %v1038 = vpack.c.b16 %v858, %v849
      %v1039 = vpack.c.b16 %v859, %v850
      %v1040 = vpack.c.b16 %v860, %v851
      %v1041 = vpack.c.b16 %v870, %v861
      %v1042 = vpack.c.b16 %v871, %v862
      %v1043 = vpack.c.b16 %v872, %v863
      %v1044 = vpack.c.b16 %v873, %v864
      %v1045 = vpack.c.b16 %v874, %v865
      %v1046 = vpack.c.b16 %v875, %v866
      %v1047 = vpack.c.b16 %v876, %v867
      %v1048 = vpack.c.b16 %v877, %v868
      %v1049 = vpack.c.b16 %v878, %v869
      %v1050 = vpack.c.b16 %v888, %v879
      %v1051 = vpack.c.b16 %v889, %v880
      %v1052 = vpack.c.b16 %v890, %v881
      %v1053 = vpack.c.b16 %v891, %v882
      %v1054 = vpack.c.b16 %v892, %v883
      %v1055 = vpack.c.b16 %v893, %v884
      %v1056 = vpack.c.b16 %v894, %v885
      %v1057 = vpack.c.b16 %v895, %v886
      %v1058 = vpack.c.b16 %v896, %v887
      %v1059 = vpack.c.b16 %v906, %v897
      %v1060 = vpack.c.b16 %v907, %v898
      %v1061 = vpack.c.b16 %v908, %v899
      %v1062 = vpack.c.b16 %v909, %v900
      %v1063 = vpack.c.b16 %v910, %v901
      %v1064 = vpack.c.b16 %v911, %v902
      %v1065 = vpack.c.b16 %v912, %v903
      %v1066 = vpack.c.b16 %v913, %v904
      %v1067 = vpack.c.b16 %v914, %v905
      %v1068 = vpack.c.b16 %v924, %v915
      %v1069 = vpack.c.b16 %v925, %v916
      %v1070 = vpack.c.b16 %v926, %v917
      %v1071 = vpack.c.b16 %v927, %v918
      %v1072 = vpack.c.b16 %v928, %v919
      %v1073 = vpack.c.b16 %v929, %v920
      %v1074 = vpack.c.b16 %v930, %v921
      %v1075 = vpack.c.b16 %v931, %v922
      %v1076 = vpack.c.b16 %v932, %v923
      %v1365 = vunpack.c.l.b16 %v337
      %v1366 = vunpack.c.l.b16 %v338
      %v1367 = vunpack.c.l.b16 %v339
      %v1368 = vunpack.c.l.b16 %v340
      %v1369 = vunpack.c.l.b16 %v341
      %v1370 = vunpack.c.l.b16 %v342
      %v1371 = vunpack.c.l.b16 %v343
      %v1372 = vunpack.c.l.b16 %v344
      %v1373 = vunpack.c.l.b16 %v345
      %v1374 = vunpack.c.l.b16 %v346
      %v1375 = vunpack.c.l.b16 %v347
      %v1376 = vunpack.c.l.b16 %v348
      %v1377 = vunpack.c.l.b16 %v349
      %v1378 = vunpack.c.l.b16 %v350
      %v1379 = vunpack.c.l.b16 %v351
      %v1380 = vunpack.c.l.b16 %v352
      %v1381 = vunpack.c.l.b16 %v353
      %v1382 = vunpack.c.l.b16 %v354
      %v1383 = vunpack.c.l.b16 %v355
      %v1384 = vunpack.c.l.b16 %v356
      %v1385 = vunpack.c.l.b16 %v357
      %v1386 = vunpack.c.l.b16 %v358
      %v1387 = vunpack.c.l.b16 %v359
      %v1388 = vunpack.c.l.b16 %v360
      %v1389 = vunpack.c.l.b16 %v361
      %v1390 = vunpack.c.l.b16 %v362
      %v1391 = vunpack.c.l.b16 %v363
      %v1392 = vunpack.c.l.b16 %v364
      %v1393 = vunpack.c.l.b16 %v365
      %v1394 = vunpack.c.l.b16 %v366
      %v1395 = vunpack.c.l.b16 %v367
      %v1396 = vunpack.c.l.b16 %v368
      %v1397 = vunpack.c.l.b16 %v369
      %v1398 = vunpack.c.l.b16 %v370
      %v1399 = vunpack.c.l.b16 %v371
      %v1400 = vunpack.c.l.b16 %v372
      %v1401 = vunpack.c.l.b16 %v373
      %v1402 = vunpack.c.l.b16 %v374
      %v1403 = vunpack.c.l.b16 %v375
      %v1404 = vunpack.c.l.b16 %v376
      %v1405 = vunpack.c.l.b16 %v377
      %v1406 = vunpack.c.l.b16 %v378
      %v1407 = vunpack.c.l.b16 %v379
      %v1408 = vunpack.c.l.b16 %v380
      %v1409 = vunpack.c.l.b16 %v381
      %v1410 = vunpack.c.l.b16 %v382
      %v1411 = vunpack.c.l.b16 %v383
      %v1412 = vunpack.c.l.b16 %v384
      %v1413 = vunpack.c.l.b16 %v385
      %v1414 = vunpack.c.l.b16 %v386
      %v1415 = vunpack.c.l.b16 %v387
      %v1416 = vunpack.c.l.b16 %v388
      %v1417 = vunpack.c.l.b16 %v389
      %v1418 = vunpack.c.l.b16 %v390
      %v1419 = vunpack.c.l.b16 %v391
      %v1420 = vunpack.c.l.b16 %v392
      %v1421 = vunpack.c.l.b16 %v393
      %v1422 = vunpack.c.l.b16 %v394
      %v1423 = vunpack.c.l.b16 %v395
      %v1424 = vunpack.c.l.b16 %v396
      %v1425 = vunpack.c.l.b16 %v397
      %v1426 = vunpack.c.l.b16 %v398
      %v1427 = vunpack.c.l.b16 %v399
      %v1428 = vunpack.c.l.b16 %v400
      %v1429 = vunpack.c.l.b16 %v401
      %v1430 = vunpack.c.l.b16 %v402
      %v1431 = vunpack.c.l.b16 %v403
      %v1432 = vunpack.c.l.b16 %v404
      %v1433 = vunpack.c.l.b16 %v405
      %v1434 = vunpack.c.l.b16 %v406
      %v1435 = vunpack.c.l.b16 %v407
      %v1436 = vunpack.c.l.b16 %v408
      %v1437 = vunpack.c.l.b16 %v409
      %v1438 = vunpack.c.l.b16 %v410
      %v1439 = vunpack.c.l.b16 %v411
      %v1440 = vunpack.c.l.b16 %v412
      %v1441 = vunpack.c.l.b16 %v413
      %v1442 = vunpack.c.l.b16 %v414
      %v1443 = vunpack.c.l.b16 %v415
      %v1444 = vunpack.c.l.b16 %v416
      %v1445 = vunpack.c.l.b16 %v417
      %v1446 = vunpack.c.l.b16 %v418
      %v1447 = vunpack.c.l.b16 %v419
      %v1448 = vunpack.c.l.b16 %v420
      %v1449 = vunpack.c.l.b16 %v421
      %v1450 = vunpack.c.l.b16 %v422
      %v1451 = vunpack.c.l.b16 %v423
      %v1452 = vunpack.c.l.b16 %v424
      %v1453 = vunpack.c.l.b16 %v425
      %v1454 = vunpack.c.l.b16 %v426
      %v1455 = vunpack.c.l.b16 %v427
      %v1456 = vunpack.c.l.b16 %v428
      %v1457 = vunpack.c.l.b16 %v429
      %v1458 = vunpack.c.l.b16 %v430
      %v1459 = vunpack.c.l.b16 %v431
      %v1460 = vunpack.c.l.b16 %v432
      %v1461 = vunpack.c.l.b16 %v433
      %v1462 = vunpack.c.l.b16 %v434
      %v1463 = vunpack.c.l.b16 %v435
      %v1464 = vunpack.c.l.b16 %v436
      %v1465 = vunpack.c.l.b16 %v437
      %v1466 = vunpack.c.l.b16 %v438
      %v1467 = vunpack.c.l.b16 %v439
      %v1468 = vunpack.c.l.b16 %v440
      %v1469 = vunpack.c.l.b16 %v441
      %v1470 = vunpack.c.l.b16 %v442
      %v1471 = vunpack.c.l.b16 %v443
      %v1472 = vunpack.c.l.b16 %v444
      %v1473 = vunpack.c.l.b16 %v445
      %v1474 = vunpack.c.l.b16 %v446
      %v1475 = vunpack.c.l.b16 %v447
      %v1476 = vunpack.c.l.b16 %v448
      %v1477 = vunpack.c.l.b16 %v449
      %v1478 = vunpack.c.l.b16 %v450
      %v1479 = vunpack.c.l.b16 %v451
      %v1480 = vunpack.c.l.b16 %v452
      %v1481 = vunpack.c.l.b16 %v453
      %v1482 = vunpack.c.l.b16 %v454
      %v1483 = vunpack.c.l.b16 %v455
      %v1484 = vunpack.c.l.b16 %v456
      %v1485 = vunpack.c.l.b16 %v457
      %v1486 = vunpack.c.l.b16 %v458
      %v1487 = vunpack.c.l.b16 %v459
      %v1488 = vunpack.c.l.b16 %v460
      %v1489 = vunpack.c.l.b16 %v461
      %v1490 = vunpack.c.l.b16 %v462
      %v1491 = vunpack.c.l.b16 %v463
      %v1492 = vunpack.c.l.b16 %v464
      %v1493 = vunpack.c.l.b16 %v465
      %v1494 = vunpack.c.l.b16 %v466
      %v1495 = vunpack.c.l.b16 %v467
      %v1496 = vunpack.c.l.b16 %v468
      %v1497 = vunpack.c.l.b16 %v469
      %v1498 = vunpack.c.l.b16 %v470
      %v1499 = vunpack.c.l.b16 %v471
      %v1500 = vunpack.c.l.b16 %v472
      %v1501 = vunpack.c.l.b16 %v473
      %v1502 = vunpack.c.l.b16 %v474
      %v1503 = vunpack.c.l.b16 %v475
      %v1504 = vunpack.c.l.b16 %v476
      %v1505 = vunpack.c.l.b16 %v477
      %v1506 = vunpack.c.l.b16 %v478
      %v1507 = vunpack.c.l.b16 %v479
      %v1508 = vunpack.c.l.b16 %v480
      %v1509 = vpack.c.b16 %v1366, %v1365
      %v1510 = vpack.c.b16 %v1368, %v1367
      %v1511 = vpack.c.b16 %v1370, %v1369
      %v1512 = vpack.c.b16 %v1372, %v1371
      %v1513 = vpack.c.b16 %v1374, %v1373
      %v1514 = vpack.c.b16 %v1376, %v1375
      %v1515 = vpack.c.b16 %v1378, %v1377
      %v1516 = vpack.c.b16 %v1380, %v1379
      %v1517 = vpack.c.b16 %v1382, %v1381
      %v1518 = vpack.c.b16 %v1384, %v1383
      %v1519 = vpack.c.b16 %v1386, %v1385
      %v1520 = vpack.c.b16 %v1388, %v1387
      %v1521 = vpack.c.b16 %v1390, %v1389
      %v1522 = vpack.c.b16 %v1392, %v1391
      %v1523 = vpack.c.b16 %v1394, %v1393
      %v1524 = vpack.c.b16 %v1396, %v1395
      %v1525 = vpack.c.b16 %v1398, %v1397
      %v1526 = vpack.c.b16 %v1400, %v1399
      %v1527 = vpack.c.b16 %v1402, %v1401
      %v1528 = vpack.c.b16 %v1404, %v1403
      %v1529 = vpack.c.b16 %v1406, %v1405
      %v1530 = vpack.c.b16 %v1408, %v1407
      %v1531 = vpack.c.b16 %v1410, %v1409
      %v1532 = vpack.c.b16 %v1412, %v1411
      %v1533 = vpack.c.b16 %v1414, %v1413
      %v1534 = vpack.c.b16 %v1416, %v1415
      %v1535 = vpack.c.b16 %v1418, %v1417
      %v1536 = vpack.c.b16 %v1420, %v1419
      %v1537 = vpack.c.b16 %v1422, %v1421
      %v1538 = vpack.c.b16 %v1424, %v1423
      %v1539 = vpack.c.b16 %v1426, %v1425
      %v1540 = vpack.c.b16 %v1428, %v1427
      %v1541 = vpack.c.b16 %v1430, %v1429
      %v1542 = vpack.c.b16 %v1432, %v1431
      %v1543 = vpack.c.b16 %v1434, %v1433
      %v1544 = vpack.c.b16 %v1436, %v1435
      %v1545 = vpack.c.b16 %v1438, %v1437
      %v1546 = vpack.c.b16 %v1440, %v1439
      %v1547 = vpack.c.b16 %v1442, %v1441
      %v1548 = vpack.c.b16 %v1444, %v1443
      %v1549 = vpack.c.b16 %v1446, %v1445
      %v1550 = vpack.c.b16 %v1448, %v1447
      %v1551 = vpack.c.b16 %v1450, %v1449
      %v1552 = vpack.c.b16 %v1452, %v1451
      %v1553 = vpack.c.b16 %v1454, %v1453
      %v1554 = vpack.c.b16 %v1456, %v1455
      %v1555 = vpack.c.b16 %v1458, %v1457
      %v1556 = vpack.c.b16 %v1460, %v1459
      %v1557 = vpack.c.b16 %v1462, %v1461
      %v1558 = vpack.c.b16 %v1464, %v1463
      %v1559 = vpack.c.b16 %v1466, %v1465
      %v1560 = vpack.c.b16 %v1468, %v1467
      %v1561 = vpack.c.b16 %v1470, %v1469
      %v1562 = vpack.c.b16 %v1472, %v1471
      %v1563 = vpack.c.b16 %v1474, %v1473
      %v1564 = vpack.c.b16 %v1476, %v1475
      %v1565 = vpack.c.b16 %v1478, %v1477
      %v1566 = vpack.c.b16 %v1480, %v1479
      %v1567 = vpack.c.b16 %v1482, %v1481
      %v1568 = vpack.c.b16 %v1484, %v1483
      %v1569 = vpack.c.b16 %v1486, %v1485
      %v1570 = vpack.c.b16 %v1488, %v1487
      %v1571 = vpack.c.b16 %v1490, %v1489
      %v1572 = vpack.c.b16 %v1492, %v1491
      %v1573 = vpack.c.b16 %v1494, %v1493
      %v1574 = vpack.c.b16 %v1496, %v1495
      %v1575 = vpack.c.b16 %v1498, %v1497
      %v1576 = vpack.c.b16 %v1500, %v1499
      %v1577 = vpack.c.b16 %v1502, %v1501
      %v1578 = vpack.c.b16 %v1504, %v1503
      %v1579 = vpack.c.b16 %v1506, %v1505
      %v1580 = vpack.c.b16 %v1508, %v1507
      %1653 = vmatpush.bf16.msra.mxu0 %v1516
      %1654 = vmatpush.bf16.msra.mxu0 %v1515
      %1655 = vmatpush.bf16.msra.mxu0 %v1514
      %1656 = vmatpush.bf16.msra.mxu0 %v1513
      %1657 = vmatpush.bf16.msra.mxu0 %v1512
      %1658 = vmatpush.bf16.msra.mxu0 %v1511
      %1659 = vmatpush.bf16.msra.mxu0 %v1510
      %1660 = vmatpush.bf16.msra.mxu0 %v1509
      %1661 = vmatmul.bf16.gmra.mxu0 %v933
      %v1662 = vpop.f32.mrf.mxu0
      %v1663 = vadd.f32 %v483, %v1662
      %v1664 = vpop.f32.mrf.mxu0
      %v1665 = vadd.f32 %v483, %v1664
      %1666 = vmatmul.bf16.gmra.mxu0 %v942
      %v1667 = vpop.f32.mrf.mxu0
      %v1668 = vadd.f32 %v483, %v1667
      %v1669 = vpop.f32.mrf.mxu0
      %v1670 = vadd.f32 %v483, %v1669
      %1671 = vmatmul.bf16.gmra.mxu0 %v951
      %v1672 = vpop.f32.mrf.mxu0
      %v1673 = vadd.f32 %v483, %v1672
      %v1674 = vpop.f32.mrf.mxu0
      %v1675 = vadd.f32 %v483, %v1674
      %1676 = vmatmul.bf16.gmra.mxu0 %v960
      %v1677 = vpop.f32.mrf.mxu0
      %v1678 = vadd.f32 %v483, %v1677
      %v1679 = vpop.f32.mrf.mxu0
      %v1680 = vadd.f32 %v483, %v1679
      %1681 = vmatmul.bf16.gmra.mxu0 %v969
      %v1682 = vpop.f32.mrf.mxu0
      %v1683 = vadd.f32 %v483, %v1682
      %v1684 = vpop.f32.mrf.mxu0
      %v1685 = vadd.f32 %v483, %v1684
      %1686 = vmatmul.bf16.gmra.mxu0 %v978
      %v1687 = vpop.f32.mrf.mxu0
      %v1688 = vadd.f32 %v483, %v1687
      %v1689 = vpop.f32.mrf.mxu0
      %v1690 = vadd.f32 %v483, %v1689
      %1691 = vmatmul.bf16.gmra.mxu0 %v987
      %v1692 = vpop.f32.mrf.mxu0
      %v1693 = vadd.f32 %v483, %v1692
      %v1694 = vpop.f32.mrf.mxu0
      %v1695 = vadd.f32 %v483, %v1694
      %1696 = vmatmul.bf16.gmra.mxu0 %v996
      %v1697 = vpop.f32.mrf.mxu0
      %v1698 = vadd.f32 %v483, %v1697
      %v1699 = vpop.f32.mrf.mxu0
      %v1700 = vadd.f32 %v483, %v1699
      %1701 = vmatmul.bf16.gmra.mxu0 %v1005
      %v1702 = vpop.f32.mrf.mxu0
      %v1703 = vadd.f32 %v483, %v1702
      %v1704 = vpop.f32.mrf.mxu0
      %v1705 = vadd.f32 %v483, %v1704
      %1706 = vmatmul.bf16.gmra.mxu0 %v1014
      %v1707 = vpop.f32.mrf.mxu0
      %v1708 = vadd.f32 %v483, %v1707
      %v1709 = vpop.f32.mrf.mxu0
      %v1710 = vadd.f32 %v483, %v1709
      %1711 = vmatmul.bf16.gmra.mxu0 %v1023
      %v1712 = vpop.f32.mrf.mxu0
      %v1713 = vadd.f32 %v483, %v1712
      %v1714 = vpop.f32.mrf.mxu0
      %v1715 = vadd.f32 %v483, %v1714
      %1716 = vmatmul.bf16.gmra.mxu0 %v1032
      %v1717 = vpop.f32.mrf.mxu0
      %v1718 = vadd.f32 %v483, %v1717
      %v1719 = vpop.f32.mrf.mxu0
      %v1720 = vadd.f32 %v483, %v1719
      %1721 = vmatmul.bf16.gmra.mxu0 %v1041
      %v1722 = vpop.f32.mrf.mxu0
      %v1723 = vadd.f32 %v483, %v1722
      %v1724 = vpop.f32.mrf.mxu0
      %v1725 = vadd.f32 %v483, %v1724
      %1726 = vmatmul.bf16.gmra.mxu0 %v1050
      %v1727 = vpop.f32.mrf.mxu0
      %v1728 = vadd.f32 %v483, %v1727
      %v1729 = vpop.f32.mrf.mxu0
      %v1730 = vadd.f32 %v483, %v1729
      %1731 = vmatmul.bf16.gmra.mxu0 %v1059
      %v1732 = vpop.f32.mrf.mxu0
      %v1733 = vadd.f32 %v483, %v1732
      %v1734 = vpop.f32.mrf.mxu0
      %v1735 = vadd.f32 %v483, %v1734
      %1736 = vmatmul.bf16.gmra.mxu0 %v1068
      %v1737 = vpop.f32.mrf.mxu0
      %v1738 = vadd.f32 %v483, %v1737
      %v1739 = vpop.f32.mrf.mxu0
      %v1740 = vadd.f32 %v483, %v1739
      %1741 = vdwg.mxu0
      %1742 = vmatpush.bf16.msra.mxu0 %v1524
      %1743 = vmatpush.bf16.msra.mxu0 %v1523
      %1744 = vmatpush.bf16.msra.mxu0 %v1522
      %1745 = vmatpush.bf16.msra.mxu0 %v1521
      %1746 = vmatpush.bf16.msra.mxu0 %v1520
      %1747 = vmatpush.bf16.msra.mxu0 %v1519
      %1748 = vmatpush.bf16.msra.mxu0 %v1518
      %1749 = vmatpush.bf16.msra.mxu0 %v1517
      %1750 = vmatmul.bf16.gmra.mxu0 %v934
      %v1751 = vpop.f32.mrf.mxu0
      %v1752 = vadd.f32 %v1663, %v1751
      %v1753 = vpop.f32.mrf.mxu0
      %v1754 = vadd.f32 %v1665, %v1753
      %1755 = vmatmul.bf16.gmra.mxu0 %v943
      %v1756 = vpop.f32.mrf.mxu0
      %v1757 = vadd.f32 %v1668, %v1756
      %v1758 = vpop.f32.mrf.mxu0
      %v1759 = vadd.f32 %v1670, %v1758
      %1760 = vmatmul.bf16.gmra.mxu0 %v952
      %v1761 = vpop.f32.mrf.mxu0
      %v1762 = vadd.f32 %v1673, %v1761
      %v1763 = vpop.f32.mrf.mxu0
      %v1764 = vadd.f32 %v1675, %v1763
      %1765 = vmatmul.bf16.gmra.mxu0 %v961
      %v1766 = vpop.f32.mrf.mxu0
      %v1767 = vadd.f32 %v1678, %v1766
      %v1768 = vpop.f32.mrf.mxu0
      %v1769 = vadd.f32 %v1680, %v1768
      %1770 = vmatmul.bf16.gmra.mxu0 %v970
      %v1771 = vpop.f32.mrf.mxu0
      %v1772 = vadd.f32 %v1683, %v1771
      %v1773 = vpop.f32.mrf.mxu0
      %v1774 = vadd.f32 %v1685, %v1773
      %1775 = vmatmul.bf16.gmra.mxu0 %v979
      %v1776 = vpop.f32.mrf.mxu0
      %v1777 = vadd.f32 %v1688, %v1776
      %v1778 = vpop.f32.mrf.mxu0
      %v1779 = vadd.f32 %v1690, %v1778
      %1780 = vmatmul.bf16.gmra.mxu0 %v988
      %v1781 = vpop.f32.mrf.mxu0
      %v1782 = vadd.f32 %v1693, %v1781
      %v1783 = vpop.f32.mrf.mxu0
      %v1784 = vadd.f32 %v1695, %v1783
      %1785 = vmatmul.bf16.gmra.mxu0 %v997
      %v1786 = vpop.f32.mrf.mxu0
      %v1787 = vadd.f32 %v1698, %v1786
      %v1788 = vpop.f32.mrf.mxu0
      %v1789 = vadd.f32 %v1700, %v1788
      %1790 = vmatmul.bf16.gmra.mxu0 %v1006
      %v1791 = vpop.f32.mrf.mxu0
      %v1792 = vadd.f32 %v1703, %v1791
      %v1793 = vpop.f32.mrf.mxu0
      %v1794 = vadd.f32 %v1705, %v1793
      %1795 = vmatmul.bf16.gmra.mxu0 %v1015
      %v1796 = vpop.f32.mrf.mxu0
      %v1797 = vadd.f32 %v1708, %v1796
      %v1798 = vpop.f32.mrf.mxu0
      %v1799 = vadd.f32 %v1710, %v1798
      %1800 = vmatmul.bf16.gmra.mxu0 %v1024
      %v1801 = vpop.f32.mrf.mxu0
      %v1802 = vadd.f32 %v1713, %v1801
      %v1803 = vpop.f32.mrf.mxu0
      %v1804 = vadd.f32 %v1715, %v1803
      %1805 = vmatmul.bf16.gmra.mxu0 %v1033
      %v1806 = vpop.f32.mrf.mxu0
      %v1807 = vadd.f32 %v1718, %v1806
      %v1808 = vpop.f32.mrf.mxu0
      %v1809 = vadd.f32 %v1720, %v1808
      %1810 = vmatmul.bf16.gmra.mxu0 %v1042
      %v1811 = vpop.f32.mrf.mxu0
      %v1812 = vadd.f32 %v1723, %v1811
      %v1813 = vpop.f32.mrf.mxu0
      %v1814 = vadd.f32 %v1725, %v1813
      %1815 = vmatmul.bf16.gmra.mxu0 %v1051
      %v1816 = vpop.f32.mrf.mxu0
      %v1817 = vadd.f32 %v1728, %v1816
      %v1818 = vpop.f32.mrf.mxu0
      %v1819 = vadd.f32 %v1730, %v1818
      %1820 = vmatmul.bf16.gmra.mxu0 %v1060
      %v1821 = vpop.f32.mrf.mxu0
      %v1822 = vadd.f32 %v1733, %v1821
      %v1823 = vpop.f32.mrf.mxu0
      %v1824 = vadd.f32 %v1735, %v1823
      %1825 = vmatmul.bf16.gmra.mxu0 %v1069
      %v1826 = vpop.f32.mrf.mxu0
      %v1827 = vadd.f32 %v1738, %v1826
      %v1828 = vpop.f32.mrf.mxu0
      %v1829 = vadd.f32 %v1740, %v1828
      %1830 = vdwg.mxu0
      %1831 = vmatpush.bf16.msra.mxu0 %v1532
      %1832 = vmatpush.bf16.msra.mxu0 %v1531
      %1833 = vmatpush.bf16.msra.mxu0 %v1530
      %1834 = vmatpush.bf16.msra.mxu0 %v1529
      %1835 = vmatpush.bf16.msra.mxu0 %v1528
      %1836 = vmatpush.bf16.msra.mxu0 %v1527
      %1837 = vmatpush.bf16.msra.mxu0 %v1526
      %1838 = vmatpush.bf16.msra.mxu0 %v1525
      %1839 = vmatmul.bf16.gmra.mxu0 %v935
      %v1840 = vpop.f32.mrf.mxu0
      %v1841 = vadd.f32 %v1752, %v1840
      %v1842 = vpop.f32.mrf.mxu0
      %v1843 = vadd.f32 %v1754, %v1842
      %1844 = vmatmul.bf16.gmra.mxu0 %v944
      %v1845 = vpop.f32.mrf.mxu0
      %v1846 = vadd.f32 %v1757, %v1845
      %v1847 = vpop.f32.mrf.mxu0
      %v1848 = vadd.f32 %v1759, %v1847
      %1849 = vmatmul.bf16.gmra.mxu0 %v953
      %v1850 = vpop.f32.mrf.mxu0
      %v1851 = vadd.f32 %v1762, %v1850
      %v1852 = vpop.f32.mrf.mxu0
      %v1853 = vadd.f32 %v1764, %v1852
      %1854 = vmatmul.bf16.gmra.mxu0 %v962
      %v1855 = vpop.f32.mrf.mxu0
      %v1856 = vadd.f32 %v1767, %v1855
      %v1857 = vpop.f32.mrf.mxu0
      %v1858 = vadd.f32 %v1769, %v1857
      %1859 = vmatmul.bf16.gmra.mxu0 %v971
      %v1860 = vpop.f32.mrf.mxu0
      %v1861 = vadd.f32 %v1772, %v1860
      %v1862 = vpop.f32.mrf.mxu0
      %v1863 = vadd.f32 %v1774, %v1862
      %1864 = vmatmul.bf16.gmra.mxu0 %v980
      %v1865 = vpop.f32.mrf.mxu0
      %v1866 = vadd.f32 %v1777, %v1865
      %v1867 = vpop.f32.mrf.mxu0
      %v1868 = vadd.f32 %v1779, %v1867
      %1869 = vmatmul.bf16.gmra.mxu0 %v989
      %v1870 = vpop.f32.mrf.mxu0
      %v1871 = vadd.f32 %v1782, %v1870
      %v1872 = vpop.f32.mrf.mxu0
      %v1873 = vadd.f32 %v1784, %v1872
      %1874 = vmatmul.bf16.gmra.mxu0 %v998
      %v1875 = vpop.f32.mrf.mxu0
      %v1876 = vadd.f32 %v1787, %v1875
      %v1877 = vpop.f32.mrf.mxu0
      %v1878 = vadd.f32 %v1789, %v1877
      %1879 = vmatmul.bf16.gmra.mxu0 %v1007
      %v1880 = vpop.f32.mrf.mxu0
      %v1881 = vadd.f32 %v1792, %v1880
      %v1882 = vpop.f32.mrf.mxu0
      %v1883 = vadd.f32 %v1794, %v1882
      %1884 = vmatmul.bf16.gmra.mxu0 %v1016
      %v1885 = vpop.f32.mrf.mxu0
      %v1886 = vadd.f32 %v1797, %v1885
      %v1887 = vpop.f32.mrf.mxu0
      %v1888 = vadd.f32 %v1799, %v1887
      %1889 = vmatmul.bf16.gmra.mxu0 %v1025
      %v1890 = vpop.f32.mrf.mxu0
      %v1891 = vadd.f32 %v1802, %v1890
      %v1892 = vpop.f32.mrf.mxu0
      %v1893 = vadd.f32 %v1804, %v1892
      %1894 = vmatmul.bf16.gmra.mxu0 %v1034
      %v1895 = vpop.f32.mrf.mxu0
      %v1896 = vadd.f32 %v1807, %v1895
      %v1897 = vpop.f32.mrf.mxu0
      %v1898 = vadd.f32 %v1809, %v1897
      %1899 = vmatmul.bf16.gmra.mxu0 %v1043
      %v1900 = vpop.f32.mrf.mxu0
      %v1901 = vadd.f32 %v1812, %v1900
      %v1902 = vpop.f32.mrf.mxu0
      %v1903 = vadd.f32 %v1814, %v1902
      %1904 = vmatmul.bf16.gmra.mxu0 %v1052
      %v1905 = vpop.f32.mrf.mxu0
      %v1906 = vadd.f32 %v1817, %v1905
      %v1907 = vpop.f32.mrf.mxu0
      %v1908 = vadd.f32 %v1819, %v1907
      %1909 = vmatmul.bf16.gmra.mxu0 %v1061
      %v1910 = vpop.f32.mrf.mxu0
      %v1911 = vadd.f32 %v1822, %v1910
      %v1912 = vpop.f32.mrf.mxu0
      %v1913 = vadd.f32 %v1824, %v1912
      %1914 = vmatmul.bf16.gmra.mxu0 %v1070
      %v1915 = vpop.f32.mrf.mxu0
      %v1916 = vadd.f32 %v1827, %v1915
      %v1917 = vpop.f32.mrf.mxu0
      %v1918 = vadd.f32 %v1829, %v1917
      %1919 = vdwg.mxu0
      %1920 = vmatpush.bf16.msra.mxu0 %v1540
      %1921 = vmatpush.bf16.msra.mxu0 %v1539
      %1922 = vmatpush.bf16.msra.mxu0 %v1538
      %1923 = vmatpush.bf16.msra.mxu0 %v1537
      %1924 = vmatpush.bf16.msra.mxu0 %v1536
      %1925 = vmatpush.bf16.msra.mxu0 %v1535
      %1926 = vmatpush.bf16.msra.mxu0 %v1534
      %1927 = vmatpush.bf16.msra.mxu0 %v1533
      %1928 = vmatmul.bf16.gmra.mxu0 %v936
      %v1929 = vpop.f32.mrf.mxu0
      %v1930 = vadd.f32 %v1841, %v1929
      %v1931 = vpop.f32.mrf.mxu0
      %v1932 = vadd.f32 %v1843, %v1931
      %1933 = vmatmul.bf16.gmra.mxu0 %v945
      %v1934 = vpop.f32.mrf.mxu0
      %v1935 = vadd.f32 %v1846, %v1934
      %v1936 = vpop.f32.mrf.mxu0
      %v1937 = vadd.f32 %v1848, %v1936
      %1938 = vmatmul.bf16.gmra.mxu0 %v954
      %v1939 = vpop.f32.mrf.mxu0
      %v1940 = vadd.f32 %v1851, %v1939
      %v1941 = vpop.f32.mrf.mxu0
      %v1942 = vadd.f32 %v1853, %v1941
      %1943 = vmatmul.bf16.gmra.mxu0 %v963
      %v1944 = vpop.f32.mrf.mxu0
      %v1945 = vadd.f32 %v1856, %v1944
      %v1946 = vpop.f32.mrf.mxu0
      %v1947 = vadd.f32 %v1858, %v1946
      %1948 = vmatmul.bf16.gmra.mxu0 %v972
      %v1949 = vpop.f32.mrf.mxu0
      %v1950 = vadd.f32 %v1861, %v1949
      %v1951 = vpop.f32.mrf.mxu0
      %v1952 = vadd.f32 %v1863, %v1951
      %1953 = vmatmul.bf16.gmra.mxu0 %v981
      %v1954 = vpop.f32.mrf.mxu0
      %v1955 = vadd.f32 %v1866, %v1954
      %v1956 = vpop.f32.mrf.mxu0
      %v1957 = vadd.f32 %v1868, %v1956
      %1958 = vmatmul.bf16.gmra.mxu0 %v990
      %v1959 = vpop.f32.mrf.mxu0
      %v1960 = vadd.f32 %v1871, %v1959
      %v1961 = vpop.f32.mrf.mxu0
      %v1962 = vadd.f32 %v1873, %v1961
      %1963 = vmatmul.bf16.gmra.mxu0 %v999
      %v1964 = vpop.f32.mrf.mxu0
      %v1965 = vadd.f32 %v1876, %v1964
      %v1966 = vpop.f32.mrf.mxu0
      %v1967 = vadd.f32 %v1878, %v1966
      %1968 = vmatmul.bf16.gmra.mxu0 %v1008
      %v1969 = vpop.f32.mrf.mxu0
      %v1970 = vadd.f32 %v1881, %v1969
      %v1971 = vpop.f32.mrf.mxu0
      %v1972 = vadd.f32 %v1883, %v1971
      %1973 = vmatmul.bf16.gmra.mxu0 %v1017
      %v1974 = vpop.f32.mrf.mxu0
      %v1975 = vadd.f32 %v1886, %v1974
      %v1976 = vpop.f32.mrf.mxu0
      %v1977 = vadd.f32 %v1888, %v1976
      %1978 = vmatmul.bf16.gmra.mxu0 %v1026
      %v1979 = vpop.f32.mrf.mxu0
      %v1980 = vadd.f32 %v1891, %v1979
      %v1981 = vpop.f32.mrf.mxu0
      %v1982 = vadd.f32 %v1893, %v1981
      %1983 = vmatmul.bf16.gmra.mxu0 %v1035
      %v1984 = vpop.f32.mrf.mxu0
      %v1985 = vadd.f32 %v1896, %v1984
      %v1986 = vpop.f32.mrf.mxu0
      %v1987 = vadd.f32 %v1898, %v1986
      %1988 = vmatmul.bf16.gmra.mxu0 %v1044
      %v1989 = vpop.f32.mrf.mxu0
      %v1990 = vadd.f32 %v1901, %v1989
      %v1991 = vpop.f32.mrf.mxu0
      %v1992 = vadd.f32 %v1903, %v1991
      %1993 = vmatmul.bf16.gmra.mxu0 %v1053
      %v1994 = vpop.f32.mrf.mxu0
      %v1995 = vadd.f32 %v1906, %v1994
      %v1996 = vpop.f32.mrf.mxu0
      %v1997 = vadd.f32 %v1908, %v1996
      %1998 = vmatmul.bf16.gmra.mxu0 %v1062
      %v1999 = vpop.f32.mrf.mxu0
      %v2000 = vadd.f32 %v1911, %v1999
      %v2001 = vpop.f32.mrf.mxu0
      %v2002 = vadd.f32 %v1913, %v2001
      %2003 = vmatmul.bf16.gmra.mxu0 %v1071
      %v2004 = vpop.f32.mrf.mxu0
      %v2005 = vadd.f32 %v1916, %v2004
      %v2006 = vpop.f32.mrf.mxu0
      %v2007 = vadd.f32 %v1918, %v2006
      %2008 = vdwg.mxu0
      %2009 = vmatpush.bf16.msra.mxu0 %v1548
      %2010 = vmatpush.bf16.msra.mxu0 %v1547
      %2011 = vmatpush.bf16.msra.mxu0 %v1546
      %2012 = vmatpush.bf16.msra.mxu0 %v1545
      %2013 = vmatpush.bf16.msra.mxu0 %v1544
      %2014 = vmatpush.bf16.msra.mxu0 %v1543
      %2015 = vmatpush.bf16.msra.mxu0 %v1542
      %2016 = vmatpush.bf16.msra.mxu0 %v1541
      %2017 = vmatmul.bf16.gmra.mxu0 %v937
      %v2018 = vpop.f32.mrf.mxu0
      %v2019 = vadd.f32 %v1930, %v2018
      %v2020 = vpop.f32.mrf.mxu0
      %v2021 = vadd.f32 %v1932, %v2020
      %2022 = vmatmul.bf16.gmra.mxu0 %v946
      %v2023 = vpop.f32.mrf.mxu0
      %v2024 = vadd.f32 %v1935, %v2023
      %v2025 = vpop.f32.mrf.mxu0
      %v2026 = vadd.f32 %v1937, %v2025
      %2027 = vmatmul.bf16.gmra.mxu0 %v955
      %v2028 = vpop.f32.mrf.mxu0
      %v2029 = vadd.f32 %v1940, %v2028
      %v2030 = vpop.f32.mrf.mxu0
      %v2031 = vadd.f32 %v1942, %v2030
      %2032 = vmatmul.bf16.gmra.mxu0 %v964
      %v2033 = vpop.f32.mrf.mxu0
      %v2034 = vadd.f32 %v1945, %v2033
      %v2035 = vpop.f32.mrf.mxu0
      %v2036 = vadd.f32 %v1947, %v2035
      %2037 = vmatmul.bf16.gmra.mxu0 %v973
      %v2038 = vpop.f32.mrf.mxu0
      %v2039 = vadd.f32 %v1950, %v2038
      %v2040 = vpop.f32.mrf.mxu0
      %v2041 = vadd.f32 %v1952, %v2040
      %2042 = vmatmul.bf16.gmra.mxu0 %v982
      %v2043 = vpop.f32.mrf.mxu0
      %v2044 = vadd.f32 %v1955, %v2043
      %v2045 = vpop.f32.mrf.mxu0
      %v2046 = vadd.f32 %v1957, %v2045
      %2047 = vmatmul.bf16.gmra.mxu0 %v991
      %v2048 = vpop.f32.mrf.mxu0
      %v2049 = vadd.f32 %v1960, %v2048
      %v2050 = vpop.f32.mrf.mxu0
      %v2051 = vadd.f32 %v1962, %v2050
      %2052 = vmatmul.bf16.gmra.mxu0 %v1000
      %v2053 = vpop.f32.mrf.mxu0
      %v2054 = vadd.f32 %v1965, %v2053
      %v2055 = vpop.f32.mrf.mxu0
      %v2056 = vadd.f32 %v1967, %v2055
      %2057 = vmatmul.bf16.gmra.mxu0 %v1009
      %v2058 = vpop.f32.mrf.mxu0
      %v2059 = vadd.f32 %v1970, %v2058
      %v2060 = vpop.f32.mrf.mxu0
      %v2061 = vadd.f32 %v1972, %v2060
      %2062 = vmatmul.bf16.gmra.mxu0 %v1018
      %v2063 = vpop.f32.mrf.mxu0
      %v2064 = vadd.f32 %v1975, %v2063
      %v2065 = vpop.f32.mrf.mxu0
      %v2066 = vadd.f32 %v1977, %v2065
      %2067 = vmatmul.bf16.gmra.mxu0 %v1027
      %v2068 = vpop.f32.mrf.mxu0
      %v2069 = vadd.f32 %v1980, %v2068
      %v2070 = vpop.f32.mrf.mxu0
      %v2071 = vadd.f32 %v1982, %v2070
      %2072 = vmatmul.bf16.gmra.mxu0 %v1036
      %v2073 = vpop.f32.mrf.mxu0
      %v2074 = vadd.f32 %v1985, %v2073
      %v2075 = vpop.f32.mrf.mxu0
      %v2076 = vadd.f32 %v1987, %v2075
      %2077 = vmatmul.bf16.gmra.mxu0 %v1045
      %v2078 = vpop.f32.mrf.mxu0
      %v2079 = vadd.f32 %v1990, %v2078
      %v2080 = vpop.f32.mrf.mxu0
      %v2081 = vadd.f32 %v1992, %v2080
      %2082 = vmatmul.bf16.gmra.mxu0 %v1054
      %v2083 = vpop.f32.mrf.mxu0
      %v2084 = vadd.f32 %v1995, %v2083
      %v2085 = vpop.f32.mrf.mxu0
      %v2086 = vadd.f32 %v1997, %v2085
      %2087 = vmatmul.bf16.gmra.mxu0 %v1063
      %v2088 = vpop.f32.mrf.mxu0
      %v2089 = vadd.f32 %v2000, %v2088
      %v2090 = vpop.f32.mrf.mxu0
      %v2091 = vadd.f32 %v2002, %v2090
      %2092 = vmatmul.bf16.gmra.mxu0 %v1072
      %v2093 = vpop.f32.mrf.mxu0
      %v2094 = vadd.f32 %v2005, %v2093
      %v2095 = vpop.f32.mrf.mxu0
      %v2096 = vadd.f32 %v2007, %v2095
      %2097 = vdwg.mxu0
      %2098 = vmatpush.bf16.msra.mxu0 %v1556
      %2099 = vmatpush.bf16.msra.mxu0 %v1555
      %2100 = vmatpush.bf16.msra.mxu0 %v1554
      %2101 = vmatpush.bf16.msra.mxu0 %v1553
      %2102 = vmatpush.bf16.msra.mxu0 %v1552
      %2103 = vmatpush.bf16.msra.mxu0 %v1551
      %2104 = vmatpush.bf16.msra.mxu0 %v1550
      %2105 = vmatpush.bf16.msra.mxu0 %v1549
      %2106 = vmatmul.bf16.gmra.mxu0 %v938
      %v2107 = vpop.f32.mrf.mxu0
      %v2108 = vadd.f32 %v2019, %v2107
      %v2109 = vpop.f32.mrf.mxu0
      %v2110 = vadd.f32 %v2021, %v2109
      %2111 = vmatmul.bf16.gmra.mxu0 %v947
      %v2112 = vpop.f32.mrf.mxu0
      %v2113 = vadd.f32 %v2024, %v2112
      %v2114 = vpop.f32.mrf.mxu0
      %v2115 = vadd.f32 %v2026, %v2114
      %2116 = vmatmul.bf16.gmra.mxu0 %v956
      %v2117 = vpop.f32.mrf.mxu0
      %v2118 = vadd.f32 %v2029, %v2117
      %v2119 = vpop.f32.mrf.mxu0
      %v2120 = vadd.f32 %v2031, %v2119
      %2121 = vmatmul.bf16.gmra.mxu0 %v965
      %v2122 = vpop.f32.mrf.mxu0
      %v2123 = vadd.f32 %v2034, %v2122
      %v2124 = vpop.f32.mrf.mxu0
      %v2125 = vadd.f32 %v2036, %v2124
      %2126 = vmatmul.bf16.gmra.mxu0 %v974
      %v2127 = vpop.f32.mrf.mxu0
      %v2128 = vadd.f32 %v2039, %v2127
      %v2129 = vpop.f32.mrf.mxu0
      %v2130 = vadd.f32 %v2041, %v2129
      %2131 = vmatmul.bf16.gmra.mxu0 %v983
      %v2132 = vpop.f32.mrf.mxu0
      %v2133 = vadd.f32 %v2044, %v2132
      %v2134 = vpop.f32.mrf.mxu0
      %v2135 = vadd.f32 %v2046, %v2134
      %2136 = vmatmul.bf16.gmra.mxu0 %v992
      %v2137 = vpop.f32.mrf.mxu0
      %v2138 = vadd.f32 %v2049, %v2137
      %v2139 = vpop.f32.mrf.mxu0
      %v2140 = vadd.f32 %v2051, %v2139
      %2141 = vmatmul.bf16.gmra.mxu0 %v1001
      %v2142 = vpop.f32.mrf.mxu0
      %v2143 = vadd.f32 %v2054, %v2142
      %v2144 = vpop.f32.mrf.mxu0
      %v2145 = vadd.f32 %v2056, %v2144
      %2146 = vmatmul.bf16.gmra.mxu0 %v1010
      %v2147 = vpop.f32.mrf.mxu0
      %v2148 = vadd.f32 %v2059, %v2147
      %v2149 = vpop.f32.mrf.mxu0
      %v2150 = vadd.f32 %v2061, %v2149
      %2151 = vmatmul.bf16.gmra.mxu0 %v1019
      %v2152 = vpop.f32.mrf.mxu0
      %v2153 = vadd.f32 %v2064, %v2152
      %v2154 = vpop.f32.mrf.mxu0
      %v2155 = vadd.f32 %v2066, %v2154
      %2156 = vmatmul.bf16.gmra.mxu0 %v1028
      %v2157 = vpop.f32.mrf.mxu0
      %v2158 = vadd.f32 %v2069, %v2157
      %v2159 = vpop.f32.mrf.mxu0
      %v2160 = vadd.f32 %v2071, %v2159
      %2161 = vmatmul.bf16.gmra.mxu0 %v1037
      %v2162 = vpop.f32.mrf.mxu0
      %v2163 = vadd.f32 %v2074, %v2162
      %v2164 = vpop.f32.mrf.mxu0
      %v2165 = vadd.f32 %v2076, %v2164
      %2166 = vmatmul.bf16.gmra.mxu0 %v1046
      %v2167 = vpop.f32.mrf.mxu0
      %v2168 = vadd.f32 %v2079, %v2167
      %v2169 = vpop.f32.mrf.mxu0
      %v2170 = vadd.f32 %v2081, %v2169
      %2171 = vmatmul.bf16.gmra.mxu0 %v1055
      %v2172 = vpop.f32.mrf.mxu0
      %v2173 = vadd.f32 %v2084, %v2172
      %v2174 = vpop.f32.mrf.mxu0
      %v2175 = vadd.f32 %v2086, %v2174
      %2176 = vmatmul.bf16.gmra.mxu0 %v1064
      %v2177 = vpop.f32.mrf.mxu0
      %v2178 = vadd.f32 %v2089, %v2177
      %v2179 = vpop.f32.mrf.mxu0
      %v2180 = vadd.f32 %v2091, %v2179
      %2181 = vmatmul.bf16.gmra.mxu0 %v1073
      %v2182 = vpop.f32.mrf.mxu0
      %v2183 = vadd.f32 %v2094, %v2182
      %v2184 = vpop.f32.mrf.mxu0
      %v2185 = vadd.f32 %v2096, %v2184
      %2186 = vdwg.mxu0
      %2187 = vmatpush.bf16.msra.mxu0 %v1564
      %2188 = vmatpush.bf16.msra.mxu0 %v1563
      %2189 = vmatpush.bf16.msra.mxu0 %v1562
      %2190 = vmatpush.bf16.msra.mxu0 %v1561
      %2191 = vmatpush.bf16.msra.mxu0 %v1560
      %2192 = vmatpush.bf16.msra.mxu0 %v1559
      %2193 = vmatpush.bf16.msra.mxu0 %v1558
      %2194 = vmatpush.bf16.msra.mxu0 %v1557
      %2195 = vmatmul.bf16.gmra.mxu0 %v939
      %v2196 = vpop.f32.mrf.mxu0
      %v2197 = vadd.f32 %v2108, %v2196
      %v2198 = vpop.f32.mrf.mxu0
      %v2199 = vadd.f32 %v2110, %v2198
      %2200 = vmatmul.bf16.gmra.mxu0 %v948
      %v2201 = vpop.f32.mrf.mxu0
      %v2202 = vadd.f32 %v2113, %v2201
      %v2203 = vpop.f32.mrf.mxu0
      %v2204 = vadd.f32 %v2115, %v2203
      %2205 = vmatmul.bf16.gmra.mxu0 %v957
      %v2206 = vpop.f32.mrf.mxu0
      %v2207 = vadd.f32 %v2118, %v2206
      %v2208 = vpop.f32.mrf.mxu0
      %v2209 = vadd.f32 %v2120, %v2208
      %2210 = vmatmul.bf16.gmra.mxu0 %v966
      %v2211 = vpop.f32.mrf.mxu0
      %v2212 = vadd.f32 %v2123, %v2211
      %v2213 = vpop.f32.mrf.mxu0
      %v2214 = vadd.f32 %v2125, %v2213
      %2215 = vmatmul.bf16.gmra.mxu0 %v975
      %v2216 = vpop.f32.mrf.mxu0
      %v2217 = vadd.f32 %v2128, %v2216
      %v2218 = vpop.f32.mrf.mxu0
      %v2219 = vadd.f32 %v2130, %v2218
      %2220 = vmatmul.bf16.gmra.mxu0 %v984
      %v2221 = vpop.f32.mrf.mxu0
      %v2222 = vadd.f32 %v2133, %v2221
      %v2223 = vpop.f32.mrf.mxu0
      %v2224 = vadd.f32 %v2135, %v2223
      %2225 = vmatmul.bf16.gmra.mxu0 %v993
      %v2226 = vpop.f32.mrf.mxu0
      %v2227 = vadd.f32 %v2138, %v2226
      %v2228 = vpop.f32.mrf.mxu0
      %v2229 = vadd.f32 %v2140, %v2228
      %2230 = vmatmul.bf16.gmra.mxu0 %v1002
      %v2231 = vpop.f32.mrf.mxu0
      %v2232 = vadd.f32 %v2143, %v2231
      %v2233 = vpop.f32.mrf.mxu0
      %v2234 = vadd.f32 %v2145, %v2233
      %2235 = vmatmul.bf16.gmra.mxu0 %v1011
      %v2236 = vpop.f32.mrf.mxu0
      %v2237 = vadd.f32 %v2148, %v2236
      %v2238 = vpop.f32.mrf.mxu0
      %v2239 = vadd.f32 %v2150, %v2238
      %2240 = vmatmul.bf16.gmra.mxu0 %v1020
      %v2241 = vpop.f32.mrf.mxu0
      %v2242 = vadd.f32 %v2153, %v2241
      %v2243 = vpop.f32.mrf.mxu0
      %v2244 = vadd.f32 %v2155, %v2243
      %2245 = vmatmul.bf16.gmra.mxu0 %v1029
      %v2246 = vpop.f32.mrf.mxu0
      %v2247 = vadd.f32 %v2158, %v2246
      %v2248 = vpop.f32.mrf.mxu0
      %v2249 = vadd.f32 %v2160, %v2248
      %2250 = vmatmul.bf16.gmra.mxu0 %v1038
      %v2251 = vpop.f32.mrf.mxu0
      %v2252 = vadd.f32 %v2163, %v2251
      %v2253 = vpop.f32.mrf.mxu0
      %v2254 = vadd.f32 %v2165, %v2253
      %2255 = vmatmul.bf16.gmra.mxu0 %v1047
      %v2256 = vpop.f32.mrf.mxu0
      %v2257 = vadd.f32 %v2168, %v2256
      %v2258 = vpop.f32.mrf.mxu0
      %v2259 = vadd.f32 %v2170, %v2258
      %2260 = vmatmul.bf16.gmra.mxu0 %v1056
      %v2261 = vpop.f32.mrf.mxu0
      %v2262 = vadd.f32 %v2173, %v2261
      %v2263 = vpop.f32.mrf.mxu0
      %v2264 = vadd.f32 %v2175, %v2263
      %2265 = vmatmul.bf16.gmra.mxu0 %v1065
      %v2266 = vpop.f32.mrf.mxu0
      %v2267 = vadd.f32 %v2178, %v2266
      %v2268 = vpop.f32.mrf.mxu0
      %v2269 = vadd.f32 %v2180, %v2268
      %2270 = vmatmul.bf16.gmra.mxu0 %v1074
      %v2271 = vpop.f32.mrf.mxu0
      %v2272 = vadd.f32 %v2183, %v2271
      %v2273 = vpop.f32.mrf.mxu0
      %v2274 = vadd.f32 %v2185, %v2273
      %2275 = vdwg.mxu0
      %2276 = vmatpush.bf16.msra.mxu0 %v1572
      %2277 = vmatpush.bf16.msra.mxu0 %v1571
      %2278 = vmatpush.bf16.msra.mxu0 %v1570
      %2279 = vmatpush.bf16.msra.mxu0 %v1569
      %2280 = vmatpush.bf16.msra.mxu0 %v1568
      %2281 = vmatpush.bf16.msra.mxu0 %v1567
      %2282 = vmatpush.bf16.msra.mxu0 %v1566
      %2283 = vmatpush.bf16.msra.mxu0 %v1565
      %2284 = vmatmul.bf16.gmra.mxu0 %v940
      %v2285 = vpop.f32.mrf.mxu0
      %v2286 = vadd.f32 %v2197, %v2285
      %v2287 = vpop.f32.mrf.mxu0
      %v2288 = vadd.f32 %v2199, %v2287
      %2289 = vmatmul.bf16.gmra.mxu0 %v949
      %v2290 = vpop.f32.mrf.mxu0
      %v2291 = vadd.f32 %v2202, %v2290
      %v2292 = vpop.f32.mrf.mxu0
      %v2293 = vadd.f32 %v2204, %v2292
      %2294 = vmatmul.bf16.gmra.mxu0 %v958
      %v2295 = vpop.f32.mrf.mxu0
      %v2296 = vadd.f32 %v2207, %v2295
      %v2297 = vpop.f32.mrf.mxu0
      %v2298 = vadd.f32 %v2209, %v2297
      %2299 = vmatmul.bf16.gmra.mxu0 %v967
      %v2300 = vpop.f32.mrf.mxu0
      %v2301 = vadd.f32 %v2212, %v2300
      %v2302 = vpop.f32.mrf.mxu0
      %v2303 = vadd.f32 %v2214, %v2302
      %2304 = vmatmul.bf16.gmra.mxu0 %v976
      %v2305 = vpop.f32.mrf.mxu0
      %v2306 = vadd.f32 %v2217, %v2305
      %v2307 = vpop.f32.mrf.mxu0
      %v2308 = vadd.f32 %v2219, %v2307
      %2309 = vmatmul.bf16.gmra.mxu0 %v985
      %v2310 = vpop.f32.mrf.mxu0
      %v2311 = vadd.f32 %v2222, %v2310
      %v2312 = vpop.f32.mrf.mxu0
      %v2313 = vadd.f32 %v2224, %v2312
      %2314 = vmatmul.bf16.gmra.mxu0 %v994
      %v2315 = vpop.f32.mrf.mxu0
      %v2316 = vadd.f32 %v2227, %v2315
      %v2317 = vpop.f32.mrf.mxu0
      %v2318 = vadd.f32 %v2229, %v2317
      %2319 = vmatmul.bf16.gmra.mxu0 %v1003
      %v2320 = vpop.f32.mrf.mxu0
      %v2321 = vadd.f32 %v2232, %v2320
      %v2322 = vpop.f32.mrf.mxu0
      %v2323 = vadd.f32 %v2234, %v2322
      %2324 = vmatmul.bf16.gmra.mxu0 %v1012
      %v2325 = vpop.f32.mrf.mxu0
      %v2326 = vadd.f32 %v2237, %v2325
      %v2327 = vpop.f32.mrf.mxu0
      %v2328 = vadd.f32 %v2239, %v2327
      %2329 = vmatmul.bf16.gmra.mxu0 %v1021
      %v2330 = vpop.f32.mrf.mxu0
      %v2331 = vadd.f32 %v2242, %v2330
      %v2332 = vpop.f32.mrf.mxu0
      %v2333 = vadd.f32 %v2244, %v2332
      %2334 = vmatmul.bf16.gmra.mxu0 %v1030
      %v2335 = vpop.f32.mrf.mxu0
      %v2336 = vadd.f32 %v2247, %v2335
      %v2337 = vpop.f32.mrf.mxu0
      %v2338 = vadd.f32 %v2249, %v2337
      %2339 = vmatmul.bf16.gmra.mxu0 %v1039
      %v2340 = vpop.f32.mrf.mxu0
      %v2341 = vadd.f32 %v2252, %v2340
      %v2342 = vpop.f32.mrf.mxu0
      %v2343 = vadd.f32 %v2254, %v2342
      %2344 = vmatmul.bf16.gmra.mxu0 %v1048
      %v2345 = vpop.f32.mrf.mxu0
      %v2346 = vadd.f32 %v2257, %v2345
      %v2347 = vpop.f32.mrf.mxu0
      %v2348 = vadd.f32 %v2259, %v2347
      %2349 = vmatmul.bf16.gmra.mxu0 %v1057
      %v2350 = vpop.f32.mrf.mxu0
      %v2351 = vadd.f32 %v2262, %v2350
      %v2352 = vpop.f32.mrf.mxu0
      %v2353 = vadd.f32 %v2264, %v2352
      %2354 = vmatmul.bf16.gmra.mxu0 %v1066
      %v2355 = vpop.f32.mrf.mxu0
      %v2356 = vadd.f32 %v2267, %v2355
      %v2357 = vpop.f32.mrf.mxu0
      %v2358 = vadd.f32 %v2269, %v2357
      %2359 = vmatmul.bf16.gmra.mxu0 %v1075
      %v2360 = vpop.f32.mrf.mxu0
      %v2361 = vadd.f32 %v2272, %v2360
      %v2362 = vpop.f32.mrf.mxu0
      %v2363 = vadd.f32 %v2274, %v2362
      %2364 = vdwg.mxu0
      %2365 = vmatpush.bf16.msra.mxu0 %v1580
      %2366 = vmatpush.bf16.msra.mxu0 %v1579
      %2367 = vmatpush.bf16.msra.mxu0 %v1578
      %2368 = vmatpush.bf16.msra.mxu0 %v1577
      %2369 = vmatpush.bf16.msra.mxu0 %v1576
      %2370 = vmatpush.bf16.msra.mxu0 %v1575
      %2371 = vmatpush.bf16.msra.mxu0 %v1574
      %2372 = vmatpush.bf16.msra.mxu0 %v1573
      %2373 = vmatmul.bf16.gmra.mxu0 %v941
      %v2374 = vpop.f32.mrf.mxu0
      %v2375 = vadd.f32 %v2286, %v2374
      %v2376 = vpop.f32.mrf.mxu0
      %v2377 = vadd.f32 %v2288, %v2376
      %2378 = vmatmul.bf16.gmra.mxu0 %v950
      %v2379 = vpop.f32.mrf.mxu0
      %v2380 = vadd.f32 %v2291, %v2379
      %v2381 = vpop.f32.mrf.mxu0
      %v2382 = vadd.f32 %v2293, %v2381
      %2383 = vmatmul.bf16.gmra.mxu0 %v959
      %v2384 = vpop.f32.mrf.mxu0
      %v2385 = vadd.f32 %v2296, %v2384
      %v2386 = vpop.f32.mrf.mxu0
      %v2387 = vadd.f32 %v2298, %v2386
      %2388 = vmatmul.bf16.gmra.mxu0 %v968
      %v2389 = vpop.f32.mrf.mxu0
      %v2390 = vadd.f32 %v2301, %v2389
      %v2391 = vpop.f32.mrf.mxu0
      %v2392 = vadd.f32 %v2303, %v2391
      %2393 = vmatmul.bf16.gmra.mxu0 %v977
      %v2394 = vpop.f32.mrf.mxu0
      %v2395 = vadd.f32 %v2306, %v2394
      %v2396 = vpop.f32.mrf.mxu0
      %v2397 = vadd.f32 %v2308, %v2396
      %2398 = vmatmul.bf16.gmra.mxu0 %v986
      %v2399 = vpop.f32.mrf.mxu0
      %v2400 = vadd.f32 %v2311, %v2399
      %v2401 = vpop.f32.mrf.mxu0
      %v2402 = vadd.f32 %v2313, %v2401
      %2403 = vmatmul.bf16.gmra.mxu0 %v995
      %v2404 = vpop.f32.mrf.mxu0
      %v2405 = vadd.f32 %v2316, %v2404
      %v2406 = vpop.f32.mrf.mxu0
      %v2407 = vadd.f32 %v2318, %v2406
      %2408 = vmatmul.bf16.gmra.mxu0 %v1004
      %v2409 = vpop.f32.mrf.mxu0
      %v2410 = vadd.f32 %v2321, %v2409
      %v2411 = vpop.f32.mrf.mxu0
      %v2412 = vadd.f32 %v2323, %v2411
      %2413 = vmatmul.bf16.gmra.mxu0 %v1013
      %v2414 = vpop.f32.mrf.mxu0
      %v2415 = vadd.f32 %v2326, %v2414
      %v2416 = vpop.f32.mrf.mxu0
      %v2417 = vadd.f32 %v2328, %v2416
      %2418 = vmatmul.bf16.gmra.mxu0 %v1022
      %v2419 = vpop.f32.mrf.mxu0
      %v2420 = vadd.f32 %v2331, %v2419
      %v2421 = vpop.f32.mrf.mxu0
      %v2422 = vadd.f32 %v2333, %v2421
      %2423 = vmatmul.bf16.gmra.mxu0 %v1031
      %v2424 = vpop.f32.mrf.mxu0
      %v2425 = vadd.f32 %v2336, %v2424
      %v2426 = vpop.f32.mrf.mxu0
      %v2427 = vadd.f32 %v2338, %v2426
      %2428 = vmatmul.bf16.gmra.mxu0 %v1040
      %v2429 = vpop.f32.mrf.mxu0
      %v2430 = vadd.f32 %v2341, %v2429
      %v2431 = vpop.f32.mrf.mxu0
      %v2432 = vadd.f32 %v2343, %v2431
      %2433 = vmatmul.bf16.gmra.mxu0 %v1049
      %v2434 = vpop.f32.mrf.mxu0
      %v2435 = vadd.f32 %v2346, %v2434
      %v2436 = vpop.f32.mrf.mxu0
      %v2437 = vadd.f32 %v2348, %v2436
      %2438 = vmatmul.bf16.gmra.mxu0 %v1058
      %v2439 = vpop.f32.mrf.mxu0
      %v2440 = vadd.f32 %v2351, %v2439
      %v2441 = vpop.f32.mrf.mxu0
      %v2442 = vadd.f32 %v2353, %v2441
      %2443 = vmatmul.bf16.gmra.mxu0 %v1067
      %v2444 = vpop.f32.mrf.mxu0
      %v2445 = vadd.f32 %v2356, %v2444
      %v2446 = vpop.f32.mrf.mxu0
      %v2447 = vadd.f32 %v2358, %v2446
      %2448 = vmatmul.bf16.gmra.mxu0 %v1076
      %v2449 = vpop.f32.mrf.mxu0
      %v2450 = vadd.f32 %v2361, %v2449
      %v2451 = vpop.f32.mrf.mxu0
      %v2452 = vadd.f32 %v2363, %v2451
      %2453 = vdwg.mxu0
      %v2454 = vmax.f32 %v2375, 0.0
      %v2455 = vmax.f32 %v2377, 0.0
      %v2456 = vmax.f32 %v2380, 0.0
      %v2457 = vmax.f32 %v2382, 0.0
      %v2458 = vmax.f32 %v2385, 0.0
      %v2459 = vmax.f32 %v2387, 0.0
      %v2460 = vmax.f32 %v2390, 0.0
      %v2461 = vmax.f32 %v2392, 0.0
      %v2462 = vmax.f32 %v2395, 0.0
      %v2463 = vmax.f32 %v2397, 0.0
      %v2464 = vmax.f32 %v2400, 0.0
      %v2465 = vmax.f32 %v2402, 0.0
      %v2466 = vmax.f32 %v2405, 0.0
      %v2467 = vmax.f32 %v2407, 0.0
      %v2468 = vmax.f32 %v2410, 0.0
      %v2469 = vmax.f32 %v2412, 0.0
      %v2470 = vmax.f32 %v2415, 0.0
      %v2471 = vmax.f32 %v2417, 0.0
      %v2472 = vmax.f32 %v2420, 0.0
      %v2473 = vmax.f32 %v2422, 0.0
      %v2474 = vmax.f32 %v2425, 0.0
      %v2475 = vmax.f32 %v2427, 0.0
      %v2476 = vmax.f32 %v2430, 0.0
      %v2477 = vmax.f32 %v2432, 0.0
      %v2478 = vmax.f32 %v2435, 0.0
      %v2479 = vmax.f32 %v2437, 0.0
      %v2480 = vmax.f32 %v2440, 0.0
      %v2481 = vmax.f32 %v2442, 0.0
      %v2482 = vmax.f32 %v2445, 0.0
      %v2483 = vmax.f32 %v2447, 0.0
      %v2484 = vmax.f32 %v2450, 0.0
      %v2485 = vmax.f32 %v2452, 0.0
      %v2486 = vpack.c.bf16 %v2454, %v2454
      %v2487 = vpack.c.bf16 %v2455, %v2455
      %v2488 = vpack.c.bf16 %v2456, %v2456
      %v2489 = vpack.c.bf16 %v2457, %v2457
      %v2490 = vpack.c.bf16 %v2458, %v2458
      %v2491 = vpack.c.bf16 %v2459, %v2459
      %v2492 = vpack.c.bf16 %v2460, %v2460
      %v2493 = vpack.c.bf16 %v2461, %v2461
      %v2494 = vpack.c.bf16 %v2462, %v2462
      %v2495 = vpack.c.bf16 %v2463, %v2463
      %v2496 = vpack.c.bf16 %v2464, %v2464
      %v2497 = vpack.c.bf16 %v2465, %v2465
      %v2498 = vpack.c.bf16 %v2466, %v2466
      %v2499 = vpack.c.bf16 %v2467, %v2467
      %v2500 = vpack.c.bf16 %v2468, %v2468
      %v2501 = vpack.c.bf16 %v2469, %v2469
      %v2502 = vpack.c.bf16 %v2470, %v2470
      %v2503 = vpack.c.bf16 %v2471, %v2471
      %v2504 = vpack.c.bf16 %v2472, %v2472
      %v2505 = vpack.c.bf16 %v2473, %v2473
      %v2506 = vpack.c.bf16 %v2474, %v2474
      %v2507 = vpack.c.bf16 %v2475, %v2475
      %v2508 = vpack.c.bf16 %v2476, %v2476
      %v2509 = vpack.c.bf16 %v2477, %v2477
      %v2510 = vpack.c.bf16 %v2478, %v2478
      %v2511 = vpack.c.bf16 %v2479, %v2479
      %v2512 = vpack.c.bf16 %v2480, %v2480
      %v2513 = vpack.c.bf16 %v2481, %v2481
      %v2514 = vpack.c.bf16 %v2482, %v2482
      %v2515 = vpack.c.bf16 %v2483, %v2483
      %v2516 = vpack.c.bf16 %v2484, %v2484
      %v2517 = vpack.c.bf16 %v2485, %v2485
      %2518 = vst [vmem:[%s175] sm:$0xf] %v2486
      %2519 = vst [vmem:[%s175 + $0x4] sm:$0xf] %v2487
      %2520 = vst [vmem:[%s175 + $0x8] sm:$0xf] %v2488
      %2521 = vst [vmem:[%s175 + $0xc] sm:$0xf] %v2489
      %2522 = vst [vmem:[%s175 + $0x10] sm:$0xf] %v2490
      %2523 = vst [vmem:[%s175 + $0x14] sm:$0xf] %v2491
      %2524 = vst [vmem:[%s175 + $0x18] sm:$0xf] %v2492
      %2525 = vst [vmem:[%s175 + $0x1c] sm:$0xf] %v2493
      %2526 = vst [vmem:[%s175 + $0x20] sm:$0xf] %v2494
      %2527 = vst [vmem:[%s175 + $0x24] sm:$0xf] %v2495
      %2528 = vst [vmem:[%s175 + $0x28] sm:$0xf] %v2496
      %2529 = vst [vmem:[%s175 + $0x2c] sm:$0xf] %v2497
      %2530 = vst [vmem:[%s175 + $0x30] sm:$0xf] %v2498
      %2531 = vst [vmem:[%s175 + $0x34] sm:$0xf] %v2499
      %2532 = vst [vmem:[%s175 + $0x38] sm:$0xf] %v2500
      %2533 = vst [vmem:[%s175 + $0x3c] sm:$0xf] %v2501
      %2534 = vst [vmem:[%s175 + $0x40] sm:$0xf] %v2502
      %2535 = vst [vmem:[%s175 + $0x44] sm:$0xf] %v2503
      %2536 = vst [vmem:[%s175 + $0x48] sm:$0xf] %v2504
      %2537 = vst [vmem:[%s175 + $0x4c] sm:$0xf] %v2505
      %2538 = vst [vmem:[%s175 + $0x50] sm:$0xf] %v2506
      %2539 = vst [vmem:[%s175 + $0x54] sm:$0xf] %v2507
      %2540 = vst [vmem:[%s175 + $0x58] sm:$0xf] %v2508
      %2541 = vst [vmem:[%s175 + $0x5c] sm:$0xf] %v2509
      %2542 = vst [vmem:[%s175 + $0x60] sm:$0xf] %v2510
      %2543 = vst [vmem:[%s175 + $0x64] sm:$0xf] %v2511
      %2544 = vst [vmem:[%s175 + $0x68] sm:$0xf] %v2512
      %2545 = vst [vmem:[%s175 + $0x6c] sm:$0xf] %v2513
      %2546 = vst [vmem:[%s175 + $0x70] sm:$0xf] %v2514
      %2547 = vst [vmem:[%s175 + $0x74] sm:$0xf] %v2515
      %2548 = vst [vmem:[%s175 + $0x78] sm:$0xf] %v2516
      %2549 = vst [vmem:[%s175 + $0x7c] sm:$0xf] %v2517
      %s2550 = smul.u32 32, %s14
      %p2551 = scmp.lt.s32.totalorder %s2550, 63
      %s2552 = scalar_select %p2551, %s2550, 63
      %s2553 = smul.addr %s2552, 4
      %s2554 = scalar_lea.vmem %s3, %s2553
      // Predicated region
      $region33: #{inception_b_forward.7} parent=31 // pred_check
        %p2555 = pneg %p100
      $region34: #{inception_b_forward.7} parent=31 // pred_check_branch
        %2557 = sbr.rel (%p2555) target = $region36
      $region35: #{inception_b_forward.7} parent=31 // pred_region
        %s2558 = smul.u32 32, %s14
      $region36: #{inception_b_forward.7} parent=31 // pred_fallthru
        _
    $region32: #{inception_b_forward.7} parent=5 // pred_fallthru
      _
    %p2559 = scmp.le.s32.totalorder 2, %s9
    // Predicated region
    $region37: #{inception_b_forward.7} parent=5 // pred_check
      %p2560 = pneg %p2559
    $region38: #{inception_b_forward.7} parent=5 // pred_check_branch
      %2562 = sbr.rel (%p2560) target = $region40
    $region39: #{inception_b_forward.7} parent=5 // pred_region
      %s2563 = ssub.s32 %s9, 2
      // Predicated region
      $region41: #{inception_b_forward.7} parent=39 // pred_check
        %p2564 = pneg %p106
      $region42: #{inception_b_forward.7} parent=39 // pred_check_branch
        %2566 = sbr.rel (%p2564) target = $region44
      $region43: #{inception_b_forward.7} parent=39 // pred_region
        %s2567 = smul.u32 32, %s15
        %p2568 = scmp.lt.s32.totalorder %s2567, 63
        %s2569 = scalar_select %p2568, %s2567, 63
        %s2570 = smul.addr %s2569, 4
        %s2571 = scalar_lea.vmem %s3, %s2570
      $region44: #{inception_b_forward.7} parent=39 // pred_fallthru
        _
    $region40: #{inception_b_forward.7} parent=5 // pred_fallthru
      _
  $region6: #{inception_b_forward.7} parent=0 // loop_footer
    %s13 = sadd.s32 1, %s9
  $region7: #{inception_b_forward.7} parent=0 // loop_footer_branch
    %8 = sbr.rel target = $region3
  $region8: #{inception_b_forward.7} parent=0 // loop_exit
    _

// kernel: inception_b_forward.8
$region0: #{inception_b_forward.8}
  #allocation0 [shape = 'u32[]', space=smem, size = 0x4, offset = 0x4, fixed_abs, tag = 'smem constant byte address 0x4 - core index']
  #allocation1 [shape = 'u32[72,128]{1,0:T(1,128)}', space=vmem, size = 0x9000, scoped, tag = 'internal scratch']
  %s0 = inlined_call_operand.vmem [shape: bf16[128,1152], index: 0, kind: input, shape index: {}]
  %s1 = inlined_call_operand.vmem [shape: bf16[1152,128], index: 1, kind: input, shape index: {}]
  %s2 = inlined_call_operand.vmem [shape: f32[1,128], index: 2, kind: input, shape index: {}]
  %s3 = inlined_call_operand.vmem [shape: f32[128,128], index: 3, kind: output, shape index: {}]
  %s4 = sld [smem:[#allocation0]]
  $region22: #{inception_b_forward.8} parent=0
    _
  %s6 = ssub.s32 1, %s4
  %s7 = scalar_select 0, %s6, %s4
  // Predicated region
  $region2: #{inception_b_forward.8} parent=0 // pred_check
    _
  $region3: #{inception_b_forward.8} parent=0 // pred_check_branch
    %9 = sbr.rel (0) target = $region5
  $region4: #{inception_b_forward.8} parent=0 // pred_region
    _
  $region5: #{inception_b_forward.8} parent=0 // pred_fallthru
    _
  // Predicated region
  $region6: #{inception_b_forward.8} parent=0 // pred_check
    _
  $region7: #{inception_b_forward.8} parent=0 // pred_check_branch
    %11 = sbr.rel (0) target = $region9
  $region8: #{inception_b_forward.8} parent=0 // pred_region
    _
  $region9: #{inception_b_forward.8} parent=0 // pred_fallthru
    _
  // Predicated region
  $region10: #{inception_b_forward.8} parent=0 // pred_check
    _
  $region11: #{inception_b_forward.8} parent=0 // pred_check_branch
    %13 = sbr.rel (0) target = $region13
  $region12: #{inception_b_forward.8} parent=0 // pred_region
    _
  $region13: #{inception_b_forward.8} parent=0 // pred_fallthru
    _
  %v14 = vld [vmem:[%s0] sm:$0xff]
  %v15 = vld [vmem:[%s0 + $0x8] sm:$0xff]
  %v16 = vld [vmem:[%s0 + $0x10] sm:$0xff]
  %v17 = vld [vmem:[%s0 + $0x18] sm:$0xff]
  %v18 = vld [vmem:[%s0 + $0x20] sm:$0xf]
  %v19 = vld [vmem:[%s0 + $0x24] sm:$0xff]
  %v20 = vld [vmem:[%s0 + $0x2c] sm:$0xff]
  %v21 = vld [vmem:[%s0 + $0x34] sm:$0xff]
  %v22 = vld [vmem:[%s0 + $0x3c] sm:$0xff]
  %v23 = vld [vmem:[%s0 + $0x44] sm:$0xf]
  %v24 = vld [vmem:[%s0 + $0x48] sm:$0xff]
  %v25 = vld [vmem:[%s0 + $0x50] sm:$0xff]
  %v26 = vld [vmem:[%s0 + $0x58] sm:$0xff]
  %v27 = vld [vmem:[%s0 + $0x60] sm:$0xff]
  %v28 = vld [vmem:[%s0 + $0x68] sm:$0xf]
  %v29 = vld [vmem:[%s0 + $0x6c] sm:$0xff]
  %v30 = vld [vmem:[%s0 + $0x74] sm:$0xff]
  %v31 = vld [vmem:[%s0 + $0x7c] sm:$0xff]
  %v32 = vld [vmem:[%s0 + $0x84] sm:$0xff]
  %v33 = vld [vmem:[%s0 + $0x8c] sm:$0xf]
  %v34 = vld [vmem:[%s0 + $0x90] sm:$0xff]
  %v35 = vld [vmem:[%s0 + $0x98] sm:$0xff]
  %v36 = vld [vmem:[%s0 + $0xa0] sm:$0xff]
  %v37 = vld [vmem:[%s0 + $0xa8] sm:$0xff]
  %v38 = vld [vmem:[%s0 + $0xb0] sm:$0xf]
  %v39 = vld [vmem:[%s0 + $0xb4] sm:$0xff]
  %v40 = vld [vmem:[%s0 + $0xbc] sm:$0xff]
  %v41 = vld [vmem:[%s0 + $0xc4] sm:$0xff]
  %v42 = vld [vmem:[%s0 + $0xcc] sm:$0xff]
  %v43 = vld [vmem:[%s0 + $0xd4] sm:$0xf]
  %v44 = vld [vmem:[%s0 + $0xd8] sm:$0xff]
  %v45 = vld [vmem:[%s0 + $0xe0] sm:$0xff]
  %v46 = vld [vmem:[%s0 + $0xe8] sm:$0xff]
  %v47 = vld [vmem:[%s0 + $0xf0] sm:$0xff]
  %v48 = vld [vmem:[%s0 + $0xf8] sm:$0xf]
  %v49 = vld [vmem:[%s0 + $0xfc] sm:$0xff]
  %v50 = vld [vmem:[%s0 + $0x104] sm:$0xff]
  %v51 = vld [vmem:[%s0 + $0x10c] sm:$0xff]
  %v52 = vld [vmem:[%s0 + $0x114] sm:$0xff]
  %v53 = vld [vmem:[%s0 + $0x11c] sm:$0xf]
  %v54 = vld [vmem:[%s0 + $0x120] sm:$0xff]
  %v55 = vld [vmem:[%s0 + $0x128] sm:$0xff]
  %v56 = vld [vmem:[%s0 + $0x130] sm:$0xff]
  %v57 = vld [vmem:[%s0 + $0x138] sm:$0xff]
  %v58 = vld [vmem:[%s0 + $0x140] sm:$0xf]
  %v59 = vld [vmem:[%s0 + $0x144] sm:$0xff]
  %v60 = vld [vmem:[%s0 + $0x14c] sm:$0xff]
  %v61 = vld [vmem:[%s0 + $0x154] sm:$0xff]
  %v62 = vld [vmem:[%s0 + $0x15c] sm:$0xff]
  %v63 = vld [vmem:[%s0 + $0x164] sm:$0xf]
  %v64 = vld [vmem:[%s0 + $0x168] sm:$0xff]
  %v65 = vld [vmem:[%s0 + $0x170] sm:$0xff]
  %v66 = vld [vmem:[%s0 + $0x178] sm:$0xff]
  %v67 = vld [vmem:[%s0 + $0x180] sm:$0xff]
  %v68 = vld [vmem:[%s0 + $0x188] sm:$0xf]
  %v69 = vld [vmem:[%s0 + $0x18c] sm:$0xff]
  %v70 = vld [vmem:[%s0 + $0x194] sm:$0xff]
  %v71 = vld [vmem:[%s0 + $0x19c] sm:$0xff]
  %v72 = vld [vmem:[%s0 + $0x1a4] sm:$0xff]
  %v73 = vld [vmem:[%s0 + $0x1ac] sm:$0xf]
  %v74 = vld [vmem:[%s0 + $0x1b0] sm:$0xff]
  %v75 = vld [vmem:[%s0 + $0x1b8] sm:$0xff]
  %v76 = vld [vmem:[%s0 + $0x1c0] sm:$0xff]
  %v77 = vld [vmem:[%s0 + $0x1c8] sm:$0xff]
  %v78 = vld [vmem:[%s0 + $0x1d0] sm:$0xf]
  %v79 = vld [vmem:[%s0 + $0x1d4] sm:$0xff]
  %v80 = vld [vmem:[%s0 + $0x1dc] sm:$0xff]
  %v81 = vld [vmem:[%s0 + $0x1e4] sm:$0xff]
  %v82 = vld [vmem:[%s0 + $0x1ec] sm:$0xff]
  %v83 = vld [vmem:[%s0 + $0x1f4] sm:$0xf]
  %v84 = vld [vmem:[%s0 + $0x1f8] sm:$0xff]
  %v85 = vld [vmem:[%s0 + $0x200] sm:$0xff]
  %v86 = vld [vmem:[%s0 + $0x208] sm:$0xff]
  %v87 = vld [vmem:[%s0 + $0x210] sm:$0xff]
  %v88 = vld [vmem:[%s0 + $0x218] sm:$0xf]
  %v89 = vld [vmem:[%s0 + $0x21c] sm:$0xff]
  %v90 = vld [vmem:[%s0 + $0x224] sm:$0xff]
  %v91 = vld [vmem:[%s0 + $0x22c] sm:$0xff]
  %v92 = vld [vmem:[%s0 + $0x234] sm:$0xff]
  %v93 = vld [vmem:[%s0 + $0x23c] sm:$0xf]
  %v94 = vld [vmem:[%s1] sm:$0xf]
  %v95 = vld [vmem:[%s1 + $0x4] sm:$0xf]
  %v96 = vld [vmem:[%s1 + $0x8] sm:$0xf]
  %v97 = vld [vmem:[%s1 + $0xc] sm:$0xf]
  %v98 = vld [vmem:[%s1 + $0x10] sm:$0xf]
  %v99 = vld [vmem:[%s1 + $0x14] sm:$0xf]
  %v100 = vld [vmem:[%s1 + $0x18] sm:$0xf]
  %v101 = vld [vmem:[%s1 + $0x1c] sm:$0xf]
  %v102 = vld [vmem:[%s1 + $0x20] sm:$0xf]
  %v103 = vld [vmem:[%s1 + $0x24] sm:$0xf]
  %v104 = vld [vmem:[%s1 + $0x28] sm:$0xf]
  %v105 = vld [vmem:[%s1 + $0x2c] sm:$0xf]
  %v106 = vld [vmem:[%s1 + $0x30] sm:$0xf]
  %v107 = vld [vmem:[%s1 + $0x34] sm:$0xf]
  %v108 = vld [vmem:[%s1 + $0x38] sm:$0xf]
  %v109 = vld [vmem:[%s1 + $0x3c] sm:$0xf]
  %v110 = vld [vmem:[%s1 + $0x40] sm:$0xf]
  %v111 = vld [vmem:[%s1 + $0x44] sm:$0xf]
  %v112 = vld [vmem:[%s1 + $0x48] sm:$0xf]
  %v113 = vld [vmem:[%s1 + $0x4c] sm:$0xf]
  %v114 = vld [vmem:[%s1 + $0x50] sm:$0xf]
  %v115 = vld [vmem:[%s1 + $0x54] sm:$0xf]
  %v116 = vld [vmem:[%s1 + $0x58] sm:$0xf]
  %v117 = vld [vmem:[%s1 + $0x5c] sm:$0xf]
  %v118 = vld [vmem:[%s1 + $0x60] sm:$0xf]
  %v119 = vld [vmem:[%s1 + $0x64] sm:$0xf]
  %v120 = vld [vmem:[%s1 + $0x68] sm:$0xf]
  %v121 = vld [vmem:[%s1 + $0x6c] sm:$0xf]
  %v122 = vld [vmem:[%s1 + $0x70] sm:$0xf]
  %v123 = vld [vmem:[%s1 + $0x74] sm:$0xf]
  %v124 = vld [vmem:[%s1 + $0x78] sm:$0xf]
  %v125 = vld [vmem:[%s1 + $0x7c] sm:$0xf]
  %v126 = vld [vmem:[%s1 + $0x80] sm:$0xf]
  %v127 = vld [vmem:[%s1 + $0x84] sm:$0xf]
  %v128 = vld [vmem:[%s1 + $0x88] sm:$0xf]
  %v129 = vld [vmem:[%s1 + $0x8c] sm:$0xf]
  %v130 = vld [vmem:[%s1 + $0x90] sm:$0xf]
  %v131 = vld [vmem:[%s1 + $0x94] sm:$0xf]
  %v132 = vld [vmem:[%s1 + $0x98] sm:$0xf]
  %v133 = vld [vmem:[%s1 + $0x9c] sm:$0xf]
  %v134 = vld [vmem:[%s1 + $0xa0] sm:$0xf]
  %v135 = vld [vmem:[%s1 + $0xa4] sm:$0xf]
  %v136 = vld [vmem:[%s1 + $0xa8] sm:$0xf]
  %v137 = vld [vmem:[%s1 + $0xac] sm:$0xf]
  %v138 = vld [vmem:[%s1 + $0xb0] sm:$0xf]
  %v139 = vld [vmem:[%s1 + $0xb4] sm:$0xf]
  %v140 = vld [vmem:[%s1 + $0xb8] sm:$0xf]
  %v141 = vld [vmem:[%s1 + $0xbc] sm:$0xf]
  %v142 = vld [vmem:[%s1 + $0xc0] sm:$0xf]
  %v143 = vld [vmem:[%s1 + $0xc4] sm:$0xf]
  %v144 = vld [vmem:[%s1 + $0xc8] sm:$0xf]
  %v145 = vld [vmem:[%s1 + $0xcc] sm:$0xf]
  %v146 = vld [vmem:[%s1 + $0xd0] sm:$0xf]
  %v147 = vld [vmem:[%s1 + $0xd4] sm:$0xf]
  %v148 = vld [vmem:[%s1 + $0xd8] sm:$0xf]
  %v149 = vld [vmem:[%s1 + $0xdc] sm:$0xf]
  %v150 = vld [vmem:[%s1 + $0xe0] sm:$0xf]
  %v151 = vld [vmem:[%s1 + $0xe4] sm:$0xf]
  %v152 = vld [vmem:[%s1 + $0xe8] sm:$0xf]
  %v153 = vld [vmem:[%s1 + $0xec] sm:$0xf]
  %v154 = vld [vmem:[%s1 + $0xf0] sm:$0xf]
  %v155 = vld [vmem:[%s1 + $0xf4] sm:$0xf]
  %v156 = vld [vmem:[%s1 + $0xf8] sm:$0xf]
  %v157 = vld [vmem:[%s1 + $0xfc] sm:$0xf]
  %v158 = vld [vmem:[%s1 + $0x100] sm:$0xf]
  %v159 = vld [vmem:[%s1 + $0x104] sm:$0xf]
  %v160 = vld [vmem:[%s1 + $0x108] sm:$0xf]
  %v161 = vld [vmem:[%s1 + $0x10c] sm:$0xf]
  %v162 = vld [vmem:[%s1 + $0x110] sm:$0xf]
  %v163 = vld [vmem:[%s1 + $0x114] sm:$0xf]
  %v164 = vld [vmem:[%s1 + $0x118] sm:$0xf]
  %v165 = vld [vmem:[%s1 + $0x11c] sm:$0xf]
  %v166 = vld [vmem:[%s1 + $0x120] sm:$0xf]
  %v167 = vld [vmem:[%s1 + $0x124] sm:$0xf]
  %v168 = vld [vmem:[%s1 + $0x128] sm:$0xf]
  %v169 = vld [vmem:[%s1 + $0x12c] sm:$0xf]
  %v170 = vld [vmem:[%s1 + $0x130] sm:$0xf]
  %v171 = vld [vmem:[%s1 + $0x134] sm:$0xf]
  %v172 = vld [vmem:[%s1 + $0x138] sm:$0xf]
  %v173 = vld [vmem:[%s1 + $0x13c] sm:$0xf]
  %v174 = vld [vmem:[%s1 + $0x140] sm:$0xf]
  %v175 = vld [vmem:[%s1 + $0x144] sm:$0xf]
  %v176 = vld [vmem:[%s1 + $0x148] sm:$0xf]
  %v177 = vld [vmem:[%s1 + $0x14c] sm:$0xf]
  %v178 = vld [vmem:[%s1 + $0x150] sm:$0xf]
  %v179 = vld [vmem:[%s1 + $0x154] sm:$0xf]
  %v180 = vld [vmem:[%s1 + $0x158] sm:$0xf]
  %v181 = vld [vmem:[%s1 + $0x15c] sm:$0xf]
  %v182 = vld [vmem:[%s1 + $0x160] sm:$0xf]
  %v183 = vld [vmem:[%s1 + $0x164] sm:$0xf]
  %v184 = vld [vmem:[%s1 + $0x168] sm:$0xf]
  %v185 = vld [vmem:[%s1 + $0x16c] sm:$0xf]
  %v186 = vld [vmem:[%s1 + $0x170] sm:$0xf]
  %v187 = vld [vmem:[%s1 + $0x174] sm:$0xf]
  %v188 = vld [vmem:[%s1 + $0x178] sm:$0xf]
  %v189 = vld [vmem:[%s1 + $0x17c] sm:$0xf]
  %v190 = vld [vmem:[%s1 + $0x180] sm:$0xf]
  %v191 = vld [vmem:[%s1 + $0x184] sm:$0xf]
  %v192 = vld [vmem:[%s1 + $0x188] sm:$0xf]
  %v193 = vld [vmem:[%s1 + $0x18c] sm:$0xf]
  %v194 = vld [vmem:[%s1 + $0x190] sm:$0xf]
  %v195 = vld [vmem:[%s1 + $0x194] sm:$0xf]
  %v196 = vld [vmem:[%s1 + $0x198] sm:$0xf]
  %v197 = vld [vmem:[%s1 + $0x19c] sm:$0xf]
  %v198 = vld [vmem:[%s1 + $0x1a0] sm:$0xf]
  %v199 = vld [vmem:[%s1 + $0x1a4] sm:$0xf]
  %v200 = vld [vmem:[%s1 + $0x1a8] sm:$0xf]
  %v201 = vld [vmem:[%s1 + $0x1ac] sm:$0xf]
  %v202 = vld [vmem:[%s1 + $0x1b0] sm:$0xf]
  %v203 = vld [vmem:[%s1 + $0x1b4] sm:$0xf]
  %v204 = vld [vmem:[%s1 + $0x1b8] sm:$0xf]
  %v205 = vld [vmem:[%s1 + $0x1bc] sm:$0xf]
  %v206 = vld [vmem:[%s1 + $0x1c0] sm:$0xf]
  %v207 = vld [vmem:[%s1 + $0x1c4] sm:$0xf]
  %v208 = vld [vmem:[%s1 + $0x1c8] sm:$0xf]
  %v209 = vld [vmem:[%s1 + $0x1cc] sm:$0xf]
  %v210 = vld [vmem:[%s1 + $0x1d0] sm:$0xf]
  %v211 = vld [vmem:[%s1 + $0x1d4] sm:$0xf]
  %v212 = vld [vmem:[%s1 + $0x1d8] sm:$0xf]
  %v213 = vld [vmem:[%s1 + $0x1dc] sm:$0xf]
  %v214 = vld [vmem:[%s1 + $0x1e0] sm:$0xf]
  %v215 = vld [vmem:[%s1 + $0x1e4] sm:$0xf]
  %v216 = vld [vmem:[%s1 + $0x1e8] sm:$0xf]
  %v217 = vld [vmem:[%s1 + $0x1ec] sm:$0xf]
  %v218 = vld [vmem:[%s1 + $0x1f0] sm:$0xf]
  %v219 = vld [vmem:[%s1 + $0x1f4] sm:$0xf]
  %v220 = vld [vmem:[%s1 + $0x1f8] sm:$0xf]
  %v221 = vld [vmem:[%s1 + $0x1fc] sm:$0xf]
  %v222 = vld [vmem:[%s1 + $0x200] sm:$0xf]
  %v223 = vld [vmem:[%s1 + $0x204] sm:$0xf]
  %v224 = vld [vmem:[%s1 + $0x208] sm:$0xf]
  %v225 = vld [vmem:[%s1 + $0x20c] sm:$0xf]
  %v226 = vld [vmem:[%s1 + $0x210] sm:$0xf]
  %v227 = vld [vmem:[%s1 + $0x214] sm:$0xf]
  %v228 = vld [vmem:[%s1 + $0x218] sm:$0xf]
  %v229 = vld [vmem:[%s1 + $0x21c] sm:$0xf]
  %v230 = vld [vmem:[%s1 + $0x220] sm:$0xf]
  %v231 = vld [vmem:[%s1 + $0x224] sm:$0xf]
  %v232 = vld [vmem:[%s1 + $0x228] sm:$0xf]
  %v233 = vld [vmem:[%s1 + $0x22c] sm:$0xf]
  %v234 = vld [vmem:[%s1 + $0x230] sm:$0xf]
  %v235 = vld [vmem:[%s1 + $0x234] sm:$0xf]
  %v236 = vld [vmem:[%s1 + $0x238] sm:$0xf]
  %v237 = vld [vmem:[%s1 + $0x23c] sm:$0xf]
  %v238 = vld [vmem:[%s2] sm:$0x1]
  %v240 = vperm.slane %v238, 0
  %v322 = vunpack.c.l.b16 %v14
  %v323 = vunpack.c.h.b16 %v14
  %v324 = vunpack.c.l.b16 %v15
  %v325 = vunpack.c.h.b16 %v15
  %v326 = vunpack.c.l.b16 %v16
  %v327 = vunpack.c.h.b16 %v16
  %v328 = vunpack.c.l.b16 %v17
  %v329 = vunpack.c.h.b16 %v17
  %v330 = vunpack.c.l.b16 %v18
  %v331 = vunpack.c.l.b16 %v19
  %v332 = vunpack.c.h.b16 %v19
  %v333 = vunpack.c.l.b16 %v20
  %v334 = vunpack.c.h.b16 %v20
  %v335 = vunpack.c.l.b16 %v21
  %v336 = vunpack.c.h.b16 %v21
  %v337 = vunpack.c.l.b16 %v22
  %v338 = vunpack.c.h.b16 %v22
  %v339 = vunpack.c.l.b16 %v23
  %v340 = vunpack.c.l.b16 %v24
  %v341 = vunpack.c.h.b16 %v24
  %v342 = vunpack.c.l.b16 %v25
  %v343 = vunpack.c.h.b16 %v25
  %v344 = vunpack.c.l.b16 %v26
  %v345 = vunpack.c.h.b16 %v26
  %v346 = vunpack.c.l.b16 %v27
  %v347 = vunpack.c.h.b16 %v27
  %v348 = vunpack.c.l.b16 %v28
  %v349 = vunpack.c.l.b16 %v29
  %v350 = vunpack.c.h.b16 %v29
  %v351 = vunpack.c.l.b16 %v30
  %v352 = vunpack.c.h.b16 %v30
  %v353 = vunpack.c.l.b16 %v31
  %v354 = vunpack.c.h.b16 %v31
  %v355 = vunpack.c.l.b16 %v32
  %v356 = vunpack.c.h.b16 %v32
  %v357 = vunpack.c.l.b16 %v33
  %v358 = vunpack.c.l.b16 %v34
  %v359 = vunpack.c.h.b16 %v34
  %v360 = vunpack.c.l.b16 %v35
  %v361 = vunpack.c.h.b16 %v35
  %v362 = vunpack.c.l.b16 %v36
  %v363 = vunpack.c.h.b16 %v36
  %v364 = vunpack.c.l.b16 %v37
  %v365 = vunpack.c.h.b16 %v37
  %v366 = vunpack.c.l.b16 %v38
  %v367 = vunpack.c.l.b16 %v39
  %v368 = vunpack.c.h.b16 %v39
  %v369 = vunpack.c.l.b16 %v40
  %v370 = vunpack.c.h.b16 %v40
  %v371 = vunpack.c.l.b16 %v41
  %v372 = vunpack.c.h.b16 %v41
  %v373 = vunpack.c.l.b16 %v42
  %v374 = vunpack.c.h.b16 %v42
  %v375 = vunpack.c.l.b16 %v43
  %v376 = vunpack.c.l.b16 %v44
  %v377 = vunpack.c.h.b16 %v44
  %v378 = vunpack.c.l.b16 %v45
  %v379 = vunpack.c.h.b16 %v45
  %v380 = vunpack.c.l.b16 %v46
  %v381 = vunpack.c.h.b16 %v46
  %v382 = vunpack.c.l.b16 %v47
  %v383 = vunpack.c.h.b16 %v47
  %v384 = vunpack.c.l.b16 %v48
  %v385 = vunpack.c.l.b16 %v49
  %v386 = vunpack.c.h.b16 %v49
  %v387 = vunpack.c.l.b16 %v50
  %v388 = vunpack.c.h.b16 %v50
  %v389 = vunpack.c.l.b16 %v51
  %v390 = vunpack.c.h.b16 %v51
  %v391 = vunpack.c.l.b16 %v52
  %v392 = vunpack.c.h.b16 %v52
  %v393 = vunpack.c.l.b16 %v53
  %v394 = vunpack.c.l.b16 %v54
  %v395 = vunpack.c.h.b16 %v54
  %v396 = vunpack.c.l.b16 %v55
  %v397 = vunpack.c.h.b16 %v55
  %v398 = vunpack.c.l.b16 %v56
  %v399 = vunpack.c.h.b16 %v56
  %v400 = vunpack.c.l.b16 %v57
  %v401 = vunpack.c.h.b16 %v57
  %v402 = vunpack.c.l.b16 %v58
  %v403 = vunpack.c.l.b16 %v59
  %v404 = vunpack.c.h.b16 %v59
  %v405 = vunpack.c.l.b16 %v60
  %v406 = vunpack.c.h.b16 %v60
  %v407 = vunpack.c.l.b16 %v61
  %v408 = vunpack.c.h.b16 %v61
  %v409 = vunpack.c.l.b16 %v62
  %v410 = vunpack.c.h.b16 %v62
  %v411 = vunpack.c.l.b16 %v63
  %v412 = vunpack.c.l.b16 %v64
  %v413 = vunpack.c.h.b16 %v64
  %v414 = vunpack.c.l.b16 %v65
  %v415 = vunpack.c.h.b16 %v65
  %v416 = vunpack.c.l.b16 %v66
  %v417 = vunpack.c.h.b16 %v66
  %v418 = vunpack.c.l.b16 %v67
  %v419 = vunpack.c.h.b16 %v67
  %v420 = vunpack.c.l.b16 %v68
  %v421 = vunpack.c.l.b16 %v69
  %v422 = vunpack.c.h.b16 %v69
  %v423 = vunpack.c.l.b16 %v70
  %v424 = vunpack.c.h.b16 %v70
  %v425 = vunpack.c.l.b16 %v71
  %v426 = vunpack.c.h.b16 %v71
  %v427 = vunpack.c.l.b16 %v72
  %v428 = vunpack.c.h.b16 %v72
  %v429 = vunpack.c.l.b16 %v73
  %v430 = vunpack.c.l.b16 %v74
  %v431 = vunpack.c.h.b16 %v74
  %v432 = vunpack.c.l.b16 %v75
  %v433 = vunpack.c.h.b16 %v75
  %v434 = vunpack.c.l.b16 %v76
  %v435 = vunpack.c.h.b16 %v76
  %v436 = vunpack.c.l.b16 %v77
  %v437 = vunpack.c.h.b16 %v77
  %v438 = vunpack.c.l.b16 %v78
  %v439 = vunpack.c.l.b16 %v79
  %v440 = vunpack.c.h.b16 %v79
  %v441 = vunpack.c.l.b16 %v80
  %v442 = vunpack.c.h.b16 %v80
  %v443 = vunpack.c.l.b16 %v81
  %v444 = vunpack.c.h.b16 %v81
  %v445 = vunpack.c.l.b16 %v82
  %v446 = vunpack.c.h.b16 %v82
  %v447 = vunpack.c.l.b16 %v83
  %v448 = vunpack.c.l.b16 %v84
  %v449 = vunpack.c.h.b16 %v84
  %v450 = vunpack.c.l.b16 %v85
  %v451 = vunpack.c.h.b16 %v85
  %v452 = vunpack.c.l.b16 %v86
  %v453 = vunpack.c.h.b16 %v86
  %v454 = vunpack.c.l.b16 %v87
  %v455 = vunpack.c.h.b16 %v87
  %v456 = vunpack.c.l.b16 %v88
  %v457 = vunpack.c.l.b16 %v89
  %v458 = vunpack.c.h.b16 %v89
  %v459 = vunpack.c.l.b16 %v90
  %v460 = vunpack.c.h.b16 %v90
  %v461 = vunpack.c.l.b16 %v91
  %v462 = vunpack.c.h.b16 %v91
  %v463 = vunpack.c.l.b16 %v92
  %v464 = vunpack.c.h.b16 %v92
  %v465 = vunpack.c.l.b16 %v93
  %v466 = vpack.c.b16 %v331, %v322
  %v467 = vpack.c.b16 %v332, %v323
  %v468 = vpack.c.b16 %v333, %v324
  %v469 = vpack.c.b16 %v334, %v325
  %v470 = vpack.c.b16 %v335, %v326
  %v471 = vpack.c.b16 %v336, %v327
  %v472 = vpack.c.b16 %v337, %v328
  %v473 = vpack.c.b16 %v338, %v329
  %v474 = vpack.c.b16 %v339, %v330
  %v475 = vpack.c.b16 %v349, %v340
  %v476 = vpack.c.b16 %v350, %v341
  %v477 = vpack.c.b16 %v351, %v342
  %v478 = vpack.c.b16 %v352, %v343
  %v479 = vpack.c.b16 %v353, %v344
  %v480 = vpack.c.b16 %v354, %v345
  %v481 = vpack.c.b16 %v355, %v346
  %v482 = vpack.c.b16 %v356, %v347
  %v483 = vpack.c.b16 %v357, %v348
  %v484 = vpack.c.b16 %v367, %v358
  %v485 = vpack.c.b16 %v368, %v359
  %v486 = vpack.c.b16 %v369, %v360
  %v487 = vpack.c.b16 %v370, %v361
  %v488 = vpack.c.b16 %v371, %v362
  %v489 = vpack.c.b16 %v372, %v363
  %v490 = vpack.c.b16 %v373, %v364
  %v491 = vpack.c.b16 %v374, %v365
  %v492 = vpack.c.b16 %v375, %v366
  %v493 = vpack.c.b16 %v385, %v376
  %v494 = vpack.c.b16 %v386, %v377
  %v495 = vpack.c.b16 %v387, %v378
  %v496 = vpack.c.b16 %v388, %v379
  %v497 = vpack.c.b16 %v389, %v380
  %v498 = vpack.c.b16 %v390, %v381
  %v499 = vpack.c.b16 %v391, %v382
  %v500 = vpack.c.b16 %v392, %v383
  %v501 = vpack.c.b16 %v393, %v384
  %v502 = vpack.c.b16 %v403, %v394
  %v503 = vpack.c.b16 %v404, %v395
  %v504 = vpack.c.b16 %v405, %v396
  %v505 = vpack.c.b16 %v406, %v397
  %v506 = vpack.c.b16 %v407, %v398
  %v507 = vpack.c.b16 %v408, %v399
  %v508 = vpack.c.b16 %v409, %v400
  %v509 = vpack.c.b16 %v410, %v401
  %v510 = vpack.c.b16 %v411, %v402
  %v511 = vpack.c.b16 %v421, %v412
  %v512 = vpack.c.b16 %v422, %v413
  %v513 = vpack.c.b16 %v423, %v414
  %v514 = vpack.c.b16 %v424, %v415
  %v515 = vpack.c.b16 %v425, %v416
  %v516 = vpack.c.b16 %v426, %v417
  %v517 = vpack.c.b16 %v427, %v418
  %v518 = vpack.c.b16 %v428, %v419
  %v519 = vpack.c.b16 %v429, %v420
  %v520 = vpack.c.b16 %v439, %v430
  %v521 = vpack.c.b16 %v440, %v431
  %v522 = vpack.c.b16 %v441, %v432
  %v523 = vpack.c.b16 %v442, %v433
  %v524 = vpack.c.b16 %v443, %v434
  %v525 = vpack.c.b16 %v444, %v435
  %v526 = vpack.c.b16 %v445, %v436
  %v527 = vpack.c.b16 %v446, %v437
  %v528 = vpack.c.b16 %v447, %v438
  %v529 = vpack.c.b16 %v457, %v448
  %v530 = vpack.c.b16 %v458, %v449
  %v531 = vpack.c.b16 %v459, %v450
  %v532 = vpack.c.b16 %v460, %v451
  %v533 = vpack.c.b16 %v461, %v452
  %v534 = vpack.c.b16 %v462, %v453
  %v535 = vpack.c.b16 %v463, %v454
  %v536 = vpack.c.b16 %v464, %v455
  %v537 = vpack.c.b16 %v465, %v456
  %v754 = vunpack.c.l.b16 %v94
  %v755 = vunpack.c.l.b16 %v95
  %v756 = vunpack.c.l.b16 %v96
  %v757 = vunpack.c.l.b16 %v97
  %v758 = vunpack.c.l.b16 %v98
  %v759 = vunpack.c.l.b16 %v99
  %v760 = vunpack.c.l.b16 %v100
  %v761 = vunpack.c.l.b16 %v101
  %v762 = vunpack.c.l.b16 %v102
  %v763 = vunpack.c.l.b16 %v103
  %v764 = vunpack.c.l.b16 %v104
  %v765 = vunpack.c.l.b16 %v105
  %v766 = vunpack.c.l.b16 %v106
  %v767 = vunpack.c.l.b16 %v107
  %v768 = vunpack.c.l.b16 %v108
  %v769 = vunpack.c.l.b16 %v109
  %v770 = vunpack.c.l.b16 %v110
  %v771 = vunpack.c.l.b16 %v111
  %v772 = vunpack.c.l.b16 %v112
  %v773 = vunpack.c.l.b16 %v113
  %v774 = vunpack.c.l.b16 %v114
  %v775 = vunpack.c.l.b16 %v115
  %v776 = vunpack.c.l.b16 %v116
  %v777 = vunpack.c.l.b16 %v117
  %v778 = vunpack.c.l.b16 %v118
  %v779 = vunpack.c.l.b16 %v119
  %v780 = vunpack.c.l.b16 %v120
  %v781 = vunpack.c.l.b16 %v121
  %v782 = vunpack.c.l.b16 %v122
  %v783 = vunpack.c.l.b16 %v123
  %v784 = vunpack.c.l.b16 %v124
  %v785 = vunpack.c.l.b16 %v125
  %v786 = vunpack.c.l.b16 %v126
  %v787 = vunpack.c.l.b16 %v127
  %v788 = vunpack.c.l.b16 %v128
  %v789 = vunpack.c.l.b16 %v129
  %v790 = vunpack.c.l.b16 %v130
  %v791 = vunpack.c.l.b16 %v131
  %v792 = vunpack.c.l.b16 %v132
  %v793 = vunpack.c.l.b16 %v133
  %v794 = vunpack.c.l.b16 %v134
  %v795 = vunpack.c.l.b16 %v135
  %v796 = vunpack.c.l.b16 %v136
  %v797 = vunpack.c.l.b16 %v137
  %v798 = vunpack.c.l.b16 %v138
  %v799 = vunpack.c.l.b16 %v139
  %v800 = vunpack.c.l.b16 %v140
  %v801 = vunpack.c.l.b16 %v141
  %v802 = vunpack.c.l.b16 %v142
  %v803 = vunpack.c.l.b16 %v143
  %v804 = vunpack.c.l.b16 %v144
  %v805 = vunpack.c.l.b16 %v145
  %v806 = vunpack.c.l.b16 %v146
  %v807 = vunpack.c.l.b16 %v147
  %v808 = vunpack.c.l.b16 %v148
  %v809 = vunpack.c.l.b16 %v149
  %v810 = vunpack.c.l.b16 %v150
  %v811 = vunpack.c.l.b16 %v151
  %v812 = vunpack.c.l.b16 %v152
  %v813 = vunpack.c.l.b16 %v153
  %v814 = vunpack.c.l.b16 %v154
  %v815 = vunpack.c.l.b16 %v155
  %v816 = vunpack.c.l.b16 %v156
  %v817 = vunpack.c.l.b16 %v157
  %v818 = vunpack.c.l.b16 %v158
  %v819 = vunpack.c.l.b16 %v159
  %v820 = vunpack.c.l.b16 %v160
  %v821 = vunpack.c.l.b16 %v161
  %v822 = vunpack.c.l.b16 %v162
  %v823 = vunpack.c.l.b16 %v163
  %v824 = vunpack.c.l.b16 %v164
  %v825 = vunpack.c.l.b16 %v165
  %v826 = vunpack.c.l.b16 %v166
  %v827 = vunpack.c.l.b16 %v167
  %v828 = vunpack.c.l.b16 %v168
  %v829 = vunpack.c.l.b16 %v169
  %v830 = vunpack.c.l.b16 %v170
  %v831 = vunpack.c.l.b16 %v171
  %v832 = vunpack.c.l.b16 %v172
  %v833 = vunpack.c.l.b16 %v173
  %v834 = vunpack.c.l.b16 %v174
  %v835 = vunpack.c.l.b16 %v175
  %v836 = vunpack.c.l.b16 %v176
  %v837 = vunpack.c.l.b16 %v177
  %v838 = vunpack.c.l.b16 %v178
  %v839 = vunpack.c.l.b16 %v179
  %v840 = vunpack.c.l.b16 %v180
  %v841 = vunpack.c.l.b16 %v181
  %v842 = vunpack.c.l.b16 %v182
  %v843 = vunpack.c.l.b16 %v183
  %v844 = vunpack.c.l.b16 %v184
  %v845 = vunpack.c.l.b16 %v185
  %v846 = vunpack.c.l.b16 %v186
  %v847 = vunpack.c.l.b16 %v187
  %v848 = vunpack.c.l.b16 %v188
  %v849 = vunpack.c.l.b16 %v189
  %v850 = vunpack.c.l.b16 %v190
  %v851 = vunpack.c.l.b16 %v191
  %v852 = vunpack.c.l.b16 %v192
  %v853 = vunpack.c.l.b16 %v193
  %v854 = vunpack.c.l.b16 %v194
  %v855 = vunpack.c.l.b16 %v195
  %v856 = vunpack.c.l.b16 %v196
  %v857 = vunpack.c.l.b16 %v197
  %v858 = vunpack.c.l.b16 %v198
  %v859 = vunpack.c.l.b16 %v199
  %v860 = vunpack.c.l.b16 %v200
  %v861 = vunpack.c.l.b16 %v201
  %v862 = vunpack.c.l.b16 %v202
  %v863 = vunpack.c.l.b16 %v203
  %v864 = vunpack.c.l.b16 %v204
  %v865 = vunpack.c.l.b16 %v205
  %v866 = vunpack.c.l.b16 %v206
  %v867 = vunpack.c.l.b16 %v207
  %v868 = vunpack.c.l.b16 %v208
  %v869 = vunpack.c.l.b16 %v209
  %v870 = vunpack.c.l.b16 %v210
  %v871 = vunpack.c.l.b16 %v211
  %v872 = vunpack.c.l.b16 %v212
  %v873 = vunpack.c.l.b16 %v213
  %v874 = vunpack.c.l.b16 %v214
  %v875 = vunpack.c.l.b16 %v215
  %v876 = vunpack.c.l.b16 %v216
  %v877 = vunpack.c.l.b16 %v217
  %v878 = vunpack.c.l.b16 %v218
  %v879 = vunpack.c.l.b16 %v219
  %v880 = vunpack.c.l.b16 %v220
  %v881 = vunpack.c.l.b16 %v221
  %v882 = vunpack.c.l.b16 %v222
  %v883 = vunpack.c.l.b16 %v223
  %v884 = vunpack.c.l.b16 %v224
  %v885 = vunpack.c.l.b16 %v225
  %v886 = vunpack.c.l.b16 %v226
  %v887 = vunpack.c.l.b16 %v227
  %v888 = vunpack.c.l.b16 %v228
  %v889 = vunpack.c.l.b16 %v229
  %v890 = vunpack.c.l.b16 %v230
  %v891 = vunpack.c.l.b16 %v231
  %v892 = vunpack.c.l.b16 %v232
  %v893 = vunpack.c.l.b16 %v233
  %v894 = vunpack.c.l.b16 %v234
  %v895 = vunpack.c.l.b16 %v235
  %v896 = vunpack.c.l.b16 %v236
  %v897 = vunpack.c.l.b16 %v237
  %v898 = vpack.c.b16 %v755, %v754
  %v899 = vpack.c.b16 %v757, %v756
  %v900 = vpack.c.b16 %v759, %v758
  %v901 = vpack.c.b16 %v761, %v760
  %v902 = vpack.c.b16 %v763, %v762
  %v903 = vpack.c.b16 %v765, %v764
  %v904 = vpack.c.b16 %v767, %v766
  %v905 = vpack.c.b16 %v769, %v768
  %v906 = vpack.c.b16 %v771, %v770
  %v907 = vpack.c.b16 %v773, %v772
  %v908 = vpack.c.b16 %v775, %v774
  %v909 = vpack.c.b16 %v777, %v776
  %v910 = vpack.c.b16 %v779, %v778
  %v911 = vpack.c.b16 %v781, %v780
  %v912 = vpack.c.b16 %v783, %v782
  %v913 = vpack.c.b16 %v785, %v784
  %v914 = vpack.c.b16 %v787, %v786
  %v915 = vpack.c.b16 %v789, %v788
  %v916 = vpack.c.b16 %v791, %v790
  %v917 = vpack.c.b16 %v793, %v792
  %v918 = vpack.c.b16 %v795, %v794
  %v919 = vpack.c.b16 %v797, %v796
  %v920 = vpack.c.b16 %v799, %v798
  %v921 = vpack.c.b16 %v801, %v800
  %v922 = vpack.c.b16 %v803, %v802
  %v923 = vpack.c.b16 %v805, %v804
  %v924 = vpack.c.b16 %v807, %v806
  %v925 = vpack.c.b16 %v809, %v808
  %v926 = vpack.c.b16 %v811, %v810
  %v927 = vpack.c.b16 %v813, %v812
  %v928 = vpack.c.b16 %v815, %v814
  %v929 = vpack.c.b16 %v817, %v816
  %v930 = vpack.c.b16 %v819, %v818
  %v931 = vpack.c.b16 %v821, %v820
  %v932 = vpack.c.b16 %v823, %v822
  %v933 = vpack.c.b16 %v825, %v824
  %v934 = vpack.c.b16 %v827, %v826
  %v935 = vpack.c.b16 %v829, %v828
  %v936 = vpack.c.b16 %v831, %v830
  %v937 = vpack.c.b16 %v833, %v832
  %v938 = vpack.c.b16 %v835, %v834
  %v939 = vpack.c.b16 %v837, %v836
  %v940 = vpack.c.b16 %v839, %v838
  %v941 = vpack.c.b16 %v841, %v840
  %v942 = vpack.c.b16 %v843, %v842
  %v943 = vpack.c.b16 %v845, %v844
  %v944 = vpack.c.b16 %v847, %v846
  %v945 = vpack.c.b16 %v849, %v848
  %v946 = vpack.c.b16 %v851, %v850
  %v947 = vpack.c.b16 %v853, %v852
  %v948 = vpack.c.b16 %v855, %v854
  %v949 = vpack.c.b16 %v857, %v856
  %v950 = vpack.c.b16 %v859, %v858
  %v951 = vpack.c.b16 %v861, %v860
  %v952 = vpack.c.b16 %v863, %v862
  %v953 = vpack.c.b16 %v865, %v864
  %v954 = vpack.c.b16 %v867, %v866
  %v955 = vpack.c.b16 %v869, %v868
  %v956 = vpack.c.b16 %v871, %v870
  %v957 = vpack.c.b16 %v873, %v872
  %v958 = vpack.c.b16 %v875, %v874
  %v959 = vpack.c.b16 %v877, %v876
  %v960 = vpack.c.b16 %v879, %v878
  %v961 = vpack.c.b16 %v881, %v880
  %v962 = vpack.c.b16 %v883, %v882
  %v963 = vpack.c.b16 %v885, %v884
  %v964 = vpack.c.b16 %v887, %v886
  %v965 = vpack.c.b16 %v889, %v888
  %v966 = vpack.c.b16 %v891, %v890
  %v967 = vpack.c.b16 %v893, %v892
  %v968 = vpack.c.b16 %v895, %v894
  %v969 = vpack.c.b16 %v897, %v896
  %1042 = vmatpush.bf16.msra.mxu0 %v905
  %1043 = vmatpush.bf16.msra.mxu0 %v904
  %1044 = vmatpush.bf16.msra.mxu0 %v903
  %1045 = vmatpush.bf16.msra.mxu0 %v902
  %1046 = vmatpush.bf16.msra.mxu0 %v901
  %1047 = vmatpush.bf16.msra.mxu0 %v900
  %1048 = vmatpush.bf16.msra.mxu0 %v899
  %1049 = vmatpush.bf16.msra.mxu0 %v898
  %1050 = vmatmul.bf16.gmra.mxu0 %v466
  %v1051 = vpop.f32.mrf.mxu0
  %v1052 = vadd.f32 %v240, %v1051
  %v1053 = vpop.f32.mrf.mxu0
  %v1054 = vadd.f32 %v240, %v1053
  %1055 = vmatmul.bf16.gmra.mxu0 %v475
  %v1056 = vpop.f32.mrf.mxu0
  %v1057 = vadd.f32 %v240, %v1056
  %v1058 = vpop.f32.mrf.mxu0
  %v1059 = vadd.f32 %v240, %v1058
  %1060 = vmatmul.bf16.gmra.mxu0 %v484
  %v1061 = vpop.f32.mrf.mxu0
  %v1062 = vadd.f32 %v240, %v1061
  %v1063 = vpop.f32.mrf.mxu0
  %v1064 = vadd.f32 %v240, %v1063
  %1065 = vmatmul.bf16.gmra.mxu0 %v493
  %v1066 = vpop.f32.mrf.mxu0
  %v1067 = vadd.f32 %v240, %v1066
  %v1068 = vpop.f32.mrf.mxu0
  %v1069 = vadd.f32 %v240, %v1068
  %1070 = vmatmul.bf16.gmra.mxu0 %v502
  %v1071 = vpop.f32.mrf.mxu0
  %v1072 = vadd.f32 %v240, %v1071
  %v1073 = vpop.f32.mrf.mxu0
  %v1074 = vadd.f32 %v240, %v1073
  %1075 = vmatmul.bf16.gmra.mxu0 %v511
  %v1076 = vpop.f32.mrf.mxu0
  %v1077 = vadd.f32 %v240, %v1076
  %v1078 = vpop.f32.mrf.mxu0
  %v1079 = vadd.f32 %v240, %v1078
  %1080 = vmatmul.bf16.gmra.mxu0 %v520
  %v1081 = vpop.f32.mrf.mxu0
  %v1082 = vadd.f32 %v240, %v1081
  %v1083 = vpop.f32.mrf.mxu0
  %v1084 = vadd.f32 %v240, %v1083
  %1085 = vmatmul.bf16.gmra.mxu0 %v529
  %v1086 = vpop.f32.mrf.mxu0
  %v1087 = vadd.f32 %v240, %v1086
  %v1088 = vpop.f32.mrf.mxu0
  %v1089 = vadd.f32 %v240, %v1088
  %1090 = vdwg.mxu0
  %1091 = vmatpush.bf16.msra.mxu0 %v913
  %1092 = vmatpush.bf16.msra.mxu0 %v912
  %1093 = vmatpush.bf16.msra.mxu0 %v911
  %1094 = vmatpush.bf16.msra.mxu0 %v910
  %1095 = vmatpush.bf16.msra.mxu0 %v909
  %1096 = vmatpush.bf16.msra.mxu0 %v908
  %1097 = vmatpush.bf16.msra.mxu0 %v907
  %1098 = vmatpush.bf16.msra.mxu0 %v906
  %1099 = vmatmul.bf16.gmra.mxu0 %v467
  %v1100 = vpop.f32.mrf.mxu0
  %v1101 = vadd.f32 %v1052, %v1100
  %v1102 = vpop.f32.mrf.mxu0
  %v1103 = vadd.f32 %v1054, %v1102
  %1104 = vmatmul.bf16.gmra.mxu0 %v476
  %v1105 = vpop.f32.mrf.mxu0
  %v1106 = vadd.f32 %v1057, %v1105
  %v1107 = vpop.f32.mrf.mxu0
  %v1108 = vadd.f32 %v1059, %v1107
  %1109 = vmatmul.bf16.gmra.mxu0 %v485
  %v1110 = vpop.f32.mrf.mxu0
  %v1111 = vadd.f32 %v1062, %v1110
  %v1112 = vpop.f32.mrf.mxu0
  %v1113 = vadd.f32 %v1064, %v1112
  %1114 = vmatmul.bf16.gmra.mxu0 %v494
  %v1115 = vpop.f32.mrf.mxu0
  %v1116 = vadd.f32 %v1067, %v1115
  %v1117 = vpop.f32.mrf.mxu0
  %v1118 = vadd.f32 %v1069, %v1117
  %1119 = vmatmul.bf16.gmra.mxu0 %v503
  %v1120 = vpop.f32.mrf.mxu0
  %v1121 = vadd.f32 %v1072, %v1120
  %v1122 = vpop.f32.mrf.mxu0
  %v1123 = vadd.f32 %v1074, %v1122
  %1124 = vmatmul.bf16.gmra.mxu0 %v512
  %v1125 = vpop.f32.mrf.mxu0
  %v1126 = vadd.f32 %v1077, %v1125
  %v1127 = vpop.f32.mrf.mxu0
  %v1128 = vadd.f32 %v1079, %v1127
  %1129 = vmatmul.bf16.gmra.mxu0 %v521
  %v1130 = vpop.f32.mrf.mxu0
  %v1131 = vadd.f32 %v1082, %v1130
  %v1132 = vpop.f32.mrf.mxu0
  %v1133 = vadd.f32 %v1084, %v1132
  %1134 = vmatmul.bf16.gmra.mxu0 %v530
  %v1135 = vpop.f32.mrf.mxu0
  %v1136 = vadd.f32 %v1087, %v1135
  %v1137 = vpop.f32.mrf.mxu0
  %v1138 = vadd.f32 %v1089, %v1137
  %1139 = vdwg.mxu0
  %1140 = vmatpush.bf16.msra.mxu0 %v921
  %1141 = vmatpush.bf16.msra.mxu0 %v920
  %1142 = vmatpush.bf16.msra.mxu0 %v919
  %1143 = vmatpush.bf16.msra.mxu0 %v918
  %1144 = vmatpush.bf16.msra.mxu0 %v917
  %1145 = vmatpush.bf16.msra.mxu0 %v916
  %1146 = vmatpush.bf16.msra.mxu0 %v915
  %1147 = vmatpush.bf16.msra.mxu0 %v914
  %1148 = vmatmul.bf16.gmra.mxu0 %v468
  %v1149 = vpop.f32.mrf.mxu0
  %v1150 = vadd.f32 %v1101, %v1149
  %v1151 = vpop.f32.mrf.mxu0
  %v1152 = vadd.f32 %v1103, %v1151
  %1153 = vmatmul.bf16.gmra.mxu0 %v477
  %v1154 = vpop.f32.mrf.mxu0
  %v1155 = vadd.f32 %v1106, %v1154
  %v1156 = vpop.f32.mrf.mxu0
  %v1157 = vadd.f32 %v1108, %v1156
  %1158 = vmatmul.bf16.gmra.mxu0 %v486
  %v1159 = vpop.f32.mrf.mxu0
  %v1160 = vadd.f32 %v1111, %v1159
  %v1161 = vpop.f32.mrf.mxu0
  %v1162 = vadd.f32 %v1113, %v1161
  %1163 = vmatmul.bf16.gmra.mxu0 %v495
  %v1164 = vpop.f32.mrf.mxu0
  %v1165 = vadd.f32 %v1116, %v1164
  %v1166 = vpop.f32.mrf.mxu0
  %v1167 = vadd.f32 %v1118, %v1166
  %1168 = vmatmul.bf16.gmra.mxu0 %v504
  %v1169 = vpop.f32.mrf.mxu0
  %v1170 = vadd.f32 %v1121, %v1169
  %v1171 = vpop.f32.mrf.mxu0
  %v1172 = vadd.f32 %v1123, %v1171
  %1173 = vmatmul.bf16.gmra.mxu0 %v513
  %v1174 = vpop.f32.mrf.mxu0
  %v1175 = vadd.f32 %v1126, %v1174
  %v1176 = vpop.f32.mrf.mxu0
  %v1177 = vadd.f32 %v1128, %v1176
  %1178 = vmatmul.bf16.gmra.mxu0 %v522
  %v1179 = vpop.f32.mrf.mxu0
  %v1180 = vadd.f32 %v1131, %v1179
  %v1181 = vpop.f32.mrf.mxu0
  %v1182 = vadd.f32 %v1133, %v1181
  %1183 = vmatmul.bf16.gmra.mxu0 %v531
  %v1184 = vpop.f32.mrf.mxu0
  %v1185 = vadd.f32 %v1136, %v1184
  %v1186 = vpop.f32.mrf.mxu0
  %v1187 = vadd.f32 %v1138, %v1186
  %1188 = vdwg.mxu0
  %1189 = vmatpush.bf16.msra.mxu0 %v929
  %1190 = vmatpush.bf16.msra.mxu0 %v928
  %1191 = vmatpush.bf16.msra.mxu0 %v927
  %1192 = vmatpush.bf16.msra.mxu0 %v926
  %1193 = vmatpush.bf16.msra.mxu0 %v925
  %1194 = vmatpush.bf16.msra.mxu0 %v924
  %1195 = vmatpush.bf16.msra.mxu0 %v923
  %1196 = vmatpush.bf16.msra.mxu0 %v922
  %1197 = vmatmul.bf16.gmra.mxu0 %v469
  %v1198 = vpop.f32.mrf.mxu0
  %v1199 = vadd.f32 %v1150, %v1198
  %v1200 = vpop.f32.mrf.mxu0
  %v1201 = vadd.f32 %v1152, %v1200
  %1202 = vmatmul.bf16.gmra.mxu0 %v478
  %v1203 = vpop.f32.mrf.mxu0
  %v1204 = vadd.f32 %v1155, %v1203
  %v1205 = vpop.f32.mrf.mxu0
  %v1206 = vadd.f32 %v1157, %v1205
  %1207 = vmatmul.bf16.gmra.mxu0 %v487
  %v1208 = vpop.f32.mrf.mxu0
  %v1209 = vadd.f32 %v1160, %v1208
  %v1210 = vpop.f32.mrf.mxu0
  %v1211 = vadd.f32 %v1162, %v1210
  %1212 = vmatmul.bf16.gmra.mxu0 %v496
  %v1213 = vpop.f32.mrf.mxu0
  %v1214 = vadd.f32 %v1165, %v1213
  %v1215 = vpop.f32.mrf.mxu0
  %v1216 = vadd.f32 %v1167, %v1215
  %1217 = vmatmul.bf16.gmra.mxu0 %v505
  %v1218 = vpop.f32.mrf.mxu0
  %v1219 = vadd.f32 %v1170, %v1218
  %v1220 = vpop.f32.mrf.mxu0
  %v1221 = vadd.f32 %v1172, %v1220
  %1222 = vmatmul.bf16.gmra.mxu0 %v514
  %v1223 = vpop.f32.mrf.mxu0
  %v1224 = vadd.f32 %v1175, %v1223
  %v1225 = vpop.f32.mrf.mxu0
  %v1226 = vadd.f32 %v1177, %v1225
  %1227 = vmatmul.bf16.gmra.mxu0 %v523
  %v1228 = vpop.f32.mrf.mxu0
  %v1229 = vadd.f32 %v1180, %v1228
  %v1230 = vpop.f32.mrf.mxu0
  %v1231 = vadd.f32 %v1182, %v1230
  %1232 = vmatmul.bf16.gmra.mxu0 %v532
  %v1233 = vpop.f32.mrf.mxu0
  %v1234 = vadd.f32 %v1185, %v1233
  %v1235 = vpop.f32.mrf.mxu0
  %v1236 = vadd.f32 %v1187, %v1235
  %1237 = vdwg.mxu0
  %1238 = vmatpush.bf16.msra.mxu0 %v937
  %1239 = vmatpush.bf16.msra.mxu0 %v936
  %1240 = vmatpush.bf16.msra.mxu0 %v935
  %1241 = vmatpush.bf16.msra.mxu0 %v934
  %1242 = vmatpush.bf16.msra.mxu0 %v933
  %1243 = vmatpush.bf16.msra.mxu0 %v932
  %1244 = vmatpush.bf16.msra.mxu0 %v931
  %1245 = vmatpush.bf16.msra.mxu0 %v930
  %1246 = vmatmul.bf16.gmra.mxu0 %v470
  %v1247 = vpop.f32.mrf.mxu0
  %v1248 = vadd.f32 %v1199, %v1247
  %v1249 = vpop.f32.mrf.mxu0
  %v1250 = vadd.f32 %v1201, %v1249
  %1251 = vmatmul.bf16.gmra.mxu0 %v479
  %v1252 = vpop.f32.mrf.mxu0
  %v1253 = vadd.f32 %v1204, %v1252
  %v1254 = vpop.f32.mrf.mxu0
  %v1255 = vadd.f32 %v1206, %v1254
  %1256 = vmatmul.bf16.gmra.mxu0 %v488
  %v1257 = vpop.f32.mrf.mxu0
  %v1258 = vadd.f32 %v1209, %v1257
  %v1259 = vpop.f32.mrf.mxu0
  %v1260 = vadd.f32 %v1211, %v1259
  %1261 = vmatmul.bf16.gmra.mxu0 %v497
  %v1262 = vpop.f32.mrf.mxu0
  %v1263 = vadd.f32 %v1214, %v1262
  %v1264 = vpop.f32.mrf.mxu0
  %v1265 = vadd.f32 %v1216, %v1264
  %1266 = vmatmul.bf16.gmra.mxu0 %v506
  %v1267 = vpop.f32.mrf.mxu0
  %v1268 = vadd.f32 %v1219, %v1267
  %v1269 = vpop.f32.mrf.mxu0
  %v1270 = vadd.f32 %v1221, %v1269
  %1271 = vmatmul.bf16.gmra.mxu0 %v515
  %v1272 = vpop.f32.mrf.mxu0
  %v1273 = vadd.f32 %v1224, %v1272
  %v1274 = vpop.f32.mrf.mxu0
  %v1275 = vadd.f32 %v1226, %v1274
  %1276 = vmatmul.bf16.gmra.mxu0 %v524
  %v1277 = vpop.f32.mrf.mxu0
  %v1278 = vadd.f32 %v1229, %v1277
  %v1279 = vpop.f32.mrf.mxu0
  %v1280 = vadd.f32 %v1231, %v1279
  %1281 = vmatmul.bf16.gmra.mxu0 %v533
  %v1282 = vpop.f32.mrf.mxu0
  %v1283 = vadd.f32 %v1234, %v1282
  %v1284 = vpop.f32.mrf.mxu0
  %v1285 = vadd.f32 %v1236, %v1284
  %1286 = vdwg.mxu0
  %1287 = vmatpush.bf16.msra.mxu0 %v945
  %1288 = vmatpush.bf16.msra.mxu0 %v944
  %1289 = vmatpush.bf16.msra.mxu0 %v943
  %1290 = vmatpush.bf16.msra.mxu0 %v942
  %1291 = vmatpush.bf16.msra.mxu0 %v941
  %1292 = vmatpush.bf16.msra.mxu0 %v940
  %1293 = vmatpush.bf16.msra.mxu0 %v939
  %1294 = vmatpush.bf16.msra.mxu0 %v938
  %1295 = vmatmul.bf16.gmra.mxu0 %v471
  %v1296 = vpop.f32.mrf.mxu0
  %v1297 = vadd.f32 %v1248, %v1296
  %v1298 = vpop.f32.mrf.mxu0
  %v1299 = vadd.f32 %v1250, %v1298
  %1300 = vmatmul.bf16.gmra.mxu0 %v480
  %v1301 = vpop.f32.mrf.mxu0
  %v1302 = vadd.f32 %v1253, %v1301
  %v1303 = vpop.f32.mrf.mxu0
  %v1304 = vadd.f32 %v1255, %v1303
  %1305 = vmatmul.bf16.gmra.mxu0 %v489
  %v1306 = vpop.f32.mrf.mxu0
  %v1307 = vadd.f32 %v1258, %v1306
  %v1308 = vpop.f32.mrf.mxu0
  %v1309 = vadd.f32 %v1260, %v1308
  %1310 = vmatmul.bf16.gmra.mxu0 %v498
  %v1311 = vpop.f32.mrf.mxu0
  %v1312 = vadd.f32 %v1263, %v1311
  %v1313 = vpop.f32.mrf.mxu0
  %v1314 = vadd.f32 %v1265, %v1313
  %1315 = vmatmul.bf16.gmra.mxu0 %v507
  %v1316 = vpop.f32.mrf.mxu0
  %v1317 = vadd.f32 %v1268, %v1316
  %v1318 = vpop.f32.mrf.mxu0
  %v1319 = vadd.f32 %v1270, %v1318
  %1320 = vmatmul.bf16.gmra.mxu0 %v516
  %v1321 = vpop.f32.mrf.mxu0
  %v1322 = vadd.f32 %v1273, %v1321
  %v1323 = vpop.f32.mrf.mxu0
  %v1324 = vadd.f32 %v1275, %v1323
  %1325 = vmatmul.bf16.gmra.mxu0 %v525
  %v1326 = vpop.f32.mrf.mxu0
  %v1327 = vadd.f32 %v1278, %v1326
  %v1328 = vpop.f32.mrf.mxu0
  %v1329 = vadd.f32 %v1280, %v1328
  %1330 = vmatmul.bf16.gmra.mxu0 %v534
  %v1331 = vpop.f32.mrf.mxu0
  %v1332 = vadd.f32 %v1283, %v1331
  %v1333 = vpop.f32.mrf.mxu0
  %v1334 = vadd.f32 %v1285, %v1333
  %1335 = vdwg.mxu0
  %1336 = vmatpush.bf16.msra.mxu0 %v953
  %1337 = vmatpush.bf16.msra.mxu0 %v952
  %1338 = vmatpush.bf16.msra.mxu0 %v951
  %1339 = vmatpush.bf16.msra.mxu0 %v950
  %1340 = vmatpush.bf16.msra.mxu0 %v949
  %1341 = vmatpush.bf16.msra.mxu0 %v948
  %1342 = vmatpush.bf16.msra.mxu0 %v947
  %1343 = vmatpush.bf16.msra.mxu0 %v946
  %1344 = vmatmul.bf16.gmra.mxu0 %v472
  %v1345 = vpop.f32.mrf.mxu0
  %v1346 = vadd.f32 %v1297, %v1345
  %v1347 = vpop.f32.mrf.mxu0
  %v1348 = vadd.f32 %v1299, %v1347
  %1349 = vmatmul.bf16.gmra.mxu0 %v481
  %v1350 = vpop.f32.mrf.mxu0
  %v1351 = vadd.f32 %v1302, %v1350
  %v1352 = vpop.f32.mrf.mxu0
  %v1353 = vadd.f32 %v1304, %v1352
  %1354 = vmatmul.bf16.gmra.mxu0 %v490
  %v1355 = vpop.f32.mrf.mxu0
  %v1356 = vadd.f32 %v1307, %v1355
  %v1357 = vpop.f32.mrf.mxu0
  %v1358 = vadd.f32 %v1309, %v1357
  %1359 = vmatmul.bf16.gmra.mxu0 %v499
  %v1360 = vpop.f32.mrf.mxu0
  %v1361 = vadd.f32 %v1312, %v1360
  %v1362 = vpop.f32.mrf.mxu0
  %v1363 = vadd.f32 %v1314, %v1362
  %1364 = vmatmul.bf16.gmra.mxu0 %v508
  %v1365 = vpop.f32.mrf.mxu0
  %v1366 = vadd.f32 %v1317, %v1365
  %v1367 = vpop.f32.mrf.mxu0
  %v1368 = vadd.f32 %v1319, %v1367
  %1369 = vmatmul.bf16.gmra.mxu0 %v517
  %v1370 = vpop.f32.mrf.mxu0
  %v1371 = vadd.f32 %v1322, %v1370
  %v1372 = vpop.f32.mrf.mxu0
  %v1373 = vadd.f32 %v1324, %v1372
  %1374 = vmatmul.bf16.gmra.mxu0 %v526
  %v1375 = vpop.f32.mrf.mxu0
  %v1376 = vadd.f32 %v1327, %v1375
  %v1377 = vpop.f32.mrf.mxu0
  %v1378 = vadd.f32 %v1329, %v1377
  %1379 = vmatmul.bf16.gmra.mxu0 %v535
  %v1380 = vpop.f32.mrf.mxu0
  %v1381 = vadd.f32 %v1332, %v1380
  %v1382 = vpop.f32.mrf.mxu0
  %v1383 = vadd.f32 %v1334, %v1382
  %1384 = vdwg.mxu0
  %1385 = vmatpush.bf16.msra.mxu0 %v961
  %1386 = vmatpush.bf16.msra.mxu0 %v960
  %1387 = vmatpush.bf16.msra.mxu0 %v959
  %1388 = vmatpush.bf16.msra.mxu0 %v958
  %1389 = vmatpush.bf16.msra.mxu0 %v957
  %1390 = vmatpush.bf16.msra.mxu0 %v956
  %1391 = vmatpush.bf16.msra.mxu0 %v955
  %1392 = vmatpush.bf16.msra.mxu0 %v954
  %1393 = vmatmul.bf16.gmra.mxu0 %v473
  %v1394 = vpop.f32.mrf.mxu0
  %v1395 = vadd.f32 %v1346, %v1394
  %v1396 = vpop.f32.mrf.mxu0
  %v1397 = vadd.f32 %v1348, %v1396
  %1398 = vmatmul.bf16.gmra.mxu0 %v482
  %v1399 = vpop.f32.mrf.mxu0
  %v1400 = vadd.f32 %v1351, %v1399
  %v1401 = vpop.f32.mrf.mxu0
  %v1402 = vadd.f32 %v1353, %v1401
  %1403 = vmatmul.bf16.gmra.mxu0 %v491
  %v1404 = vpop.f32.mrf.mxu0
  %v1405 = vadd.f32 %v1356, %v1404
  %v1406 = vpop.f32.mrf.mxu0
  %v1407 = vadd.f32 %v1358, %v1406
  %1408 = vmatmul.bf16.gmra.mxu0 %v500
  %v1409 = vpop.f32.mrf.mxu0
  %v1410 = vadd.f32 %v1361, %v1409
  %v1411 = vpop.f32.mrf.mxu0
  %v1412 = vadd.f32 %v1363, %v1411
  %1413 = vmatmul.bf16.gmra.mxu0 %v509
  %v1414 = vpop.f32.mrf.mxu0
  %v1415 = vadd.f32 %v1366, %v1414
  %v1416 = vpop.f32.mrf.mxu0
  %v1417 = vadd.f32 %v1368, %v1416
  %1418 = vmatmul.bf16.gmra.mxu0 %v518
  %v1419 = vpop.f32.mrf.mxu0
  %v1420 = vadd.f32 %v1371, %v1419
  %v1421 = vpop.f32.mrf.mxu0
  %v1422 = vadd.f32 %v1373, %v1421
  %1423 = vmatmul.bf16.gmra.mxu0 %v527
  %v1424 = vpop.f32.mrf.mxu0
  %v1425 = vadd.f32 %v1376, %v1424
  %v1426 = vpop.f32.mrf.mxu0
  %v1427 = vadd.f32 %v1378, %v1426
  %1428 = vmatmul.bf16.gmra.mxu0 %v536
  %v1429 = vpop.f32.mrf.mxu0
  %v1430 = vadd.f32 %v1381, %v1429
  %v1431 = vpop.f32.mrf.mxu0
  %v1432 = vadd.f32 %v1383, %v1431
  %1433 = vdwg.mxu0
  %1434 = vmatpush.bf16.msra.mxu0 %v969
  %1435 = vmatpush.bf16.msra.mxu0 %v968
  %1436 = vmatpush.bf16.msra.mxu0 %v967
  %1437 = vmatpush.bf16.msra.mxu0 %v966
  %1438 = vmatpush.bf16.msra.mxu0 %v965
  %1439 = vmatpush.bf16.msra.mxu0 %v964
  %1440 = vmatpush.bf16.msra.mxu0 %v963
  %1441 = vmatpush.bf16.msra.mxu0 %v962
  %1442 = vmatmul.bf16.gmra.mxu0 %v474
  %v1443 = vpop.f32.mrf.mxu0
  %v1444 = vadd.f32 %v1395, %v1443
  %v1445 = vpop.f32.mrf.mxu0
  %v1446 = vadd.f32 %v1397, %v1445
  %1447 = vmatmul.bf16.gmra.mxu0 %v483
  %v1448 = vpop.f32.mrf.mxu0
  %v1449 = vadd.f32 %v1400, %v1448
  %v1450 = vpop.f32.mrf.mxu0
  %v1451 = vadd.f32 %v1402, %v1450
  %1452 = vmatmul.bf16.gmra.mxu0 %v492
  %v1453 = vpop.f32.mrf.mxu0
  %v1454 = vadd.f32 %v1405, %v1453
  %v1455 = vpop.f32.mrf.mxu0
  %v1456 = vadd.f32 %v1407, %v1455
  %1457 = vmatmul.bf16.gmra.mxu0 %v501
  %v1458 = vpop.f32.mrf.mxu0
  %v1459 = vadd.f32 %v1410, %v1458
  %v1460 = vpop.f32.mrf.mxu0
  %v1461 = vadd.f32 %v1412, %v1460
  %1462 = vmatmul.bf16.gmra.mxu0 %v510
  %v1463 = vpop.f32.mrf.mxu0
  %v1464 = vadd.f32 %v1415, %v1463
  %v1465 = vpop.f32.mrf.mxu0
  %v1466 = vadd.f32 %v1417, %v1465
  %1467 = vmatmul.bf16.gmra.mxu0 %v519
  %v1468 = vpop.f32.mrf.mxu0
  %v1469 = vadd.f32 %v1420, %v1468
  %v1470 = vpop.f32.mrf.mxu0
  %v1471 = vadd.f32 %v1422, %v1470
  %1472 = vmatmul.bf16.gmra.mxu0 %v528
  %v1473 = vpop.f32.mrf.mxu0
  %v1474 = vadd.f32 %v1425, %v1473
  %v1475 = vpop.f32.mrf.mxu0
  %v1476 = vadd.f32 %v1427, %v1475
  %1477 = vmatmul.bf16.gmra.mxu0 %v537
  %v1478 = vpop.f32.mrf.mxu0
  %v1479 = vadd.f32 %v1430, %v1478
  %v1480 = vpop.f32.mrf.mxu0
  %v1481 = vadd.f32 %v1432, %v1480
  %1482 = vdwg.mxu0
  %v1483 = vmax.f32 %v1444, 0.0
  %v1484 = vmax.f32 %v1446, 0.0
  %v1485 = vmax.f32 %v1449, 0.0
  %v1486 = vmax.f32 %v1451, 0.0
  %v1487 = vmax.f32 %v1454, 0.0
  %v1488 = vmax.f32 %v1456, 0.0
  %v1489 = vmax.f32 %v1459, 0.0
  %v1490 = vmax.f32 %v1461, 0.0
  %v1491 = vmax.f32 %v1464, 0.0
  %v1492 = vmax.f32 %v1466, 0.0
  %v1493 = vmax.f32 %v1469, 0.0
  %v1494 = vmax.f32 %v1471, 0.0
  %v1495 = vmax.f32 %v1474, 0.0
  %v1496 = vmax.f32 %v1476, 0.0
  %v1497 = vmax.f32 %v1479, 0.0
  %v1498 = vmax.f32 %v1481, 0.0
  %1499 = vst [vmem:[%s3] sm:$0xff] %v1483
  %1500 = vst [vmem:[%s3 + $0x8] sm:$0xff] %v1484
  %1501 = vst [vmem:[%s3 + $0x10] sm:$0xff] %v1485
  %1502 = vst [vmem:[%s3 + $0x18] sm:$0xff] %v1486
  %1503 = vst [vmem:[%s3 + $0x20] sm:$0xff] %v1487
  %1504 = vst [vmem:[%s3 + $0x28] sm:$0xff] %v1488
  %1505 = vst [vmem:[%s3 + $0x30] sm:$0xff] %v1489
  %1506 = vst [vmem:[%s3 + $0x38] sm:$0xff] %v1490
  %1507 = vst [vmem:[%s3 + $0x40] sm:$0xff] %v1491
  %1508 = vst [vmem:[%s3 + $0x48] sm:$0xff] %v1492
  %1509 = vst [vmem:[%s3 + $0x50] sm:$0xff] %v1493
  %1510 = vst [vmem:[%s3 + $0x58] sm:$0xff] %v1494
  %1511 = vst [vmem:[%s3 + $0x60] sm:$0xff] %v1495
  %1512 = vst [vmem:[%s3 + $0x68] sm:$0xff] %v1496
  %1513 = vst [vmem:[%s3 + $0x70] sm:$0xff] %v1497
  %1514 = vst [vmem:[%s3 + $0x78] sm:$0xff] %v1498
  // Predicated region
  $region14: #{inception_b_forward.8} parent=0 // pred_check
    _
  $region15: #{inception_b_forward.8} parent=0 // pred_check_branch
    %1516 = sbr.rel (0) target = $region17
  $region16: #{inception_b_forward.8} parent=0 // pred_region
    _
  $region17: #{inception_b_forward.8} parent=0 // pred_fallthru
    _
  // Predicated region
  $region18: #{inception_b_forward.8} parent=0 // pred_check
    _
  $region19: #{inception_b_forward.8} parent=0 // pred_check_branch
    %1518 = sbr.rel (0) target = $region21
  $region20: #{inception_b_forward.8} parent=0 // pred_region
    _
  $region21: #{inception_b_forward.8} parent=0 // pred_fallthru
    _

// kernel: inception_b_forward.5
$region0: #{inception_b_forward.5}
  #allocation0 [shape = 'u32[]', space=smem, size = 0x4, offset = 0x4, fixed_abs, tag = 'smem constant byte address 0x4 - core index']
  #allocation1 [shape = 'u32[72,128]{1,0:T(1,128)}', space=vmem, size = 0x9000, scoped, tag = 'internal scratch']
  %s0 = inlined_call_operand.vmem [shape: bf16[128,128], index: 0, kind: input, shape index: {}]
  %s1 = inlined_call_operand.vmem [shape: bf16[128,384], index: 1, kind: input, shape index: {}]
  %s2 = inlined_call_operand.vmem [shape: f32[1,384], index: 2, kind: input, shape index: {}]
  %s3 = inlined_call_operand.vmem [shape: f32[128,384], index: 3, kind: output, shape index: {}]
  %s4 = sld [smem:[#allocation0]]
  $region22: #{inception_b_forward.5} parent=0
    _
  %s6 = ssub.s32 1, %s4
  %s7 = scalar_select 0, %s6, %s4
  // Predicated region
  $region2: #{inception_b_forward.5} parent=0 // pred_check
    _
  $region3: #{inception_b_forward.5} parent=0 // pred_check_branch
    %9 = sbr.rel (0) target = $region5
  $region4: #{inception_b_forward.5} parent=0 // pred_region
    _
  $region5: #{inception_b_forward.5} parent=0 // pred_fallthru
    _
  // Predicated region
  $region6: #{inception_b_forward.5} parent=0 // pred_check
    _
  $region7: #{inception_b_forward.5} parent=0 // pred_check_branch
    %11 = sbr.rel (0) target = $region9
  $region8: #{inception_b_forward.5} parent=0 // pred_region
    _
  $region9: #{inception_b_forward.5} parent=0 // pred_fallthru
    _
  // Predicated region
  $region10: #{inception_b_forward.5} parent=0 // pred_check
    _
  $region11: #{inception_b_forward.5} parent=0 // pred_check_branch
    %13 = sbr.rel (0) target = $region13
  $region12: #{inception_b_forward.5} parent=0 // pred_region
    _
  $region13: #{inception_b_forward.5} parent=0 // pred_fallthru
    _
  %v14 = vld [vmem:[%s0] sm:$0xf]
  %v15 = vld [vmem:[%s0 + $0x4] sm:$0xf]
  %v16 = vld [vmem:[%s0 + $0x8] sm:$0xf]
  %v17 = vld [vmem:[%s0 + $0xc] sm:$0xf]
  %v18 = vld [vmem:[%s0 + $0x10] sm:$0xf]
  %v19 = vld [vmem:[%s0 + $0x14] sm:$0xf]
  %v20 = vld [vmem:[%s0 + $0x18] sm:$0xf]
  %v21 = vld [vmem:[%s0 + $0x1c] sm:$0xf]
  %v22 = vld [vmem:[%s0 + $0x20] sm:$0xf]
  %v23 = vld [vmem:[%s0 + $0x24] sm:$0xf]
  %v24 = vld [vmem:[%s0 + $0x28] sm:$0xf]
  %v25 = vld [vmem:[%s0 + $0x2c] sm:$0xf]
  %v26 = vld [vmem:[%s0 + $0x30] sm:$0xf]
  %v27 = vld [vmem:[%s0 + $0x34] sm:$0xf]
  %v28 = vld [vmem:[%s0 + $0x38] sm:$0xf]
  %v29 = vld [vmem:[%s0 + $0x3c] sm:$0xf]
  %v30 = vld [vmem:[%s1] sm:$0xff]
  %v31 = vld [vmem:[%s1 + $0x8] sm:$0xf]
  %v32 = vld [vmem:[%s1 + $0xc] sm:$0xff]
  %v33 = vld [vmem:[%s1 + $0x14] sm:$0xf]
  %v34 = vld [vmem:[%s1 + $0x18] sm:$0xff]
  %v35 = vld [vmem:[%s1 + $0x20] sm:$0xf]
  %v36 = vld [vmem:[%s1 + $0x24] sm:$0xff]
  %v37 = vld [vmem:[%s1 + $0x2c] sm:$0xf]
  %v38 = vld [vmem:[%s1 + $0x30] sm:$0xff]
  %v39 = vld [vmem:[%s1 + $0x38] sm:$0xf]
  %v40 = vld [vmem:[%s1 + $0x3c] sm:$0xff]
  %v41 = vld [vmem:[%s1 + $0x44] sm:$0xf]
  %v42 = vld [vmem:[%s1 + $0x48] sm:$0xff]
  %v43 = vld [vmem:[%s1 + $0x50] sm:$0xf]
  %v44 = vld [vmem:[%s1 + $0x54] sm:$0xff]
  %v45 = vld [vmem:[%s1 + $0x5c] sm:$0xf]
  %v46 = vld [vmem:[%s1 + $0x60] sm:$0xff]
  %v47 = vld [vmem:[%s1 + $0x68] sm:$0xf]
  %v48 = vld [vmem:[%s1 + $0x6c] sm:$0xff]
  %v49 = vld [vmem:[%s1 + $0x74] sm:$0xf]
  %v50 = vld [vmem:[%s1 + $0x78] sm:$0xff]
  %v51 = vld [vmem:[%s1 + $0x80] sm:$0xf]
  %v52 = vld [vmem:[%s1 + $0x84] sm:$0xff]
  %v53 = vld [vmem:[%s1 + $0x8c] sm:$0xf]
  %v54 = vld [vmem:[%s1 + $0x90] sm:$0xff]
  %v55 = vld [vmem:[%s1 + $0x98] sm:$0xf]
  %v56 = vld [vmem:[%s1 + $0x9c] sm:$0xff]
  %v57 = vld [vmem:[%s1 + $0xa4] sm:$0xf]
  %v58 = vld [vmem:[%s1 + $0xa8] sm:$0xff]
  %v59 = vld [vmem:[%s1 + $0xb0] sm:$0xf]
  %v60 = vld [vmem:[%s1 + $0xb4] sm:$0xff]
  %v61 = vld [vmem:[%s1 + $0xbc] sm:$0xf]
  %v62 = vld [vmem:[%s2] sm:$0x7]
  %v64 = vperm.slane %v62, 0
  %v65 = vperm.slane %v62, 1
  %v66 = vperm.slane %v62, 2
  %v86 = vunpack.c.l.b16 %v14
  %v87 = vunpack.c.l.b16 %v15
  %v88 = vunpack.c.l.b16 %v16
  %v89 = vunpack.c.l.b16 %v17
  %v90 = vunpack.c.l.b16 %v18
  %v91 = vunpack.c.l.b16 %v19
  %v92 = vunpack.c.l.b16 %v20
  %v93 = vunpack.c.l.b16 %v21
  %v94 = vunpack.c.l.b16 %v22
  %v95 = vunpack.c.l.b16 %v23
  %v96 = vunpack.c.l.b16 %v24
  %v97 = vunpack.c.l.b16 %v25
  %v98 = vunpack.c.l.b16 %v26
  %v99 = vunpack.c.l.b16 %v27
  %v100 = vunpack.c.l.b16 %v28
  %v101 = vunpack.c.l.b16 %v29
  %v102 = vpack.c.b16 %v87, %v86
  %v103 = vpack.c.b16 %v89, %v88
  %v104 = vpack.c.b16 %v91, %v90
  %v105 = vpack.c.b16 %v93, %v92
  %v106 = vpack.c.b16 %v95, %v94
  %v107 = vpack.c.b16 %v97, %v96
  %v108 = vpack.c.b16 %v99, %v98
  %v109 = vpack.c.b16 %v101, %v100
  %v150 = vunpack.c.l.b16 %v30
  %v151 = vunpack.c.h.b16 %v30
  %v152 = vunpack.c.l.b16 %v31
  %v153 = vunpack.c.l.b16 %v32
  %v154 = vunpack.c.h.b16 %v32
  %v155 = vunpack.c.l.b16 %v33
  %v156 = vunpack.c.l.b16 %v34
  %v157 = vunpack.c.h.b16 %v34
  %v158 = vunpack.c.l.b16 %v35
  %v159 = vunpack.c.l.b16 %v36
  %v160 = vunpack.c.h.b16 %v36
  %v161 = vunpack.c.l.b16 %v37
  %v162 = vunpack.c.l.b16 %v38
  %v163 = vunpack.c.h.b16 %v38
  %v164 = vunpack.c.l.b16 %v39
  %v165 = vunpack.c.l.b16 %v40
  %v166 = vunpack.c.h.b16 %v40
  %v167 = vunpack.c.l.b16 %v41
  %v168 = vunpack.c.l.b16 %v42
  %v169 = vunpack.c.h.b16 %v42
  %v170 = vunpack.c.l.b16 %v43
  %v171 = vunpack.c.l.b16 %v44
  %v172 = vunpack.c.h.b16 %v44
  %v173 = vunpack.c.l.b16 %v45
  %v174 = vunpack.c.l.b16 %v46
  %v175 = vunpack.c.h.b16 %v46
  %v176 = vunpack.c.l.b16 %v47
  %v177 = vunpack.c.l.b16 %v48
  %v178 = vunpack.c.h.b16 %v48
  %v179 = vunpack.c.l.b16 %v49
  %v180 = vunpack.c.l.b16 %v50
  %v181 = vunpack.c.h.b16 %v50
  %v182 = vunpack.c.l.b16 %v51
  %v183 = vunpack.c.l.b16 %v52
  %v184 = vunpack.c.h.b16 %v52
  %v185 = vunpack.c.l.b16 %v53
  %v186 = vunpack.c.l.b16 %v54
  %v187 = vunpack.c.h.b16 %v54
  %v188 = vunpack.c.l.b16 %v55
  %v189 = vunpack.c.l.b16 %v56
  %v190 = vunpack.c.h.b16 %v56
  %v191 = vunpack.c.l.b16 %v57
  %v192 = vunpack.c.l.b16 %v58
  %v193 = vunpack.c.h.b16 %v58
  %v194 = vunpack.c.l.b16 %v59
  %v195 = vunpack.c.l.b16 %v60
  %v196 = vunpack.c.h.b16 %v60
  %v197 = vunpack.c.l.b16 %v61
  %v198 = vpack.c.b16 %v153, %v150
  %v199 = vpack.c.b16 %v154, %v151
  %v200 = vpack.c.b16 %v155, %v152
  %v201 = vpack.c.b16 %v159, %v156
  %v202 = vpack.c.b16 %v160, %v157
  %v203 = vpack.c.b16 %v161, %v158
  %v204 = vpack.c.b16 %v165, %v162
  %v205 = vpack.c.b16 %v166, %v163
  %v206 = vpack.c.b16 %v167, %v164
  %v207 = vpack.c.b16 %v171, %v168
  %v208 = vpack.c.b16 %v172, %v169
  %v209 = vpack.c.b16 %v173, %v170
  %v210 = vpack.c.b16 %v177, %v174
  %v211 = vpack.c.b16 %v178, %v175
  %v212 = vpack.c.b16 %v179, %v176
  %v213 = vpack.c.b16 %v183, %v180
  %v214 = vpack.c.b16 %v184, %v181
  %v215 = vpack.c.b16 %v185, %v182
  %v216 = vpack.c.b16 %v189, %v186
  %v217 = vpack.c.b16 %v190, %v187
  %v218 = vpack.c.b16 %v191, %v188
  %v219 = vpack.c.b16 %v195, %v192
  %v220 = vpack.c.b16 %v196, %v193
  %v221 = vpack.c.b16 %v197, %v194
  %246 = vmatpush.bf16.msra.mxu0 %v219
  %247 = vmatpush.bf16.msra.mxu0 %v216
  %248 = vmatpush.bf16.msra.mxu0 %v213
  %249 = vmatpush.bf16.msra.mxu0 %v210
  %250 = vmatpush.bf16.msra.mxu0 %v207
  %251 = vmatpush.bf16.msra.mxu0 %v204
  %252 = vmatpush.bf16.msra.mxu0 %v201
  %253 = vmatpush.bf16.msra.mxu0 %v198
  %254 = vmatmul.bf16.gmra.mxu0 %v102
  %v255 = vpop.f32.mrf.mxu0
  %v256 = vadd.f32 %v64, %v255
  %v257 = vpop.f32.mrf.mxu0
  %v258 = vadd.f32 %v64, %v257
  %259 = vmatmul.bf16.gmra.mxu0 %v103
  %v260 = vpop.f32.mrf.mxu0
  %v261 = vadd.f32 %v64, %v260
  %v262 = vpop.f32.mrf.mxu0
  %v263 = vadd.f32 %v64, %v262
  %264 = vmatmul.bf16.gmra.mxu0 %v104
  %v265 = vpop.f32.mrf.mxu0
  %v266 = vadd.f32 %v64, %v265
  %v267 = vpop.f32.mrf.mxu0
  %v268 = vadd.f32 %v64, %v267
  %269 = vmatmul.bf16.gmra.mxu0 %v105
  %v270 = vpop.f32.mrf.mxu0
  %v271 = vadd.f32 %v64, %v270
  %v272 = vpop.f32.mrf.mxu0
  %v273 = vadd.f32 %v64, %v272
  %274 = vmatmul.bf16.gmra.mxu0 %v106
  %v275 = vpop.f32.mrf.mxu0
  %v276 = vadd.f32 %v64, %v275
  %v277 = vpop.f32.mrf.mxu0
  %v278 = vadd.f32 %v64, %v277
  %279 = vmatmul.bf16.gmra.mxu0 %v107
  %v280 = vpop.f32.mrf.mxu0
  %v281 = vadd.f32 %v64, %v280
  %v282 = vpop.f32.mrf.mxu0
  %v283 = vadd.f32 %v64, %v282
  %284 = vmatmul.bf16.gmra.mxu0 %v108
  %v285 = vpop.f32.mrf.mxu0
  %v286 = vadd.f32 %v64, %v285
  %v287 = vpop.f32.mrf.mxu0
  %v288 = vadd.f32 %v64, %v287
  %289 = vmatmul.bf16.gmra.mxu0 %v109
  %v290 = vpop.f32.mrf.mxu0
  %v291 = vadd.f32 %v64, %v290
  %v292 = vpop.f32.mrf.mxu0
  %v293 = vadd.f32 %v64, %v292
  %294 = vdwg.mxu0
  %295 = vmatpush.bf16.msra.mxu0 %v220
  %296 = vmatpush.bf16.msra.mxu0 %v217
  %297 = vmatpush.bf16.msra.mxu0 %v214
  %298 = vmatpush.bf16.msra.mxu0 %v211
  %299 = vmatpush.bf16.msra.mxu0 %v208
  %300 = vmatpush.bf16.msra.mxu0 %v205
  %301 = vmatpush.bf16.msra.mxu0 %v202
  %302 = vmatpush.bf16.msra.mxu0 %v199
  %303 = vmatmul.bf16.gmra.mxu0 %v102
  %v304 = vpop.f32.mrf.mxu0
  %v305 = vadd.f32 %v65, %v304
  %v306 = vpop.f32.mrf.mxu0
  %v307 = vadd.f32 %v65, %v306
  %308 = vmatmul.bf16.gmra.mxu0 %v103
  %v309 = vpop.f32.mrf.mxu0
  %v310 = vadd.f32 %v65, %v309
  %v311 = vpop.f32.mrf.mxu0
  %v312 = vadd.f32 %v65, %v311
  %313 = vmatmul.bf16.gmra.mxu0 %v104
  %v314 = vpop.f32.mrf.mxu0
  %v315 = vadd.f32 %v65, %v314
  %v316 = vpop.f32.mrf.mxu0
  %v317 = vadd.f32 %v65, %v316
  %318 = vmatmul.bf16.gmra.mxu0 %v105
  %v319 = vpop.f32.mrf.mxu0
  %v320 = vadd.f32 %v65, %v319
  %v321 = vpop.f32.mrf.mxu0
  %v322 = vadd.f32 %v65, %v321
  %323 = vmatmul.bf16.gmra.mxu0 %v106
  %v324 = vpop.f32.mrf.mxu0
  %v325 = vadd.f32 %v65, %v324
  %v326 = vpop.f32.mrf.mxu0
  %v327 = vadd.f32 %v65, %v326
  %328 = vmatmul.bf16.gmra.mxu0 %v107
  %v329 = vpop.f32.mrf.mxu0
  %v330 = vadd.f32 %v65, %v329
  %v331 = vpop.f32.mrf.mxu0
  %v332 = vadd.f32 %v65, %v331
  %333 = vmatmul.bf16.gmra.mxu0 %v108
  %v334 = vpop.f32.mrf.mxu0
  %v335 = vadd.f32 %v65, %v334
  %v336 = vpop.f32.mrf.mxu0
  %v337 = vadd.f32 %v65, %v336
  %338 = vmatmul.bf16.gmra.mxu0 %v109
  %v339 = vpop.f32.mrf.mxu0
  %v340 = vadd.f32 %v65, %v339
  %v341 = vpop.f32.mrf.mxu0
  %v342 = vadd.f32 %v65, %v341
  %343 = vdwg.mxu0
  %344 = vmatpush.bf16.msra.mxu0 %v221
  %345 = vmatpush.bf16.msra.mxu0 %v218
  %346 = vmatpush.bf16.msra.mxu0 %v215
  %347 = vmatpush.bf16.msra.mxu0 %v212
  %348 = vmatpush.bf16.msra.mxu0 %v209
  %349 = vmatpush.bf16.msra.mxu0 %v206
  %350 = vmatpush.bf16.msra.mxu0 %v203
  %351 = vmatpush.bf16.msra.mxu0 %v200
  %352 = vmatmul.bf16.gmra.mxu0 %v102
  %v353 = vpop.f32.mrf.mxu0
  %v354 = vadd.f32 %v66, %v353
  %v355 = vpop.f32.mrf.mxu0
  %v356 = vadd.f32 %v66, %v355
  %357 = vmatmul.bf16.gmra.mxu0 %v103
  %v358 = vpop.f32.mrf.mxu0
  %v359 = vadd.f32 %v66, %v358
  %v360 = vpop.f32.mrf.mxu0
  %v361 = vadd.f32 %v66, %v360
  %362 = vmatmul.bf16.gmra.mxu0 %v104
  %v363 = vpop.f32.mrf.mxu0
  %v364 = vadd.f32 %v66, %v363
  %v365 = vpop.f32.mrf.mxu0
  %v366 = vadd.f32 %v66, %v365
  %367 = vmatmul.bf16.gmra.mxu0 %v105
  %v368 = vpop.f32.mrf.mxu0
  %v369 = vadd.f32 %v66, %v368
  %v370 = vpop.f32.mrf.mxu0
  %v371 = vadd.f32 %v66, %v370
  %372 = vmatmul.bf16.gmra.mxu0 %v106
  %v373 = vpop.f32.mrf.mxu0
  %v374 = vadd.f32 %v66, %v373
  %v375 = vpop.f32.mrf.mxu0
  %v376 = vadd.f32 %v66, %v375
  %377 = vmatmul.bf16.gmra.mxu0 %v107
  %v378 = vpop.f32.mrf.mxu0
  %v379 = vadd.f32 %v66, %v378
  %v380 = vpop.f32.mrf.mxu0
  %v381 = vadd.f32 %v66, %v380
  %382 = vmatmul.bf16.gmra.mxu0 %v108
  %v383 = vpop.f32.mrf.mxu0
  %v384 = vadd.f32 %v66, %v383
  %v385 = vpop.f32.mrf.mxu0
  %v386 = vadd.f32 %v66, %v385
  %387 = vmatmul.bf16.gmra.mxu0 %v109
  %v388 = vpop.f32.mrf.mxu0
  %v389 = vadd.f32 %v66, %v388
  %v390 = vpop.f32.mrf.mxu0
  %v391 = vadd.f32 %v66, %v390
  %392 = vdwg.mxu0
  %v393 = vmax.f32 %v256, 0.0
  %v394 = vmax.f32 %v305, 0.0
  %v395 = vmax.f32 %v354, 0.0
  %v396 = vmax.f32 %v258, 0.0
  %v397 = vmax.f32 %v307, 0.0
  %v398 = vmax.f32 %v356, 0.0
  %v399 = vmax.f32 %v261, 0.0
  %v400 = vmax.f32 %v310, 0.0
  %v401 = vmax.f32 %v359, 0.0
  %v402 = vmax.f32 %v263, 0.0
  %v403 = vmax.f32 %v312, 0.0
  %v404 = vmax.f32 %v361, 0.0
  %v405 = vmax.f32 %v266, 0.0
  %v406 = vmax.f32 %v315, 0.0
  %v407 = vmax.f32 %v364, 0.0
  %v408 = vmax.f32 %v268, 0.0
  %v409 = vmax.f32 %v317, 0.0
  %v410 = vmax.f32 %v366, 0.0
  %v411 = vmax.f32 %v271, 0.0
  %v412 = vmax.f32 %v320, 0.0
  %v413 = vmax.f32 %v369, 0.0
  %v414 = vmax.f32 %v273, 0.0
  %v415 = vmax.f32 %v322, 0.0
  %v416 = vmax.f32 %v371, 0.0
  %v417 = vmax.f32 %v276, 0.0
  %v418 = vmax.f32 %v325, 0.0
  %v419 = vmax.f32 %v374, 0.0
  %v420 = vmax.f32 %v278, 0.0
  %v421 = vmax.f32 %v327, 0.0
  %v422 = vmax.f32 %v376, 0.0
  %v423 = vmax.f32 %v281, 0.0
  %v424 = vmax.f32 %v330, 0.0
  %v425 = vmax.f32 %v379, 0.0
  %v426 = vmax.f32 %v283, 0.0
  %v427 = vmax.f32 %v332, 0.0
  %v428 = vmax.f32 %v381, 0.0
  %v429 = vmax.f32 %v286, 0.0
  %v430 = vmax.f32 %v335, 0.0
  %v431 = vmax.f32 %v384, 0.0
  %v432 = vmax.f32 %v288, 0.0
  %v433 = vmax.f32 %v337, 0.0
  %v434 = vmax.f32 %v386, 0.0
  %v435 = vmax.f32 %v291, 0.0
  %v436 = vmax.f32 %v340, 0.0
  %v437 = vmax.f32 %v389, 0.0
  %v438 = vmax.f32 %v293, 0.0
  %v439 = vmax.f32 %v342, 0.0
  %v440 = vmax.f32 %v391, 0.0
  %441 = vst [vmem:[%s3] sm:$0xff] %v393
  %442 = vst [vmem:[%s3 + $0x8] sm:$0xff] %v394
  %443 = vst [vmem:[%s3 + $0x10] sm:$0xff] %v395
  %444 = vst [vmem:[%s3 + $0x18] sm:$0xff] %v396
  %445 = vst [vmem:[%s3 + $0x20] sm:$0xff] %v397
  %446 = vst [vmem:[%s3 + $0x28] sm:$0xff] %v398
  %447 = vst [vmem:[%s3 + $0x30] sm:$0xff] %v399
  %448 = vst [vmem:[%s3 + $0x38] sm:$0xff] %v400
  %449 = vst [vmem:[%s3 + $0x40] sm:$0xff] %v401
  %450 = vst [vmem:[%s3 + $0x48] sm:$0xff] %v402
  %451 = vst [vmem:[%s3 + $0x50] sm:$0xff] %v403
  %452 = vst [vmem:[%s3 + $0x58] sm:$0xff] %v404
  %453 = vst [vmem:[%s3 + $0x60] sm:$0xff] %v405
  %454 = vst [vmem:[%s3 + $0x68] sm:$0xff] %v406
  %455 = vst [vmem:[%s3 + $0x70] sm:$0xff] %v407
  %456 = vst [vmem:[%s3 + $0x78] sm:$0xff] %v408
  %457 = vst [vmem:[%s3 + $0x80] sm:$0xff] %v409
  %458 = vst [vmem:[%s3 + $0x88] sm:$0xff] %v410
  %459 = vst [vmem:[%s3 + $0x90] sm:$0xff] %v411
  %460 = vst [vmem:[%s3 + $0x98] sm:$0xff] %v412
  %461 = vst [vmem:[%s3 + $0xa0] sm:$0xff] %v413
  %462 = vst [vmem:[%s3 + $0xa8] sm:$0xff] %v414
  %463 = vst [vmem:[%s3 + $0xb0] sm:$0xff] %v415
  %464 = vst [vmem:[%s3 + $0xb8] sm:$0xff] %v416
  %465 = vst [vmem:[%s3 + $0xc0] sm:$0xff] %v417
  %466 = vst [vmem:[%s3 + $0xc8] sm:$0xff] %v418
  %467 = vst [vmem:[%s3 + $0xd0] sm:$0xff] %v419
  %468 = vst [vmem:[%s3 + $0xd8] sm:$0xff] %v420
  %469 = vst [vmem:[%s3 + $0xe0] sm:$0xff] %v421
  %470 = vst [vmem:[%s3 + $0xe8] sm:$0xff] %v422
  %471 = vst [vmem:[%s3 + $0xf0] sm:$0xff] %v423
  %472 = vst [vmem:[%s3 + $0xf8] sm:$0xff] %v424
  %473 = vst [vmem:[%s3 + $0x100] sm:$0xff] %v425
  %474 = vst [vmem:[%s3 + $0x108] sm:$0xff] %v426
  %475 = vst [vmem:[%s3 + $0x110] sm:$0xff] %v427
  %476 = vst [vmem:[%s3 + $0x118] sm:$0xff] %v428
  %477 = vst [vmem:[%s3 + $0x120] sm:$0xff] %v429
  %478 = vst [vmem:[%s3 + $0x128] sm:$0xff] %v430
  %479 = vst [vmem:[%s3 + $0x130] sm:$0xff] %v431
  %480 = vst [vmem:[%s3 + $0x138] sm:$0xff] %v432
  %481 = vst [vmem:[%s3 + $0x140] sm:$0xff] %v433
  %482 = vst [vmem:[%s3 + $0x148] sm:$0xff] %v434
  %483 = vst [vmem:[%s3 + $0x150] sm:$0xff] %v435
  %484 = vst [vmem:[%s3 + $0x158] sm:$0xff] %v436
  %485 = vst [vmem:[%s3 + $0x160] sm:$0xff] %v437
  %486 = vst [vmem:[%s3 + $0x168] sm:$0xff] %v438
  %487 = vst [vmem:[%s3 + $0x170] sm:$0xff] %v439
  %488 = vst [vmem:[%s3 + $0x178] sm:$0xff] %v440
  // Predicated region
  $region14: #{inception_b_forward.5} parent=0 // pred_check
    _
  $region15: #{inception_b_forward.5} parent=0 // pred_check_branch
    %490 = sbr.rel (0) target = $region17
  $region16: #{inception_b_forward.5} parent=0 // pred_region
    _
  $region17: #{inception_b_forward.5} parent=0 // pred_fallthru
    _
  // Predicated region
  $region18: #{inception_b_forward.5} parent=0 // pred_check
    _
  $region19: #{inception_b_forward.5} parent=0 // pred_check_branch
    %492 = sbr.rel (0) target = $region21
  $region20: #{inception_b_forward.5} parent=0 // pred_region
    _
  $region21: #{inception_b_forward.5} parent=0 // pred_fallthru
    _

</llo_original>
